<compile_context>
chip_gen: v7x
topology: tpu7x:2x2x1
jax: 0.10.0
libtpu: 0.0.40
codegen_flags: <defaults>
</compile_context>

<pallas_src>
import jax
import jax.numpy as jnp
from jax.experimental import pallas as pl
from jax.experimental.pallas import tpu as pltpu

C_CONST = 0.85
EPS = 1e-6


def gcn_kernel(x_ref, adj_ref, w_ref, eye_ref, out_ref):
    # x_ref  : (N, Din, bt)   batch tile on the lane axis
    # adj_ref: (N, N,  bt)
    # w_ref  : (Din, Dout, 1) Dout on sublanes -> w[i] is already layout-correct
    # eye_ref: (N, Dout, 1)
    # out_ref: (N, Dout, bt)
    n, din, _ = x_ref.shape

    x = x_ref[...]                                   # (N, Din, bt)
    adj = adj_ref[...]                               # (N, N,  bt)
    # Fold c into the weights once (tiny), instead of scaling the full
    # (N, Dout, bt) activation later: c*(A@(X@W)) == A@(X@(c*W)).
    w = w_ref[...] * jnp.float32(C_CONST)            # (Din, Dout, 1)

    # XW[k, o, b] = sum_i x[k, i, b] * (c*W)[i, o]
    # Pure-VPU batched matmul: every multiply/add is a full-lane vector op.
    xw = x[:, 0:1, :] * w[0]                         # (N,1,bt)*(Dout,1)->(N,Dout,bt)
    for i in range(1, din):
        xw = xw + x[:, i:i + 1, :] * w[i]

    # AXW[i, o, b] = sum_k adj[i, k, b] * XW[k, o, b]
    axw = adj[:, 0:1, :] * xw[0]                     # (N,1,bt)*(Dout,bt)->(N,Dout,bt)
    for k in range(1, n):
        axw = axw + adj[:, k:k + 1, :] * xw[k]

    # I + c*A@X@W   (c already folded into W); eye broadcasts along lanes.
    i_caxw = eye_ref[...] + axw                      # (N,Dout,1)+(N,Dout,bt)

    y_relu = jnp.maximum(i_caxw, jnp.float32(0.0))

    # Mean over the node axis (torch dim=-2) == axis 0 here: reduction over an
    # outer dim, i.e. plain vreg adds (no cross-lane work).
    col_mean = jnp.mean(y_relu, axis=0, keepdims=True) + jnp.float32(EPS)
    # Exact reciprocal of the small (1, Dout, bt) tensor, then one broadcast
    # multiply over the activation (cheaper than dividing all of y_relu).
    y_norm = y_relu * pl.reciprocal(col_mean, approx=False)

    # softplus(x) == logaddexp(x, 0)
    out_ref[...] = jnp.logaddexp(y_norm, jnp.float32(0.0)).astype(out_ref.dtype)


def _choose_bt(batch):
    """Batch-tile (lane) width.

    The block's minor dim must be a multiple of 128 or the full batch.
    Prefer 128/256-wide lane-dense tiles with >= 2 grid steps (2-TC sharding
    on v7x + DMA/compute overlap); otherwise one full-batch step (no padding).
    """
    if batch % 256 == 0 and batch >= 1024:
        return 256
    if batch % 128 == 0:
        return 128
    return batch


def gcn_forward(x, adj, w, *, bt=None):
    """Pallas GCN forward.  x: (B,N,Din), adj: (B,N,N), w: (Din,Dout)."""
    # TODO(synk): the `x is None` branch of the original forward
    # (AXW = tensordot(adj, kernel)) is not wired through this kernel.
    B, N, Din = x.shape
    Dout = w.shape[1]
    assert adj.shape == (B, N, N)
    assert Dout == N, "eye(N) + c*AXW broadcast requires out_dim == N"

    if bt is None:
        bt = _choose_bt(B)
    assert B % bt == 0 and (bt % 128 == 0 or bt == B)
    n_blocks = B // bt

    # Batch-in-lanes relayout (ordinary XLA ops outside the kernel).
    x_t = jnp.transpose(x, (1, 2, 0)).astype(jnp.float32)      # (N, Din, B)
    adj_t = jnp.transpose(adj, (1, 2, 0)).astype(jnp.float32)  # (N, N, B)
    w3 = w.astype(jnp.float32)[:, :, None]                     # (Din, Dout, 1)
    eye3 = jnp.eye(N, Dout, dtype=jnp.float32)[:, :, None]     # (N, Dout, 1)

    out_t = pl.pallas_call(
        gcn_kernel,
        out_shape=jax.ShapeDtypeStruct((N, Dout, B), jnp.float32),
        grid_spec=pltpu.PrefetchScalarGridSpec(
            num_scalar_prefetch=0,
            grid=(n_blocks,),
            in_specs=[
                pl.BlockSpec((N, Din, bt), lambda b: (0, 0, b)),
                pl.BlockSpec((N, N, bt), lambda b: (0, 0, b)),
                pl.BlockSpec((Din, Dout, 1), lambda b: (0, 0, 0)),  # resident
                pl.BlockSpec((N, Dout, 1), lambda b: (0, 0, 0)),    # resident
            ],
            out_specs=pl.BlockSpec((N, Dout, bt), lambda b: (0, 0, b)),
        ),
        compiler_params=pltpu.CompilerParams(
            dimension_semantics=("parallel",),
            vmem_limit_bytes=32 * 1024 * 1024,
        ),
    )(x_t, adj_t, w3, eye3)

    return jnp.transpose(out_t, (2, 0, 1))                     # (B, N, Dout)


def gcn_reference(x, adj, w):
    xw = jnp.einsum("bni,io->bno", x, w)
    axw = jnp.einsum("bnm,bmo->bno", adj, xw)
    n = adj.shape[-1]
    i_caxw = jnp.eye(n, dtype=x.dtype) + C_CONST * axw
    y_relu = jax.nn.relu(i_caxw)
    col_mean = jnp.mean(y_relu, axis=-2, keepdims=True) + EPS
    y_norm = y_relu / col_mean
    return jax.nn.softplus(y_norm)


if __name__ == "__main__":
    key = jax.random.PRNGKey(0)
    B, N = 256, 16                 # N = #ROIs; module usage has in_dim == out_dim == N
    in_dim, out_dim = 16, 16
    neg_penalty = 0.2

    k_x, k_adj, k_w = jax.random.split(key, 3)
    x = jax.random.normal(k_x, (B, N, in_dim), dtype=jnp.float32)
    adj = jax.random.uniform(k_adj, (B, N, N), dtype=jnp.float32)
    adj = 0.5 * (adj + jnp.swapaxes(adj, -1, -2))   # symmetric adjacency

    # xavier_uniform_ for kernel (in_dim, out_dim)
    bound = jnp.sqrt(6.0 / (in_dim + out_dim))
    w = jax.random.uniform(k_w, (in_dim, out_dim), dtype=jnp.float32,
                           minval=-bound, maxval=bound)

    # B=256 -> bt=128: two lane-dense grid steps (exercises the multi-step
    # "parallel" grid and full 128-lane tiles) with no batch padding.
    out = gcn_forward(x, adj, w)
    out = jax.block_until_ready(out)

    # side-effect loss from the original forward (plain JAX glue, not returned)
    neg_loss = neg_penalty * jnp.sum(jax.nn.relu(1e-6 - w))
    jax.block_until_ready(neg_loss)

    ref = gcn_reference(x, adj, w)
    assert out.shape == ref.shape
    assert jnp.allclose(out, ref, atol=1e-5, rtol=1e-5), "mismatch vs reference"

    print("KERNEL_OK")
</pallas_src>

<mosaic_0001>
module attributes {stable_mosaic.version = 11 : i64} {
  func.func @gcn_kernel(%arg0: i32, %arg1: memref<16x16x128xf32, #tpu.memory_space<vmem>>, %arg2: memref<16x16x128xf32, #tpu.memory_space<vmem>>, %arg3: memref<16x16x1xf32, #tpu.memory_space<vmem>>, %arg4: memref<16x16x1xf32, #tpu.memory_space<vmem>>, %arg5: memref<16x16x128xf32, #tpu.memory_space<vmem>>) attributes {dimension_semantics = [#tpu.dimension_semantics<parallel>], iteration_bounds = array<i64: 2>, scalar_prefetch = 0 : i64, scratch_operands = 0 : i64, tpu.core_type = #tpu.core_type<tc>, window_params = [{transform_indices = @transform_0, window_bounds = array<i64: 16, 16, 128>}, {transform_indices = @transform_1, window_bounds = array<i64: 16, 16, 128>}, {pipeline_mode = #tpu.pipeline_mode<synchronous>, transform_indices = @transform_2, window_bounds = array<i64: 16, 16, 1>}, {pipeline_mode = #tpu.pipeline_mode<synchronous>, transform_indices = @transform_3, window_bounds = array<i64: 16, 16, 1>}, {transform_indices = @transform_4, window_bounds = array<i64: 16, 16, 128>}]} {
    %c0 = arith.constant 0 : index
    %c0_0 = arith.constant 0 : index
    %c0_1 = arith.constant 0 : index
    %0 = vector.load %arg1[%c0, %c0_0, %c0_1] : memref<16x16x128xf32, #tpu.memory_space<vmem>>, vector<16x16x128xf32>
    %c0_2 = arith.constant 0 : index
    %c0_3 = arith.constant 0 : index
    %c0_4 = arith.constant 0 : index
    %1 = vector.load %arg2[%c0_2, %c0_3, %c0_4] : memref<16x16x128xf32, #tpu.memory_space<vmem>>, vector<16x16x128xf32>
    %c0_5 = arith.constant 0 : index
    %c0_6 = arith.constant 0 : index
    %c0_7 = arith.constant 0 : index
    %2 = vector.load %arg3[%c0_5, %c0_6, %c0_7] : memref<16x16x1xf32, #tpu.memory_space<vmem>>, vector<16x16x1xf32>
    %cst = arith.constant 8.500000e-01 : f32
    %3 = vector.broadcast %cst : f32 to vector<16x16x1xf32>
    %4 = arith.mulf %2, %3 : vector<16x16x1xf32>
    %5 = vector.extract_strided_slice %0 {offsets = [0, 0, 0], sizes = [16, 1, 128], strides = [1, 1, 1]} : vector<16x16x128xf32> to vector<16x1x128xf32>
    %6 = vector.extract_strided_slice %4 {offsets = [0, 0, 0], sizes = [1, 16, 1], strides = [1, 1, 1]} : vector<16x16x1xf32> to vector<1x16x1xf32>
    %7 = vector.shape_cast %6 : vector<1x16x1xf32> to vector<16x1xf32>
    %8 = vector.shape_cast %7 : vector<16x1xf32> to vector<1x16x1xf32>
    %9 = vector.broadcast %5 : vector<16x1x128xf32> to vector<16x16x128xf32>
    %10 = vector.broadcast %8 : vector<1x16x1xf32> to vector<16x16x128xf32>
    %11 = arith.mulf %9, %10 : vector<16x16x128xf32>
    %12 = vector.extract_strided_slice %0 {offsets = [0, 1, 0], sizes = [16, 1, 128], strides = [1, 1, 1]} : vector<16x16x128xf32> to vector<16x1x128xf32>
    %13 = vector.extract_strided_slice %4 {offsets = [1, 0, 0], sizes = [1, 16, 1], strides = [1, 1, 1]} : vector<16x16x1xf32> to vector<1x16x1xf32>
    %14 = vector.shape_cast %13 : vector<1x16x1xf32> to vector<16x1xf32>
    %15 = vector.shape_cast %14 : vector<16x1xf32> to vector<1x16x1xf32>
    %16 = vector.broadcast %12 : vector<16x1x128xf32> to vector<16x16x128xf32>
    %17 = vector.broadcast %15 : vector<1x16x1xf32> to vector<16x16x128xf32>
    %18 = arith.mulf %16, %17 : vector<16x16x128xf32>
    %19 = arith.addf %11, %18 : vector<16x16x128xf32>
    %20 = vector.extract_strided_slice %0 {offsets = [0, 2, 0], sizes = [16, 1, 128], strides = [1, 1, 1]} : vector<16x16x128xf32> to vector<16x1x128xf32>
    %21 = vector.extract_strided_slice %4 {offsets = [2, 0, 0], sizes = [1, 16, 1], strides = [1, 1, 1]} : vector<16x16x1xf32> to vector<1x16x1xf32>
    %22 = vector.shape_cast %21 : vector<1x16x1xf32> to vector<16x1xf32>
    %23 = vector.shape_cast %22 : vector<16x1xf32> to vector<1x16x1xf32>
    %24 = vector.broadcast %20 : vector<16x1x128xf32> to vector<16x16x128xf32>
    %25 = vector.broadcast %23 : vector<1x16x1xf32> to vector<16x16x128xf32>
    %26 = arith.mulf %24, %25 : vector<16x16x128xf32>
    %27 = arith.addf %19, %26 : vector<16x16x128xf32>
    %28 = vector.extract_strided_slice %0 {offsets = [0, 3, 0], sizes = [16, 1, 128], strides = [1, 1, 1]} : vector<16x16x128xf32> to vector<16x1x128xf32>
    %29 = vector.extract_strided_slice %4 {offsets = [3, 0, 0], sizes = [1, 16, 1], strides = [1, 1, 1]} : vector<16x16x1xf32> to vector<1x16x1xf32>
    %30 = vector.shape_cast %29 : vector<1x16x1xf32> to vector<16x1xf32>
    %31 = vector.shape_cast %30 : vector<16x1xf32> to vector<1x16x1xf32>
    %32 = vector.broadcast %28 : vector<16x1x128xf32> to vector<16x16x128xf32>
    %33 = vector.broadcast %31 : vector<1x16x1xf32> to vector<16x16x128xf32>
    %34 = arith.mulf %32, %33 : vector<16x16x128xf32>
    %35 = arith.addf %27, %34 : vector<16x16x128xf32>
    %36 = vector.extract_strided_slice %0 {offsets = [0, 4, 0], sizes = [16, 1, 128], strides = [1, 1, 1]} : vector<16x16x128xf32> to vector<16x1x128xf32>
    %37 = vector.extract_strided_slice %4 {offsets = [4, 0, 0], sizes = [1, 16, 1], strides = [1, 1, 1]} : vector<16x16x1xf32> to vector<1x16x1xf32>
    %38 = vector.shape_cast %37 : vector<1x16x1xf32> to vector<16x1xf32>
    %39 = vector.shape_cast %38 : vector<16x1xf32> to vector<1x16x1xf32>
    %40 = vector.broadcast %36 : vector<16x1x128xf32> to vector<16x16x128xf32>
    %41 = vector.broadcast %39 : vector<1x16x1xf32> to vector<16x16x128xf32>
    %42 = arith.mulf %40, %41 : vector<16x16x128xf32>
    %43 = arith.addf %35, %42 : vector<16x16x128xf32>
    %44 = vector.extract_strided_slice %0 {offsets = [0, 5, 0], sizes = [16, 1, 128], strides = [1, 1, 1]} : vector<16x16x128xf32> to vector<16x1x128xf32>
    %45 = vector.extract_strided_slice %4 {offsets = [5, 0, 0], sizes = [1, 16, 1], strides = [1, 1, 1]} : vector<16x16x1xf32> to vector<1x16x1xf32>
    %46 = vector.shape_cast %45 : vector<1x16x1xf32> to vector<16x1xf32>
    %47 = vector.shape_cast %46 : vector<16x1xf32> to vector<1x16x1xf32>
    %48 = vector.broadcast %44 : vector<16x1x128xf32> to vector<16x16x128xf32>
    %49 = vector.broadcast %47 : vector<1x16x1xf32> to vector<16x16x128xf32>
    %50 = arith.mulf %48, %49 : vector<16x16x128xf32>
    %51 = arith.addf %43, %50 : vector<16x16x128xf32>
    %52 = vector.extract_strided_slice %0 {offsets = [0, 6, 0], sizes = [16, 1, 128], strides = [1, 1, 1]} : vector<16x16x128xf32> to vector<16x1x128xf32>
    %53 = vector.extract_strided_slice %4 {offsets = [6, 0, 0], sizes = [1, 16, 1], strides = [1, 1, 1]} : vector<16x16x1xf32> to vector<1x16x1xf32>
    %54 = vector.shape_cast %53 : vector<1x16x1xf32> to vector<16x1xf32>
    %55 = vector.shape_cast %54 : vector<16x1xf32> to vector<1x16x1xf32>
    %56 = vector.broadcast %52 : vector<16x1x128xf32> to vector<16x16x128xf32>
    %57 = vector.broadcast %55 : vector<1x16x1xf32> to vector<16x16x128xf32>
    %58 = arith.mulf %56, %57 : vector<16x16x128xf32>
    %59 = arith.addf %51, %58 : vector<16x16x128xf32>
    %60 = vector.extract_strided_slice %0 {offsets = [0, 7, 0], sizes = [16, 1, 128], strides = [1, 1, 1]} : vector<16x16x128xf32> to vector<16x1x128xf32>
    %61 = vector.extract_strided_slice %4 {offsets = [7, 0, 0], sizes = [1, 16, 1], strides = [1, 1, 1]} : vector<16x16x1xf32> to vector<1x16x1xf32>
    %62 = vector.shape_cast %61 : vector<1x16x1xf32> to vector<16x1xf32>
    %63 = vector.shape_cast %62 : vector<16x1xf32> to vector<1x16x1xf32>
    %64 = vector.broadcast %60 : vector<16x1x128xf32> to vector<16x16x128xf32>
    %65 = vector.broadcast %63 : vector<1x16x1xf32> to vector<16x16x128xf32>
    %66 = arith.mulf %64, %65 : vector<16x16x128xf32>
    %67 = arith.addf %59, %66 : vector<16x16x128xf32>
    %68 = vector.extract_strided_slice %0 {offsets = [0, 8, 0], sizes = [16, 1, 128], strides = [1, 1, 1]} : vector<16x16x128xf32> to vector<16x1x128xf32>
    %69 = vector.extract_strided_slice %4 {offsets = [8, 0, 0], sizes = [1, 16, 1], strides = [1, 1, 1]} : vector<16x16x1xf32> to vector<1x16x1xf32>
    %70 = vector.shape_cast %69 : vector<1x16x1xf32> to vector<16x1xf32>
    %71 = vector.shape_cast %70 : vector<16x1xf32> to vector<1x16x1xf32>
    %72 = vector.broadcast %68 : vector<16x1x128xf32> to vector<16x16x128xf32>
    %73 = vector.broadcast %71 : vector<1x16x1xf32> to vector<16x16x128xf32>
    %74 = arith.mulf %72, %73 : vector<16x16x128xf32>
    %75 = arith.addf %67, %74 : vector<16x16x128xf32>
    %76 = vector.extract_strided_slice %0 {offsets = [0, 9, 0], sizes = [16, 1, 128], strides = [1, 1, 1]} : vector<16x16x128xf32> to vector<16x1x128xf32>
    %77 = vector.extract_strided_slice %4 {offsets = [9, 0, 0], sizes = [1, 16, 1], strides = [1, 1, 1]} : vector<16x16x1xf32> to vector<1x16x1xf32>
    %78 = vector.shape_cast %77 : vector<1x16x1xf32> to vector<16x1xf32>
    %79 = vector.shape_cast %78 : vector<16x1xf32> to vector<1x16x1xf32>
    %80 = vector.broadcast %76 : vector<16x1x128xf32> to vector<16x16x128xf32>
    %81 = vector.broadcast %79 : vector<1x16x1xf32> to vector<16x16x128xf32>
    %82 = arith.mulf %80, %81 : vector<16x16x128xf32>
    %83 = arith.addf %75, %82 : vector<16x16x128xf32>
    %84 = vector.extract_strided_slice %0 {offsets = [0, 10, 0], sizes = [16, 1, 128], strides = [1, 1, 1]} : vector<16x16x128xf32> to vector<16x1x128xf32>
    %85 = vector.extract_strided_slice %4 {offsets = [10, 0, 0], sizes = [1, 16, 1], strides = [1, 1, 1]} : vector<16x16x1xf32> to vector<1x16x1xf32>
    %86 = vector.shape_cast %85 : vector<1x16x1xf32> to vector<16x1xf32>
    %87 = vector.shape_cast %86 : vector<16x1xf32> to vector<1x16x1xf32>
    %88 = vector.broadcast %84 : vector<16x1x128xf32> to vector<16x16x128xf32>
    %89 = vector.broadcast %87 : vector<1x16x1xf32> to vector<16x16x128xf32>
    %90 = arith.mulf %88, %89 : vector<16x16x128xf32>
    %91 = arith.addf %83, %90 : vector<16x16x128xf32>
    %92 = vector.extract_strided_slice %0 {offsets = [0, 11, 0], sizes = [16, 1, 128], strides = [1, 1, 1]} : vector<16x16x128xf32> to vector<16x1x128xf32>
    %93 = vector.extract_strided_slice %4 {offsets = [11, 0, 0], sizes = [1, 16, 1], strides = [1, 1, 1]} : vector<16x16x1xf32> to vector<1x16x1xf32>
    %94 = vector.shape_cast %93 : vector<1x16x1xf32> to vector<16x1xf32>
    %95 = vector.shape_cast %94 : vector<16x1xf32> to vector<1x16x1xf32>
    %96 = vector.broadcast %92 : vector<16x1x128xf32> to vector<16x16x128xf32>
    %97 = vector.broadcast %95 : vector<1x16x1xf32> to vector<16x16x128xf32>
    %98 = arith.mulf %96, %97 : vector<16x16x128xf32>
    %99 = arith.addf %91, %98 : vector<16x16x128xf32>
    %100 = vector.extract_strided_slice %0 {offsets = [0, 12, 0], sizes = [16, 1, 128], strides = [1, 1, 1]} : vector<16x16x128xf32> to vector<16x1x128xf32>
    %101 = vector.extract_strided_slice %4 {offsets = [12, 0, 0], sizes = [1, 16, 1], strides = [1, 1, 1]} : vector<16x16x1xf32> to vector<1x16x1xf32>
    %102 = vector.shape_cast %101 : vector<1x16x1xf32> to vector<16x1xf32>
    %103 = vector.shape_cast %102 : vector<16x1xf32> to vector<1x16x1xf32>
    %104 = vector.broadcast %100 : vector<16x1x128xf32> to vector<16x16x128xf32>
    %105 = vector.broadcast %103 : vector<1x16x1xf32> to vector<16x16x128xf32>
    %106 = arith.mulf %104, %105 : vector<16x16x128xf32>
    %107 = arith.addf %99, %106 : vector<16x16x128xf32>
    %108 = vector.extract_strided_slice %0 {offsets = [0, 13, 0], sizes = [16, 1, 128], strides = [1, 1, 1]} : vector<16x16x128xf32> to vector<16x1x128xf32>
    %109 = vector.extract_strided_slice %4 {offsets = [13, 0, 0], sizes = [1, 16, 1], strides = [1, 1, 1]} : vector<16x16x1xf32> to vector<1x16x1xf32>
    %110 = vector.shape_cast %109 : vector<1x16x1xf32> to vector<16x1xf32>
    %111 = vector.shape_cast %110 : vector<16x1xf32> to vector<1x16x1xf32>
    %112 = vector.broadcast %108 : vector<16x1x128xf32> to vector<16x16x128xf32>
    %113 = vector.broadcast %111 : vector<1x16x1xf32> to vector<16x16x128xf32>
    %114 = arith.mulf %112, %113 : vector<16x16x128xf32>
    %115 = arith.addf %107, %114 : vector<16x16x128xf32>
    %116 = vector.extract_strided_slice %0 {offsets = [0, 14, 0], sizes = [16, 1, 128], strides = [1, 1, 1]} : vector<16x16x128xf32> to vector<16x1x128xf32>
    %117 = vector.extract_strided_slice %4 {offsets = [14, 0, 0], sizes = [1, 16, 1], strides = [1, 1, 1]} : vector<16x16x1xf32> to vector<1x16x1xf32>
    %118 = vector.shape_cast %117 : vector<1x16x1xf32> to vector<16x1xf32>
    %119 = vector.shape_cast %118 : vector<16x1xf32> to vector<1x16x1xf32>
    %120 = vector.broadcast %116 : vector<16x1x128xf32> to vector<16x16x128xf32>
    %121 = vector.broadcast %119 : vector<1x16x1xf32> to vector<16x16x128xf32>
    %122 = arith.mulf %120, %121 : vector<16x16x128xf32>
    %123 = arith.addf %115, %122 : vector<16x16x128xf32>
    %124 = vector.extract_strided_slice %0 {offsets = [0, 15, 0], sizes = [16, 1, 128], strides = [1, 1, 1]} : vector<16x16x128xf32> to vector<16x1x128xf32>
    %125 = vector.extract_strided_slice %4 {offsets = [15, 0, 0], sizes = [1, 16, 1], strides = [1, 1, 1]} : vector<16x16x1xf32> to vector<1x16x1xf32>
    %126 = vector.shape_cast %125 : vector<1x16x1xf32> to vector<16x1xf32>
    %127 = vector.shape_cast %126 : vector<16x1xf32> to vector<1x16x1xf32>
    %128 = vector.broadcast %124 : vector<16x1x128xf32> to vector<16x16x128xf32>
    %129 = vector.broadcast %127 : vector<1x16x1xf32> to vector<16x16x128xf32>
    %130 = arith.mulf %128, %129 : vector<16x16x128xf32>
    %131 = arith.addf %123, %130 : vector<16x16x128xf32>
    %132 = vector.extract_strided_slice %1 {offsets = [0, 0, 0], sizes = [16, 1, 128], strides = [1, 1, 1]} : vector<16x16x128xf32> to vector<16x1x128xf32>
    %133 = vector.extract_strided_slice %131 {offsets = [0, 0, 0], sizes = [1, 16, 128], strides = [1, 1, 1]} : vector<16x16x128xf32> to vector<1x16x128xf32>
    %134 = vector.shape_cast %133 : vector<1x16x128xf32> to vector<16x128xf32>
    %135 = vector.shape_cast %134 : vector<16x128xf32> to vector<1x16x128xf32>
    %136 = vector.broadcast %132 : vector<16x1x128xf32> to vector<16x16x128xf32>
    %137 = vector.broadcast %135 : vector<1x16x128xf32> to vector<16x16x128xf32>
    %138 = arith.mulf %136, %137 : vector<16x16x128xf32>
    %139 = vector.extract_strided_slice %1 {offsets = [0, 1, 0], sizes = [16, 1, 128], strides = [1, 1, 1]} : vector<16x16x128xf32> to vector<16x1x128xf32>
    %140 = vector.extract_strided_slice %131 {offsets = [1, 0, 0], sizes = [1, 16, 128], strides = [1, 1, 1]} : vector<16x16x128xf32> to vector<1x16x128xf32>
    %141 = vector.shape_cast %140 : vector<1x16x128xf32> to vector<16x128xf32>
    %142 = vector.shape_cast %141 : vector<16x128xf32> to vector<1x16x128xf32>
    %143 = vector.broadcast %139 : vector<16x1x128xf32> to vector<16x16x128xf32>
    %144 = vector.broadcast %142 : vector<1x16x128xf32> to vector<16x16x128xf32>
    %145 = arith.mulf %143, %144 : vector<16x16x128xf32>
    %146 = arith.addf %138, %145 : vector<16x16x128xf32>
    %147 = vector.extract_strided_slice %1 {offsets = [0, 2, 0], sizes = [16, 1, 128], strides = [1, 1, 1]} : vector<16x16x128xf32> to vector<16x1x128xf32>
    %148 = vector.extract_strided_slice %131 {offsets = [2, 0, 0], sizes = [1, 16, 128], strides = [1, 1, 1]} : vector<16x16x128xf32> to vector<1x16x128xf32>
    %149 = vector.shape_cast %148 : vector<1x16x128xf32> to vector<16x128xf32>
    %150 = vector.shape_cast %149 : vector<16x128xf32> to vector<1x16x128xf32>
    %151 = vector.broadcast %147 : vector<16x1x128xf32> to vector<16x16x128xf32>
    %152 = vector.broadcast %150 : vector<1x16x128xf32> to vector<16x16x128xf32>
    %153 = arith.mulf %151, %152 : vector<16x16x128xf32>
    %154 = arith.addf %146, %153 : vector<16x16x128xf32>
    %155 = vector.extract_strided_slice %1 {offsets = [0, 3, 0], sizes = [16, 1, 128], strides = [1, 1, 1]} : vector<16x16x128xf32> to vector<16x1x128xf32>
    %156 = vector.extract_strided_slice %131 {offsets = [3, 0, 0], sizes = [1, 16, 128], strides = [1, 1, 1]} : vector<16x16x128xf32> to vector<1x16x128xf32>
    %157 = vector.shape_cast %156 : vector<1x16x128xf32> to vector<16x128xf32>
    %158 = vector.shape_cast %157 : vector<16x128xf32> to vector<1x16x128xf32>
    %159 = vector.broadcast %155 : vector<16x1x128xf32> to vector<16x16x128xf32>
    %160 = vector.broadcast %158 : vector<1x16x128xf32> to vector<16x16x128xf32>
    %161 = arith.mulf %159, %160 : vector<16x16x128xf32>
    %162 = arith.addf %154, %161 : vector<16x16x128xf32>
    %163 = vector.extract_strided_slice %1 {offsets = [0, 4, 0], sizes = [16, 1, 128], strides = [1, 1, 1]} : vector<16x16x128xf32> to vector<16x1x128xf32>
    %164 = vector.extract_strided_slice %131 {offsets = [4, 0, 0], sizes = [1, 16, 128], strides = [1, 1, 1]} : vector<16x16x128xf32> to vector<1x16x128xf32>
    %165 = vector.shape_cast %164 : vector<1x16x128xf32> to vector<16x128xf32>
    %166 = vector.shape_cast %165 : vector<16x128xf32> to vector<1x16x128xf32>
    %167 = vector.broadcast %163 : vector<16x1x128xf32> to vector<16x16x128xf32>
    %168 = vector.broadcast %166 : vector<1x16x128xf32> to vector<16x16x128xf32>
    %169 = arith.mulf %167, %168 : vector<16x16x128xf32>
    %170 = arith.addf %162, %169 : vector<16x16x128xf32>
    %171 = vector.extract_strided_slice %1 {offsets = [0, 5, 0], sizes = [16, 1, 128], strides = [1, 1, 1]} : vector<16x16x128xf32> to vector<16x1x128xf32>
    %172 = vector.extract_strided_slice %131 {offsets = [5, 0, 0], sizes = [1, 16, 128], strides = [1, 1, 1]} : vector<16x16x128xf32> to vector<1x16x128xf32>
    %173 = vector.shape_cast %172 : vector<1x16x128xf32> to vector<16x128xf32>
    %174 = vector.shape_cast %173 : vector<16x128xf32> to vector<1x16x128xf32>
    %175 = vector.broadcast %171 : vector<16x1x128xf32> to vector<16x16x128xf32>
    %176 = vector.broadcast %174 : vector<1x16x128xf32> to vector<16x16x128xf32>
    %177 = arith.mulf %175, %176 : vector<16x16x128xf32>
    %178 = arith.addf %170, %177 : vector<16x16x128xf32>
    %179 = vector.extract_strided_slice %1 {offsets = [0, 6, 0], sizes = [16, 1, 128], strides = [1, 1, 1]} : vector<16x16x128xf32> to vector<16x1x128xf32>
    %180 = vector.extract_strided_slice %131 {offsets = [6, 0, 0], sizes = [1, 16, 128], strides = [1, 1, 1]} : vector<16x16x128xf32> to vector<1x16x128xf32>
    %181 = vector.shape_cast %180 : vector<1x16x128xf32> to vector<16x128xf32>
    %182 = vector.shape_cast %181 : vector<16x128xf32> to vector<1x16x128xf32>
    %183 = vector.broadcast %179 : vector<16x1x128xf32> to vector<16x16x128xf32>
    %184 = vector.broadcast %182 : vector<1x16x128xf32> to vector<16x16x128xf32>
    %185 = arith.mulf %183, %184 : vector<16x16x128xf32>
    %186 = arith.addf %178, %185 : vector<16x16x128xf32>
    %187 = vector.extract_strided_slice %1 {offsets = [0, 7, 0], sizes = [16, 1, 128], strides = [1, 1, 1]} : vector<16x16x128xf32> to vector<16x1x128xf32>
    %188 = vector.extract_strided_slice %131 {offsets = [7, 0, 0], sizes = [1, 16, 128], strides = [1, 1, 1]} : vector<16x16x128xf32> to vector<1x16x128xf32>
    %189 = vector.shape_cast %188 : vector<1x16x128xf32> to vector<16x128xf32>
    %190 = vector.shape_cast %189 : vector<16x128xf32> to vector<1x16x128xf32>
    %191 = vector.broadcast %187 : vector<16x1x128xf32> to vector<16x16x128xf32>
    %192 = vector.broadcast %190 : vector<1x16x128xf32> to vector<16x16x128xf32>
    %193 = arith.mulf %191, %192 : vector<16x16x128xf32>
    %194 = arith.addf %186, %193 : vector<16x16x128xf32>
    %195 = vector.extract_strided_slice %1 {offsets = [0, 8, 0], sizes = [16, 1, 128], strides = [1, 1, 1]} : vector<16x16x128xf32> to vector<16x1x128xf32>
    %196 = vector.extract_strided_slice %131 {offsets = [8, 0, 0], sizes = [1, 16, 128], strides = [1, 1, 1]} : vector<16x16x128xf32> to vector<1x16x128xf32>
    %197 = vector.shape_cast %196 : vector<1x16x128xf32> to vector<16x128xf32>
    %198 = vector.shape_cast %197 : vector<16x128xf32> to vector<1x16x128xf32>
    %199 = vector.broadcast %195 : vector<16x1x128xf32> to vector<16x16x128xf32>
    %200 = vector.broadcast %198 : vector<1x16x128xf32> to vector<16x16x128xf32>
    %201 = arith.mulf %199, %200 : vector<16x16x128xf32>
    %202 = arith.addf %194, %201 : vector<16x16x128xf32>
    %203 = vector.extract_strided_slice %1 {offsets = [0, 9, 0], sizes = [16, 1, 128], strides = [1, 1, 1]} : vector<16x16x128xf32> to vector<16x1x128xf32>
    %204 = vector.extract_strided_slice %131 {offsets = [9, 0, 0], sizes = [1, 16, 128], strides = [1, 1, 1]} : vector<16x16x128xf32> to vector<1x16x128xf32>
    %205 = vector.shape_cast %204 : vector<1x16x128xf32> to vector<16x128xf32>
    %206 = vector.shape_cast %205 : vector<16x128xf32> to vector<1x16x128xf32>
    %207 = vector.broadcast %203 : vector<16x1x128xf32> to vector<16x16x128xf32>
    %208 = vector.broadcast %206 : vector<1x16x128xf32> to vector<16x16x128xf32>
    %209 = arith.mulf %207, %208 : vector<16x16x128xf32>
    %210 = arith.addf %202, %209 : vector<16x16x128xf32>
    %211 = vector.extract_strided_slice %1 {offsets = [0, 10, 0], sizes = [16, 1, 128], strides = [1, 1, 1]} : vector<16x16x128xf32> to vector<16x1x128xf32>
    %212 = vector.extract_strided_slice %131 {offsets = [10, 0, 0], sizes = [1, 16, 128], strides = [1, 1, 1]} : vector<16x16x128xf32> to vector<1x16x128xf32>
    %213 = vector.shape_cast %212 : vector<1x16x128xf32> to vector<16x128xf32>
    %214 = vector.shape_cast %213 : vector<16x128xf32> to vector<1x16x128xf32>
    %215 = vector.broadcast %211 : vector<16x1x128xf32> to vector<16x16x128xf32>
    %216 = vector.broadcast %214 : vector<1x16x128xf32> to vector<16x16x128xf32>
    %217 = arith.mulf %215, %216 : vector<16x16x128xf32>
    %218 = arith.addf %210, %217 : vector<16x16x128xf32>
    %219 = vector.extract_strided_slice %1 {offsets = [0, 11, 0], sizes = [16, 1, 128], strides = [1, 1, 1]} : vector<16x16x128xf32> to vector<16x1x128xf32>
    %220 = vector.extract_strided_slice %131 {offsets = [11, 0, 0], sizes = [1, 16, 128], strides = [1, 1, 1]} : vector<16x16x128xf32> to vector<1x16x128xf32>
    %221 = vector.shape_cast %220 : vector<1x16x128xf32> to vector<16x128xf32>
    %222 = vector.shape_cast %221 : vector<16x128xf32> to vector<1x16x128xf32>
    %223 = vector.broadcast %219 : vector<16x1x128xf32> to vector<16x16x128xf32>
    %224 = vector.broadcast %222 : vector<1x16x128xf32> to vector<16x16x128xf32>
    %225 = arith.mulf %223, %224 : vector<16x16x128xf32>
    %226 = arith.addf %218, %225 : vector<16x16x128xf32>
    %227 = vector.extract_strided_slice %1 {offsets = [0, 12, 0], sizes = [16, 1, 128], strides = [1, 1, 1]} : vector<16x16x128xf32> to vector<16x1x128xf32>
    %228 = vector.extract_strided_slice %131 {offsets = [12, 0, 0], sizes = [1, 16, 128], strides = [1, 1, 1]} : vector<16x16x128xf32> to vector<1x16x128xf32>
    %229 = vector.shape_cast %228 : vector<1x16x128xf32> to vector<16x128xf32>
    %230 = vector.shape_cast %229 : vector<16x128xf32> to vector<1x16x128xf32>
    %231 = vector.broadcast %227 : vector<16x1x128xf32> to vector<16x16x128xf32>
    %232 = vector.broadcast %230 : vector<1x16x128xf32> to vector<16x16x128xf32>
    %233 = arith.mulf %231, %232 : vector<16x16x128xf32>
    %234 = arith.addf %226, %233 : vector<16x16x128xf32>
    %235 = vector.extract_strided_slice %1 {offsets = [0, 13, 0], sizes = [16, 1, 128], strides = [1, 1, 1]} : vector<16x16x128xf32> to vector<16x1x128xf32>
    %236 = vector.extract_strided_slice %131 {offsets = [13, 0, 0], sizes = [1, 16, 128], strides = [1, 1, 1]} : vector<16x16x128xf32> to vector<1x16x128xf32>
    %237 = vector.shape_cast %236 : vector<1x16x128xf32> to vector<16x128xf32>
    %238 = vector.shape_cast %237 : vector<16x128xf32> to vector<1x16x128xf32>
    %239 = vector.broadcast %235 : vector<16x1x128xf32> to vector<16x16x128xf32>
    %240 = vector.broadcast %238 : vector<1x16x128xf32> to vector<16x16x128xf32>
    %241 = arith.mulf %239, %240 : vector<16x16x128xf32>
    %242 = arith.addf %234, %241 : vector<16x16x128xf32>
    %243 = vector.extract_strided_slice %1 {offsets = [0, 14, 0], sizes = [16, 1, 128], strides = [1, 1, 1]} : vector<16x16x128xf32> to vector<16x1x128xf32>
    %244 = vector.extract_strided_slice %131 {offsets = [14, 0, 0], sizes = [1, 16, 128], strides = [1, 1, 1]} : vector<16x16x128xf32> to vector<1x16x128xf32>
    %245 = vector.shape_cast %244 : vector<1x16x128xf32> to vector<16x128xf32>
    %246 = vector.shape_cast %245 : vector<16x128xf32> to vector<1x16x128xf32>
    %247 = vector.broadcast %243 : vector<16x1x128xf32> to vector<16x16x128xf32>
    %248 = vector.broadcast %246 : vector<1x16x128xf32> to vector<16x16x128xf32>
    %249 = arith.mulf %247, %248 : vector<16x16x128xf32>
    %250 = arith.addf %242, %249 : vector<16x16x128xf32>
    %251 = vector.extract_strided_slice %1 {offsets = [0, 15, 0], sizes = [16, 1, 128], strides = [1, 1, 1]} : vector<16x16x128xf32> to vector<16x1x128xf32>
    %252 = vector.extract_strided_slice %131 {offsets = [15, 0, 0], sizes = [1, 16, 128], strides = [1, 1, 1]} : vector<16x16x128xf32> to vector<1x16x128xf32>
    %253 = vector.shape_cast %252 : vector<1x16x128xf32> to vector<16x128xf32>
    %254 = vector.shape_cast %253 : vector<16x128xf32> to vector<1x16x128xf32>
    %255 = vector.broadcast %251 : vector<16x1x128xf32> to vector<16x16x128xf32>
    %256 = vector.broadcast %254 : vector<1x16x128xf32> to vector<16x16x128xf32>
    %257 = arith.mulf %255, %256 : vector<16x16x128xf32>
    %258 = arith.addf %250, %257 : vector<16x16x128xf32>
    %c0_8 = arith.constant 0 : index
    %c0_9 = arith.constant 0 : index
    %c0_10 = arith.constant 0 : index
    %259 = vector.load %arg4[%c0_8, %c0_9, %c0_10] : memref<16x16x1xf32, #tpu.memory_space<vmem>>, vector<16x16x1xf32>
    %260 = vector.broadcast %259 : vector<16x16x1xf32> to vector<16x16x128xf32>
    %261 = arith.addf %260, %258 : vector<16x16x128xf32>
    %cst_11 = arith.constant 0.000000e+00 : f32
    %262 = vector.broadcast %cst_11 : f32 to vector<16x16x128xf32>
    %263 = arith.maximumf %261, %262 : vector<16x16x128xf32>
    %cst_12 = arith.constant dense<0.000000e+00> : vector<16x128xf32>
    %264 = vector.multi_reduction <add>, %263, %cst_12 [0] : vector<16x16x128xf32> to vector<16x128xf32>
    %265 = vector.shape_cast %264 : vector<16x128xf32> to vector<1x16x128xf32>
    %cst_13 = arith.constant 1.600000e+01 : f32
    %266 = vector.broadcast %cst_13 : f32 to vector<1x16x128xf32>
    %267 = arith.divf %265, %266 : vector<1x16x128xf32>
    %cst_14 = arith.constant 9.99999997E-7 : f32
    %268 = vector.broadcast %cst_14 : f32 to vector<1x16x128xf32>
    %269 = arith.addf %267, %268 : vector<1x16x128xf32>
    %270 = tpu.reciprocal %269 : vector<1x16x128xf32> -> vector<1x16x128xf32>
    %271 = vector.broadcast %270 : vector<1x16x128xf32> to vector<16x16x128xf32>
    %272 = arith.mulf %263, %271 : vector<16x16x128xf32>
    %cst_15 = arith.constant 0.000000e+00 : f32
    %273 = vector.broadcast %cst_15 : f32 to vector<16x16x128xf32>
    %274 = arith.maximumf %272, %273 : vector<16x16x128xf32>
    %275 = vector.broadcast %cst_15 : f32 to vector<16x16x128xf32>
    %276 = arith.subf %272, %275 : vector<16x16x128xf32>
    %277 = arith.cmpf one, %276, %276 : vector<16x16x128xf32>
    %278 = vector.broadcast %cst_15 : f32 to vector<16x16x128xf32>
    %279 = arith.addf %272, %278 : vector<16x16x128xf32>
    %280 = math.absf %276 : vector<16x16x128xf32>
    %cst_16 = arith.constant 0.000000e+00 : f32
    %281 = vector.broadcast %cst_16 : f32 to vector<16x16x128xf32>
    %282 = arith.subf %281, %280 : vector<16x16x128xf32>
    %283 = math.exp %282 : vector<16x16x128xf32>
    %284 = math.log1p %283 : vector<16x16x128xf32>
    %285 = arith.addf %274, %284 : vector<16x16x128xf32>
    %286 = arith.select %277, %279, %285 : vector<16x16x128xi1>, vector<16x16x128xf32>
    %c0_17 = arith.constant 0 : index
    %c0_18 = arith.constant 0 : index
    %c0_19 = arith.constant 0 : index
    %287 = vector.load %arg5[%c0_17, %c0_18, %c0_19] : memref<16x16x128xf32, #tpu.memory_space<vmem>>, vector<16x16x128xf32>
    tpu.vector_store %arg5[%c0_17, %c0_18, %c0_19], %286 {strides = array<i32>} : memref<16x16x128xf32, #tpu.memory_space<vmem>>, vector<16x16x128xf32>,
    return
  }
  func.func @transform_0(%arg0: i32) -> (i32, i32, i32) {
    %c0_i32 = arith.constant 0 : i32
    %c0_i32_0 = arith.constant 0 : i32
    %c0_i32_1 = arith.constant 0 : i32
    return %c0_i32, %c0_i32_0, %arg0 : i32, i32, i32
  }
  func.func @transform_1(%arg0: i32) -> (i32, i32, i32) {
    %c0_i32 = arith.constant 0 : i32
    %c0_i32_0 = arith.constant 0 : i32
    %c0_i32_1 = arith.constant 0 : i32
    return %c0_i32, %c0_i32_0, %arg0 : i32, i32, i32
  }
  func.func @transform_2(%arg0: i32) -> (i32, i32, i32) {
    %c0_i32 = arith.constant 0 : i32
    %c0_i32_0 = arith.constant 0 : i32
    %c0_i32_1 = arith.constant 0 : i32
    %c0_i32_2 = arith.constant 0 : i32
    return %c0_i32, %c0_i32_0, %c0_i32_1 : i32, i32, i32
  }
  func.func @transform_3(%arg0: i32) -> (i32, i32, i32) {
    %c0_i32 = arith.constant 0 : i32
    %c0_i32_0 = arith.constant 0 : i32
    %c0_i32_1 = arith.constant 0 : i32
    %c0_i32_2 = arith.constant 0 : i32
    return %c0_i32, %c0_i32_0, %c0_i32_1 : i32, i32, i32
  }
  func.func @transform_4(%arg0: i32) -> (i32, i32, i32) {
    %c0_i32 = arith.constant 0 : i32
    %c0_i32_0 = arith.constant 0 : i32
    %c0_i32_1 = arith.constant 0 : i32
    return %c0_i32, %c0_i32_0, %arg0 : i32, i32, i32
  }
}

</mosaic_0001>

<llo_original>
// kernel: tpu_custom_call.1
$region0: #{tpu_custom_call.1}
  #allocation0 [shape = 'u32[]', space=smem, size = 0x4, offset = 0x4, fixed_abs, tag = 'smem constant byte address 0x4 - core index']
  #allocation1 [shape = 'u32[144,128]{1,0:T(1,128)}', space=vmem, size = 0x12000, scoped, tag = 'internal scratch']
  %s0 = inlined_call_operand.vmem [shape: f32[16,16,256], index: 0, kind: input, shape index: {}]
  %s1 = inlined_call_operand.hbm [shape: f32[16,16,256], index: 1, kind: input, shape index: {}]
  %s2 = inlined_call_operand.vmem [shape: f32[16,16,1], index: 2, kind: input, shape index: {}]
  %s3 = inlined_call_operand.vmem [shape: f32[16,16,1], index: 3, kind: input, shape index: {}]
  %s4 = inlined_call_operand.hbm [shape: f32[16,16,256], index: 4, kind: output, shape index: {}]
  %s5 = sld [smem:[#allocation0]]
  $region91: #{tpu_custom_call.1} parent=0
    _
  %s7 = ssub.s32 1, %s5
  %s8 = scalar_select 0, %s7, %s5
  $region1: #{tpu_custom_call.1} parent=0
    #allocation2 [shape = 'u8[262144]{0}', space=vmem, size = 0x40000, scoped, tag = 'input window, operand 0']
    #allocation3 [shape = 'u8[262144]{0}', space=vmem, size = 0x40000, scoped, tag = 'input window, operand 1']
    #allocation4 [shape = 's32[2]{0}', space=sflag, size = 0x8, scoped, tag = 'scoped memory for tpu_custom_call.1']
    #allocation5 [shape = 's32[2]{0}', space=sflag, size = 0x8, scoped, tag = 'scoped memory for tpu_custom_call.1']
    #allocation6 [shape = 'u8[262144]{0}', space=vmem, size = 0x40000, scoped, tag = 'output window, operand 0']
    %9 = vsyncpa [#allocation4], 0
    %s10 = scalar_lea.sflag [#allocation4], 1
    %11 = vsyncpa %s10, 0
    %12 = vsyncpa [#allocation5], 0
    %s13 = scalar_lea.sflag [#allocation5], 1
    %14 = vsyncpa %s13, 0
    loop: start=0, step=1, limit=4
    $region2: #{tpu_custom_call.1} parent=1 // loop_pre_header
      _
    $region3: #{tpu_custom_call.1} parent=1 // loop_header
      %s16 = sphi 0, %s20
      %p17 = scmp.ge.s32.totalorder %s16, 4
      %s26 = sphi 0, %s28
      %s29 = sphi 0, %s26
      %s30 = sphi 0, %s29
      %s46 = sphi 0, %s30
      %s52 = sphi 0, %s54
      %s55 = sphi 0, %s52
      %s56 = sphi 0, %s55
      %s72 = sphi 0, %s56
      %s76 = sphi 0, %s76
      %s78 = sphi 0, %s76
      %s79 = sphi 0, %s78
      %s93 = sphi 0, %s79
      %s97 = sphi 0, %s97
      %s99 = sphi 0, %s97
      %s100 = sphi 0, %s99
      %s114 = sphi 0, %s100
      %s120 = sphi 0, %s122
      %s123 = sphi 0, %s120
      %s124 = sphi 0, %s123
      %s140 = sphi 0, %s124
    $region4: #{tpu_custom_call.1} parent=1 // loop_header_branch
      %19 = sbr.rel (%p17) target = $region8
    $region5: #{tpu_custom_call.1} parent=1 // loop_body
      %s21 = ssub.s32 %s16, 1
      %s22 = ssub.s32 %s16, 2
      %s23 = sadd.s32 %s16, 1
      %s24 = ssub.s32 %s16, %s23
      %p25 = scmp.eq.s32.totalorder %s24, 0
      %s27 = sadd.s32 %s26, 1
      %s28 = scalar_select %p25, %s26, %s27
      %p31 = pneg %p25
      %p32 = scmp.eq.s32.totalorder %s16, 1
      %p33 = por %p31, %p32
      %p34 = scmp.ne.s32.totalorder %s26, %s29
      %p35 = scmp.eq.s32.totalorder %s16, 0
      %p36 = por %p34, %p35
      %p37 = scmp.ne.s32.totalorder %s26, %s29
      %p38 = scmp.eq.s32.totalorder %s21, 1
      %p39 = por %p37, %p38
      %p40 = scmp.ne.s32.totalorder %s29, %s30
      %p41 = scmp.eq.s32.totalorder %s21, 0
      %p42 = por %p40, %p41
      %p43 = scmp.ne.s32.totalorder %s29, %s30
      %p44 = scmp.eq.s32.totalorder %s22, 1
      %p45 = por %p43, %p44
      %p47 = scmp.ne.s32.totalorder %s30, %s46
      %p48 = scmp.eq.s32.totalorder %s22, 0
      %p49 = por %p47, %p48
      %s50 = ssub.s32 %s16, %s23
      %p51 = scmp.eq.s32.totalorder %s50, 0
      %s53 = sadd.s32 %s52, 1
      %s54 = scalar_select %p51, %s52, %s53
      %p57 = pneg %p51
      %p58 = scmp.eq.s32.totalorder %s16, 1
      %p59 = por %p57, %p58
      %p60 = scmp.ne.s32.totalorder %s52, %s55
      %p61 = scmp.eq.s32.totalorder %s16, 0
      %p62 = por %p60, %p61
      %p63 = scmp.ne.s32.totalorder %s52, %s55
      %p64 = scmp.eq.s32.totalorder %s21, 1
      %p65 = por %p63, %p64
      %p66 = scmp.ne.s32.totalorder %s55, %s56
      %p67 = scmp.eq.s32.totalorder %s21, 0
      %p68 = por %p66, %p67
      %p69 = scmp.ne.s32.totalorder %s55, %s56
      %p70 = scmp.eq.s32.totalorder %s22, 1
      %p71 = por %p69, %p70
      %p73 = scmp.ne.s32.totalorder %s56, %s72
      %p74 = scmp.eq.s32.totalorder %s22, 0
      %p75 = por %p73, %p74
      %s77 = sadd.s32 %s76, 1
      %p80 = scmp.eq.s32.totalorder %s16, 1
      %p81 = scmp.ne.s32.totalorder %s76, %s78
      %p82 = scmp.eq.s32.totalorder %s16, 0
      %p83 = por %p81, %p82
      %p84 = scmp.ne.s32.totalorder %s76, %s78
      %p85 = scmp.eq.s32.totalorder %s21, 1
      %p86 = por %p84, %p85
      %p87 = scmp.ne.s32.totalorder %s78, %s79
      %p88 = scmp.eq.s32.totalorder %s21, 0
      %p89 = por %p87, %p88
      %p90 = scmp.ne.s32.totalorder %s78, %s79
      %p91 = scmp.eq.s32.totalorder %s22, 1
      %p92 = por %p90, %p91
      %p94 = scmp.ne.s32.totalorder %s79, %s93
      %p95 = scmp.eq.s32.totalorder %s22, 0
      %p96 = por %p94, %p95
      %s98 = sadd.s32 %s97, 1
      %p101 = scmp.eq.s32.totalorder %s16, 1
      %p102 = scmp.ne.s32.totalorder %s97, %s99
      %p103 = scmp.eq.s32.totalorder %s16, 0
      %p104 = por %p102, %p103
      %p105 = scmp.ne.s32.totalorder %s97, %s99
      %p106 = scmp.eq.s32.totalorder %s21, 1
      %p107 = por %p105, %p106
      %p108 = scmp.ne.s32.totalorder %s99, %s100
      %p109 = scmp.eq.s32.totalorder %s21, 0
      %p110 = por %p108, %p109
      %p111 = scmp.ne.s32.totalorder %s99, %s100
      %p112 = scmp.eq.s32.totalorder %s22, 1
      %p113 = por %p111, %p112
      %p115 = scmp.ne.s32.totalorder %s100, %s114
      %p116 = scmp.eq.s32.totalorder %s22, 0
      %p117 = por %p115, %p116
      %s118 = ssub.s32 %s16, %s23
      %p119 = scmp.eq.s32.totalorder %s118, 0
      %s121 = sadd.s32 %s120, 1
      %s122 = scalar_select %p119, %s120, %s121
      %p125 = pneg %p119
      %p126 = scmp.eq.s32.totalorder %s16, 1
      %p127 = por %p125, %p126
      %p128 = scmp.ne.s32.totalorder %s120, %s123
      %p129 = scmp.eq.s32.totalorder %s16, 0
      %p130 = por %p128, %p129
      %p131 = scmp.ne.s32.totalorder %s120, %s123
      %p132 = scmp.eq.s32.totalorder %s21, 1
      %p133 = por %p131, %p132
      %p134 = scmp.ne.s32.totalorder %s123, %s124
      %p135 = scmp.eq.s32.totalorder %s21, 0
      %p136 = por %p134, %p135
      %p137 = scmp.ne.s32.totalorder %s123, %s124
      %p138 = scmp.eq.s32.totalorder %s22, 1
      %p139 = por %p137, %p138
      %p141 = scmp.ne.s32.totalorder %s124, %s140
      %p142 = scmp.eq.s32.totalorder %s22, 0
      %p143 = por %p141, %p142
      %p144 = scmp.le.s32.totalorder 1, %s16
      %p145 = scmp.lt.s32.totalorder %s16, 3
      %p146 = pnand %p144, %p145
      %p147 = pneg %p146
      // Predicated region
      $region9: #{tpu_custom_call.1} parent=5 // pred_check
        _
      $region10: #{tpu_custom_call.1} parent=5 // pred_check_branch
        %149 = sbr.rel (%p146) target = $region12
      $region11: #{tpu_custom_call.1} parent=5 // pred_region
        %s150 = ssub.s32 %s16, 1
        // Predicated region
        $region13: #{tpu_custom_call.1} parent=11 // pred_check
          %p151 = pneg %p89
        $region14: #{tpu_custom_call.1} parent=11 // pred_check_branch
          %153 = sbr.rel (%p151) target = $region16
        $region15: #{tpu_custom_call.1} parent=11 // pred_region
          _
        $region16: #{tpu_custom_call.1} parent=11 // pred_fallthru
          _
        // Predicated region
        $region17: #{tpu_custom_call.1} parent=11 // pred_check
          %p154 = pneg %p110
        $region18: #{tpu_custom_call.1} parent=11 // pred_check_branch
          %156 = sbr.rel (%p154) target = $region20
        $region19: #{tpu_custom_call.1} parent=11 // pred_region
          _
        $region20: #{tpu_custom_call.1} parent=11 // pred_fallthru
          _
      $region12: #{tpu_custom_call.1} parent=5 // pred_fallthru
        _
      %p157 = scmp.lt.s32.totalorder %s16, 2
      // Predicated region
      $region21: #{tpu_custom_call.1} parent=5 // pred_check
        %p158 = pneg %p157
      $region22: #{tpu_custom_call.1} parent=5 // pred_check_branch
        %160 = sbr.rel (%p158) target = $region24
      $region23: #{tpu_custom_call.1} parent=5 // pred_region
        // Predicated region
        $region25: #{tpu_custom_call.1} parent=23 // pred_check
          %p161 = pneg %p36
        $region26: #{tpu_custom_call.1} parent=23 // pred_check_branch
          %163 = sbr.rel (%p161) target = $region28
        $region27: #{tpu_custom_call.1} parent=23 // pred_region
          %s164 = sand.u32 %s26, 1
          %s165 = sand.u32 %s26, 1
          %s166 = smul.addr %s165, 256
          %s167 = scalar_lea.vmem [#allocation2], %s166
          %s168 = smul.addr %s16, 8
          %s169 = scalar_lea.vmem %s0, %s168
          // Predicated region
          $region29: #{tpu_custom_call.1} parent=27 // pred_check
            _
          $region30: #{tpu_custom_call.1} parent=27 // pred_check_branch
            %171 = sbr.rel (0) target = $region32
          $region31: #{tpu_custom_call.1} parent=27 // pred_region
            // Predicated region
            $region33: #{tpu_custom_call.1} parent=31 // pred_check
              _
            $region34: #{tpu_custom_call.1} parent=31 // pred_check_branch
              %173 = sbr.rel (0) target = $region36
            $region35: #{tpu_custom_call.1} parent=31 // pred_region
              // Predicated region
              $region48: #{tpu_custom_call.1} parent=35 // pred_check
                _
              $region49: #{tpu_custom_call.1} parent=35 // pred_check_branch
                %250 = sbr.rel (0) target = $region51
              $region50: #{tpu_custom_call.1} parent=35 // pred_region
                loop: start=0, step=1, limit=1
                $region52: #{tpu_custom_call.1} parent=50 // loop_pre_header
                  _
                $region53: #{tpu_custom_call.1} parent=50 // loop_header
                  %s252 = sphi 0, %s256
                  %p253 = scmp.ge.s32.totalorder %s252, 1
                  %s257 = sphi %s169, %s169
                  %s258 = sphi %s167, %s167
                $region54: #{tpu_custom_call.1} parent=50 // loop_header_branch
                  %255 = sbr.rel (%p253) target = $region58
                $region55: #{tpu_custom_call.1} parent=50 // loop_body
                  %v259 = vld [vmem:[%s257] sm:$0xff]
                  %260 = vst [vmem:[%s258] sm:$0xff] %v259
                  %v261 = vld [vmem:[%s257 + $0x10] sm:$0xff]
                  %262 = vst [vmem:[%s258 + $0x8] sm:$0xff] %v261
                  %v263 = vld [vmem:[%s257 + $0x20] sm:$0xff]
                  %264 = vst [vmem:[%s258 + $0x10] sm:$0xff] %v263
                  %v265 = vld [vmem:[%s257 + $0x30] sm:$0xff]
                  %266 = vst [vmem:[%s258 + $0x18] sm:$0xff] %v265
                  %v267 = vld [vmem:[%s257 + $0x40] sm:$0xff]
                  %268 = vst [vmem:[%s258 + $0x20] sm:$0xff] %v267
                  %v269 = vld [vmem:[%s257 + $0x50] sm:$0xff]
                  %270 = vst [vmem:[%s258 + $0x28] sm:$0xff] %v269
                  %v271 = vld [vmem:[%s257 + $0x60] sm:$0xff]
                  %272 = vst [vmem:[%s258 + $0x30] sm:$0xff] %v271
                  %v273 = vld [vmem:[%s257 + $0x70] sm:$0xff]
                  %274 = vst [vmem:[%s258 + $0x38] sm:$0xff] %v273
                  %v275 = vld [vmem:[%s257 + $0x80] sm:$0xff]
                  %276 = vst [vmem:[%s258 + $0x40] sm:$0xff] %v275
                  %v277 = vld [vmem:[%s257 + $0x90] sm:$0xff]
                  %278 = vst [vmem:[%s258 + $0x48] sm:$0xff] %v277
                  %v279 = vld [vmem:[%s257 + $0xa0] sm:$0xff]
                  %280 = vst [vmem:[%s258 + $0x50] sm:$0xff] %v279
                  %v281 = vld [vmem:[%s257 + $0xb0] sm:$0xff]
                  %282 = vst [vmem:[%s258 + $0x58] sm:$0xff] %v281
                  %v283 = vld [vmem:[%s257 + $0xc0] sm:$0xff]
                  %284 = vst [vmem:[%s258 + $0x60] sm:$0xff] %v283
                  %v285 = vld [vmem:[%s257 + $0xd0] sm:$0xff]
                  %286 = vst [vmem:[%s258 + $0x68] sm:$0xff] %v285
                  %v287 = vld [vmem:[%s257 + $0xe0] sm:$0xff]
                  %288 = vst [vmem:[%s258 + $0x70] sm:$0xff] %v287
                  %v289 = vld [vmem:[%s257 + $0xf0] sm:$0xff]
                  %290 = vst [vmem:[%s258 + $0x78] sm:$0xff] %v289
                  %v291 = vld [vmem:[%s257 + $0x100] sm:$0xff]
                  %292 = vst [vmem:[%s258 + $0x80] sm:$0xff] %v291
                  %v293 = vld [vmem:[%s257 + $0x110] sm:$0xff]
                  %294 = vst [vmem:[%s258 + $0x88] sm:$0xff] %v293
                  %v295 = vld [vmem:[%s257 + $0x120] sm:$0xff]
                  %296 = vst [vmem:[%s258 + $0x90] sm:$0xff] %v295
                  %v297 = vld [vmem:[%s257 + $0x130] sm:$0xff]
                  %298 = vst [vmem:[%s258 + $0x98] sm:$0xff] %v297
                  %v299 = vld [vmem:[%s257 + $0x140] sm:$0xff]
                  %300 = vst [vmem:[%s258 + $0xa0] sm:$0xff] %v299
                  %v301 = vld [vmem:[%s257 + $0x150] sm:$0xff]
                  %302 = vst [vmem:[%s258 + $0xa8] sm:$0xff] %v301
                  %v303 = vld [vmem:[%s257 + $0x160] sm:$0xff]
                  %304 = vst [vmem:[%s258 + $0xb0] sm:$0xff] %v303
                  %v305 = vld [vmem:[%s257 + $0x170] sm:$0xff]
                  %306 = vst [vmem:[%s258 + $0xb8] sm:$0xff] %v305
                  %v307 = vld [vmem:[%s257 + $0x180] sm:$0xff]
                  %308 = vst [vmem:[%s258 + $0xc0] sm:$0xff] %v307
                  %v309 = vld [vmem:[%s257 + $0x190] sm:$0xff]
                  %310 = vst [vmem:[%s258 + $0xc8] sm:$0xff] %v309
                  %v311 = vld [vmem:[%s257 + $0x1a0] sm:$0xff]
                  %312 = vst [vmem:[%s258 + $0xd0] sm:$0xff] %v311
                  %v313 = vld [vmem:[%s257 + $0x1b0] sm:$0xff]
                  %314 = vst [vmem:[%s258 + $0xd8] sm:$0xff] %v313
                  %v315 = vld [vmem:[%s257 + $0x1c0] sm:$0xff]
                  %316 = vst [vmem:[%s258 + $0xe0] sm:$0xff] %v315
                  %v317 = vld [vmem:[%s257 + $0x1d0] sm:$0xff]
                  %318 = vst [vmem:[%s258 + $0xe8] sm:$0xff] %v317
                  %v319 = vld [vmem:[%s257 + $0x1e0] sm:$0xff]
                  %320 = vst [vmem:[%s258 + $0xf0] sm:$0xff] %v319
                  %v321 = vld [vmem:[%s257 + $0x1f0] sm:$0xff]
                  %322 = vst [vmem:[%s258 + $0xf8] sm:$0xff] %v321
                $region56: #{tpu_custom_call.1} parent=50 // loop_footer
                  %s256 = sadd.s32 1, %s252
                $region57: #{tpu_custom_call.1} parent=50 // loop_footer_branch
                  %251 = sbr.rel target = $region53
                $region58: #{tpu_custom_call.1} parent=50 // loop_exit
                  _
              $region51: #{tpu_custom_call.1} parent=35 // pred_fallthru
                _
              // Predicated region
              $region59: #{tpu_custom_call.1} parent=35 // pred_check
                _
              $region60: #{tpu_custom_call.1} parent=35 // pred_check_branch
                %324 = sbr.rel target = $region62
              $region61: #{tpu_custom_call.1} parent=35 // pred_region
                _
              $region62: #{tpu_custom_call.1} parent=35 // pred_fallthru
                _
            $region36: #{tpu_custom_call.1} parent=31 // pred_fallthru
              _
            // Predicated region
            $region37: #{tpu_custom_call.1} parent=31 // pred_check
              _
            $region38: #{tpu_custom_call.1} parent=31 // pred_check_branch
              %175 = sbr.rel target = $region40
            $region39: #{tpu_custom_call.1} parent=31 // pred_region
              loop: start=0, step=1, limit=1
              $region41: #{tpu_custom_call.1} parent=39 // loop_pre_header
                _
              $region42: #{tpu_custom_call.1} parent=39 // loop_header
                %s178 = sphi 0, %s182
                %p179 = scmp.ge.s32.totalorder %s178, 1
                %s183 = sphi %s169, %s169
                %s184 = sphi %s167, %s167
              $region43: #{tpu_custom_call.1} parent=39 // loop_header_branch
                %181 = sbr.rel (%p179) target = $region47
              $region44: #{tpu_custom_call.1} parent=39 // loop_body
                %v185 = vld [vmem:[%s183] sm:$0xff]
                %186 = vst [vmem:[%s184] sm:$0xff] %v185
                %v187 = vld [vmem:[%s183 + $0x10] sm:$0xff]
                %188 = vst [vmem:[%s184 + $0x8] sm:$0xff] %v187
                %v189 = vld [vmem:[%s183 + $0x20] sm:$0xff]
                %190 = vst [vmem:[%s184 + $0x10] sm:$0xff] %v189
                %v191 = vld [vmem:[%s183 + $0x30] sm:$0xff]
                %192 = vst [vmem:[%s184 + $0x18] sm:$0xff] %v191
                %v193 = vld [vmem:[%s183 + $0x40] sm:$0xff]
                %194 = vst [vmem:[%s184 + $0x20] sm:$0xff] %v193
                %v195 = vld [vmem:[%s183 + $0x50] sm:$0xff]
                %196 = vst [vmem:[%s184 + $0x28] sm:$0xff] %v195
                %v197 = vld [vmem:[%s183 + $0x60] sm:$0xff]
                %198 = vst [vmem:[%s184 + $0x30] sm:$0xff] %v197
                %v199 = vld [vmem:[%s183 + $0x70] sm:$0xff]
                %200 = vst [vmem:[%s184 + $0x38] sm:$0xff] %v199
                %v201 = vld [vmem:[%s183 + $0x80] sm:$0xff]
                %202 = vst [vmem:[%s184 + $0x40] sm:$0xff] %v201
                %v203 = vld [vmem:[%s183 + $0x90] sm:$0xff]
                %204 = vst [vmem:[%s184 + $0x48] sm:$0xff] %v203
                %v205 = vld [vmem:[%s183 + $0xa0] sm:$0xff]
                %206 = vst [vmem:[%s184 + $0x50] sm:$0xff] %v205
                %v207 = vld [vmem:[%s183 + $0xb0] sm:$0xff]
                %208 = vst [vmem:[%s184 + $0x58] sm:$0xff] %v207
                %v209 = vld [vmem:[%s183 + $0xc0] sm:$0xff]
                %210 = vst [vmem:[%s184 + $0x60] sm:$0xff] %v209
                %v211 = vld [vmem:[%s183 + $0xd0] sm:$0xff]
                %212 = vst [vmem:[%s184 + $0x68] sm:$0xff] %v211
                %v213 = vld [vmem:[%s183 + $0xe0] sm:$0xff]
                %214 = vst [vmem:[%s184 + $0x70] sm:$0xff] %v213
                %v215 = vld [vmem:[%s183 + $0xf0] sm:$0xff]
                %216 = vst [vmem:[%s184 + $0x78] sm:$0xff] %v215
                %v217 = vld [vmem:[%s183 + $0x100] sm:$0xff]
                %218 = vst [vmem:[%s184 + $0x80] sm:$0xff] %v217
                %v219 = vld [vmem:[%s183 + $0x110] sm:$0xff]
                %220 = vst [vmem:[%s184 + $0x88] sm:$0xff] %v219
                %v221 = vld [vmem:[%s183 + $0x120] sm:$0xff]
                %222 = vst [vmem:[%s184 + $0x90] sm:$0xff] %v221
                %v223 = vld [vmem:[%s183 + $0x130] sm:$0xff]
                %224 = vst [vmem:[%s184 + $0x98] sm:$0xff] %v223
                %v225 = vld [vmem:[%s183 + $0x140] sm:$0xff]
                %226 = vst [vmem:[%s184 + $0xa0] sm:$0xff] %v225
                %v227 = vld [vmem:[%s183 + $0x150] sm:$0xff]
                %228 = vst [vmem:[%s184 + $0xa8] sm:$0xff] %v227
                %v229 = vld [vmem:[%s183 + $0x160] sm:$0xff]
                %230 = vst [vmem:[%s184 + $0xb0] sm:$0xff] %v229
                %v231 = vld [vmem:[%s183 + $0x170] sm:$0xff]
                %232 = vst [vmem:[%s184 + $0xb8] sm:$0xff] %v231
                %v233 = vld [vmem:[%s183 + $0x180] sm:$0xff]
                %234 = vst [vmem:[%s184 + $0xc0] sm:$0xff] %v233
                %v235 = vld [vmem:[%s183 + $0x190] sm:$0xff]
                %236 = vst [vmem:[%s184 + $0xc8] sm:$0xff] %v235
                %v237 = vld [vmem:[%s183 + $0x1a0] sm:$0xff]
                %238 = vst [vmem:[%s184 + $0xd0] sm:$0xff] %v237
                %v239 = vld [vmem:[%s183 + $0x1b0] sm:$0xff]
                %240 = vst [vmem:[%s184 + $0xd8] sm:$0xff] %v239
                %v241 = vld [vmem:[%s183 + $0x1c0] sm:$0xff]
                %242 = vst [vmem:[%s184 + $0xe0] sm:$0xff] %v241
                %v243 = vld [vmem:[%s183 + $0x1d0] sm:$0xff]
                %244 = vst [vmem:[%s184 + $0xe8] sm:$0xff] %v243
                %v245 = vld [vmem:[%s183 + $0x1e0] sm:$0xff]
                %246 = vst [vmem:[%s184 + $0xf0] sm:$0xff] %v245
                %v247 = vld [vmem:[%s183 + $0x1f0] sm:$0xff]
                %248 = vst [vmem:[%s184 + $0xf8] sm:$0xff] %v247
              $region45: #{tpu_custom_call.1} parent=39 // loop_footer
                %s182 = sadd.s32 1, %s178
              $region46: #{tpu_custom_call.1} parent=39 // loop_footer_branch
                %177 = sbr.rel target = $region42
              $region47: #{tpu_custom_call.1} parent=39 // loop_exit
                _
            $region40: #{tpu_custom_call.1} parent=31 // pred_fallthru
              _
          $region32: #{tpu_custom_call.1} parent=27 // pred_fallthru
            _
          %325 = vnop
        $region28: #{tpu_custom_call.1} parent=23 // pred_fallthru
          _
        // Predicated region
        $region63: #{tpu_custom_call.1} parent=23 // pred_check
          %p326 = pneg %p62
        $region64: #{tpu_custom_call.1} parent=23 // pred_check_branch
          %328 = sbr.rel (%p326) target = $region66
        $region65: #{tpu_custom_call.1} parent=23 // pred_region
          %s329 = sand.u32 %s52, 1
          %s330 = scalar_lea.sflag [#allocation4], %s329
          %s331 = sand.u32 %s52, 1
          %s332 = smul.addr %s331, 256
          %s333 = scalar_lea.vmem [#allocation3], %s332
          %s335 = ssub.s32 4096, 4096
          %336 = vsyncadd %s330, %s335
          %s337 = smul.addr %s16, 128
          %s338 = scalar_lea.hbm %s1, %s337
          %s339 = sshll.u32 %s333, 4
          %s340 = int_to_ptr.vmem [resolvable:$true] %s339
          %345 = dma.hbm_to_vmem [thread:$0]  %s338, 4096, %s340, %s330, 256, 128, 8
        $region66: #{tpu_custom_call.1} parent=23 // pred_fallthru
          _
      $region24: #{tpu_custom_call.1} parent=5 // pred_fallthru
        _
      %p346 = scmp.le.s32.totalorder 1, %s16
      %p347 = scmp.lt.s32.totalorder %s16, 3
      %p348 = pnand %p346, %p347
      %p349 = pneg %p348
      // Predicated region
      $region67: #{tpu_custom_call.1} parent=5 // pred_check
        _
      $region68: #{tpu_custom_call.1} parent=5 // pred_check_branch
        %351 = sbr.rel (%p348) target = $region70
      $region69: #{tpu_custom_call.1} parent=5 // pred_region
        %s352 = ssub.s32 %s16, 1
        %s353 = sand.u32 %s29, 1
        %s354 = sand.u32 %s29, 1
        %s355 = smul.addr %s354, 256
        %s356 = scalar_lea.vmem [#allocation2], %s355
        // Predicated region
        $region71: #{tpu_custom_call.1} parent=69 // pred_check
          %p357 = pneg %p42
        $region72: #{tpu_custom_call.1} parent=69 // pred_check_branch
          %359 = sbr.rel (%p357) target = $region74
        $region73: #{tpu_custom_call.1} parent=69 // pred_region
          _
        $region74: #{tpu_custom_call.1} parent=69 // pred_fallthru
          _
        %s360 = sand.u32 %s55, 1
        %s361 = scalar_lea.sflag [#allocation4], %s360
        %s362 = sand.u32 %s55, 1
        %s363 = smul.addr %s362, 256
        %s364 = scalar_lea.vmem [#allocation3], %s363
        // Predicated region
        $region75: #{tpu_custom_call.1} parent=69 // pred_check
          %p365 = pneg %p68
        $region76: #{tpu_custom_call.1} parent=69 // pred_check_branch
          %367 = sbr.rel (%p365) target = $region78
        $region77: #{tpu_custom_call.1} parent=69 // pred_region
          %368 = dma.done %s361, 4096
        $region78: #{tpu_custom_call.1} parent=69 // pred_fallthru
          _
        %s369 = sand.u32 %s29, 1
        %s370 = sand.u32 %s29, 1
        %s371 = smul.addr %s370, 256
        %s372 = scalar_lea.vmem [#allocation2], %s371
        %p373 = pneg %p42
        %p374 = pneg %p39
        %s375 = sand.u32 %s55, 1
        %s376 = scalar_lea.sflag [#allocation4], %s375
        %s377 = sand.u32 %s55, 1
        %s378 = smul.addr %s377, 256
        %s379 = scalar_lea.vmem [#allocation3], %s378
        %p380 = pneg %p68
        %p381 = pneg %p65
        %p382 = pneg %p89
        %p383 = pneg %p86
        %p384 = pneg %p110
        %p385 = pneg %p107
        %p386 = pneg %p136
        %p387 = pneg %p133
        %s388 = sand.u32 %s123, 1
        %s389 = scalar_lea.sflag [#allocation5], %s388
        %s390 = sand.u32 %s123, 1
        %s391 = smul.addr %s390, 256
        %s392 = scalar_lea.vmem [#allocation6], %s391
        %v393 = vld [vmem:[%s356] sm:$0xff]
        %v394 = vld [vmem:[%s356 + $0x8] sm:$0xff]
        %v395 = vld [vmem:[%s356 + $0x10] sm:$0xff]
        %v396 = vld [vmem:[%s356 + $0x18] sm:$0xff]
        %v397 = vld [vmem:[%s356 + $0x20] sm:$0xff]
        %v398 = vld [vmem:[%s356 + $0x28] sm:$0xff]
        %v399 = vld [vmem:[%s356 + $0x30] sm:$0xff]
        %v400 = vld [vmem:[%s356 + $0x38] sm:$0xff]
        %v401 = vld [vmem:[%s356 + $0x40] sm:$0xff]
        %v402 = vld [vmem:[%s356 + $0x48] sm:$0xff]
        %v403 = vld [vmem:[%s356 + $0x50] sm:$0xff]
        %v404 = vld [vmem:[%s356 + $0x58] sm:$0xff]
        %v405 = vld [vmem:[%s356 + $0x60] sm:$0xff]
        %v406 = vld [vmem:[%s356 + $0x68] sm:$0xff]
        %v407 = vld [vmem:[%s356 + $0x70] sm:$0xff]
        %v408 = vld [vmem:[%s356 + $0x78] sm:$0xff]
        %v409 = vld [vmem:[%s356 + $0x80] sm:$0xff]
        %v410 = vld [vmem:[%s356 + $0x88] sm:$0xff]
        %v411 = vld [vmem:[%s356 + $0x90] sm:$0xff]
        %v412 = vld [vmem:[%s356 + $0x98] sm:$0xff]
        %v413 = vld [vmem:[%s356 + $0xa0] sm:$0xff]
        %v414 = vld [vmem:[%s356 + $0xa8] sm:$0xff]
        %v415 = vld [vmem:[%s356 + $0xb0] sm:$0xff]
        %v416 = vld [vmem:[%s356 + $0xb8] sm:$0xff]
        %v417 = vld [vmem:[%s356 + $0xc0] sm:$0xff]
        %v418 = vld [vmem:[%s356 + $0xc8] sm:$0xff]
        %v419 = vld [vmem:[%s356 + $0xd0] sm:$0xff]
        %v420 = vld [vmem:[%s356 + $0xd8] sm:$0xff]
        %v421 = vld [vmem:[%s356 + $0xe0] sm:$0xff]
        %v422 = vld [vmem:[%s356 + $0xe8] sm:$0xff]
        %v423 = vld [vmem:[%s356 + $0xf0] sm:$0xff]
        %v424 = vld [vmem:[%s356 + $0xf8] sm:$0xff]
        %v425 = vld [vmem:[%s364] sm:$0xff]
        %v426 = vld [vmem:[%s364 + $0x8] sm:$0xff]
        %v427 = vld [vmem:[%s364 + $0x10] sm:$0xff]
        %v428 = vld [vmem:[%s364 + $0x18] sm:$0xff]
        %v429 = vld [vmem:[%s364 + $0x20] sm:$0xff]
        %v430 = vld [vmem:[%s364 + $0x28] sm:$0xff]
        %v431 = vld [vmem:[%s364 + $0x30] sm:$0xff]
        %v432 = vld [vmem:[%s364 + $0x38] sm:$0xff]
        %v433 = vld [vmem:[%s364 + $0x40] sm:$0xff]
        %v434 = vld [vmem:[%s364 + $0x48] sm:$0xff]
        %v435 = vld [vmem:[%s364 + $0x50] sm:$0xff]
        %v436 = vld [vmem:[%s364 + $0x58] sm:$0xff]
        %v437 = vld [vmem:[%s364 + $0x60] sm:$0xff]
        %v438 = vld [vmem:[%s364 + $0x68] sm:$0xff]
        %v439 = vld [vmem:[%s364 + $0x70] sm:$0xff]
        %v440 = vld [vmem:[%s364 + $0x78] sm:$0xff]
        %v441 = vld [vmem:[%s364 + $0x80] sm:$0xff]
        %v442 = vld [vmem:[%s364 + $0x88] sm:$0xff]
        %v443 = vld [vmem:[%s364 + $0x90] sm:$0xff]
        %v444 = vld [vmem:[%s364 + $0x98] sm:$0xff]
        %v445 = vld [vmem:[%s364 + $0xa0] sm:$0xff]
        %v446 = vld [vmem:[%s364 + $0xa8] sm:$0xff]
        %v447 = vld [vmem:[%s364 + $0xb0] sm:$0xff]
        %v448 = vld [vmem:[%s364 + $0xb8] sm:$0xff]
        %v449 = vld [vmem:[%s364 + $0xc0] sm:$0xff]
        %v450 = vld [vmem:[%s364 + $0xc8] sm:$0xff]
        %v451 = vld [vmem:[%s364 + $0xd0] sm:$0xff]
        %v452 = vld [vmem:[%s364 + $0xd8] sm:$0xff]
        %v453 = vld [vmem:[%s364 + $0xe0] sm:$0xff]
        %v454 = vld [vmem:[%s364 + $0xe8] sm:$0xff]
        %v455 = vld [vmem:[%s364 + $0xf0] sm:$0xff]
        %v456 = vld [vmem:[%s364 + $0xf8] sm:$0xff]
        %v457 = vld [vmem:[%s2] sm:$0xff]
        %v458 = vld [vmem:[%s2 + $0x8] sm:$0xff]
        %v459 = vld [vmem:[%s2 + $0x10] sm:$0xff]
        %v460 = vld [vmem:[%s2 + $0x18] sm:$0xff]
        %v461 = vld [vmem:[%s2 + $0x20] sm:$0xff]
        %v462 = vld [vmem:[%s2 + $0x28] sm:$0xff]
        %v463 = vld [vmem:[%s2 + $0x30] sm:$0xff]
        %v464 = vld [vmem:[%s2 + $0x38] sm:$0xff]
        %v465 = vld [vmem:[%s2 + $0x40] sm:$0xff]
        %v466 = vld [vmem:[%s2 + $0x48] sm:$0xff]
        %v467 = vld [vmem:[%s2 + $0x50] sm:$0xff]
        %v468 = vld [vmem:[%s2 + $0x58] sm:$0xff]
        %v469 = vld [vmem:[%s2 + $0x60] sm:$0xff]
        %v470 = vld [vmem:[%s2 + $0x68] sm:$0xff]
        %v471 = vld [vmem:[%s2 + $0x70] sm:$0xff]
        %v472 = vld [vmem:[%s2 + $0x78] sm:$0xff]
        %v473 = vld [vmem:[%s2 + $0x80] sm:$0xff]
        %v474 = vld [vmem:[%s2 + $0x88] sm:$0xff]
        %v475 = vld [vmem:[%s2 + $0x90] sm:$0xff]
        %v476 = vld [vmem:[%s2 + $0x98] sm:$0xff]
        %v477 = vld [vmem:[%s2 + $0xa0] sm:$0xff]
        %v478 = vld [vmem:[%s2 + $0xa8] sm:$0xff]
        %v479 = vld [vmem:[%s2 + $0xb0] sm:$0xff]
        %v480 = vld [vmem:[%s2 + $0xb8] sm:$0xff]
        %v481 = vld [vmem:[%s2 + $0xc0] sm:$0xff]
        %v482 = vld [vmem:[%s2 + $0xc8] sm:$0xff]
        %v483 = vld [vmem:[%s2 + $0xd0] sm:$0xff]
        %v484 = vld [vmem:[%s2 + $0xd8] sm:$0xff]
        %v485 = vld [vmem:[%s2 + $0xe0] sm:$0xff]
        %v486 = vld [vmem:[%s2 + $0xe8] sm:$0xff]
        %v487 = vld [vmem:[%s2 + $0xf0] sm:$0xff]
        %v488 = vld [vmem:[%s2 + $0xf8] sm:$0xff]
        %v489 = vmul.f32 %v457, 0.85
        %v490 = vmul.f32 %v458, 0.85
        %v491 = vmul.f32 %v459, 0.85
        %v492 = vmul.f32 %v460, 0.85
        %v493 = vmul.f32 %v461, 0.85
        %v494 = vmul.f32 %v462, 0.85
        %v495 = vmul.f32 %v463, 0.85
        %v496 = vmul.f32 %v464, 0.85
        %v497 = vmul.f32 %v465, 0.85
        %v498 = vmul.f32 %v466, 0.85
        %v499 = vmul.f32 %v467, 0.85
        %v500 = vmul.f32 %v468, 0.85
        %v501 = vmul.f32 %v469, 0.85
        %v502 = vmul.f32 %v470, 0.85
        %v503 = vmul.f32 %v471, 0.85
        %v504 = vmul.f32 %v472, 0.85
        %v505 = vmul.f32 %v473, 0.85
        %v506 = vmul.f32 %v474, 0.85
        %v507 = vmul.f32 %v475, 0.85
        %v508 = vmul.f32 %v476, 0.85
        %v509 = vmul.f32 %v477, 0.85
        %v510 = vmul.f32 %v478, 0.85
        %v511 = vmul.f32 %v479, 0.85
        %v512 = vmul.f32 %v480, 0.85
        %v513 = vmul.f32 %v481, 0.85
        %v514 = vmul.f32 %v482, 0.85
        %v515 = vmul.f32 %v483, 0.85
        %v516 = vmul.f32 %v484, 0.85
        %v517 = vmul.f32 %v485, 0.85
        %v518 = vmul.f32 %v486, 0.85
        %v519 = vmul.f32 %v487, 0.85
        %v520 = vmul.f32 %v488, 0.85
        %v521 = vlaneseq
        %v522 = vshrl.u32 %v521, 7
        %v523 = vsub.s32 0, %v522
        %v524 = vrot.slane %v393, %v523
        %v525 = vlaneseq
        %v526 = vshrl.u32 %v525, 7
        %v527 = vsub.s32 0, %v526
        %v528 = vrot.slane %v395, %v527
        %v529 = vlaneseq
        %v530 = vshrl.u32 %v529, 7
        %v531 = vsub.s32 0, %v530
        %v532 = vrot.slane %v397, %v531
        %v533 = vlaneseq
        %v534 = vshrl.u32 %v533, 7
        %v535 = vsub.s32 0, %v534
        %v536 = vrot.slane %v399, %v535
        %v537 = vlaneseq
        %v538 = vshrl.u32 %v537, 7
        %v539 = vsub.s32 0, %v538
        %v540 = vrot.slane %v401, %v539
        %v541 = vlaneseq
        %v542 = vshrl.u32 %v541, 7
        %v543 = vsub.s32 0, %v542
        %v544 = vrot.slane %v403, %v543
        %v545 = vlaneseq
        %v546 = vshrl.u32 %v545, 7
        %v547 = vsub.s32 0, %v546
        %v548 = vrot.slane %v405, %v547
        %v549 = vlaneseq
        %v550 = vshrl.u32 %v549, 7
        %v551 = vsub.s32 0, %v550
        %v552 = vrot.slane %v407, %v551
        %v553 = vlaneseq
        %v554 = vshrl.u32 %v553, 7
        %v555 = vsub.s32 0, %v554
        %v556 = vrot.slane %v409, %v555
        %v557 = vlaneseq
        %v558 = vshrl.u32 %v557, 7
        %v559 = vsub.s32 0, %v558
        %v560 = vrot.slane %v411, %v559
        %v561 = vlaneseq
        %v562 = vshrl.u32 %v561, 7
        %v563 = vsub.s32 0, %v562
        %v564 = vrot.slane %v413, %v563
        %v565 = vlaneseq
        %v566 = vshrl.u32 %v565, 7
        %v567 = vsub.s32 0, %v566
        %v568 = vrot.slane %v415, %v567
        %v569 = vlaneseq
        %v570 = vshrl.u32 %v569, 7
        %v571 = vsub.s32 0, %v570
        %v572 = vrot.slane %v417, %v571
        %v573 = vlaneseq
        %v574 = vshrl.u32 %v573, 7
        %v575 = vsub.s32 0, %v574
        %v576 = vrot.slane %v419, %v575
        %v577 = vlaneseq
        %v578 = vshrl.u32 %v577, 7
        %v579 = vsub.s32 0, %v578
        %v580 = vrot.slane %v421, %v579
        %v581 = vlaneseq
        %v582 = vshrl.u32 %v581, 7
        %v583 = vsub.s32 0, %v582
        %v584 = vrot.slane %v423, %v583
        %586 = vset.pattern.permute.xlu0 0
        %587 = vperm.xlu0 %586, %v489
        %v588 = vpop.permute.xlu0 %587
        %591 = vset.pattern.permute.xlu0 0
        %592 = vperm.xlu0 %591, %v490
        %v593 = vpop.permute.xlu0 %592
        %v595 = vmul.f32 %v524, %v588
        %v596 = vmul.f32 %v524, %v593
        %v597 = vmul.f32 %v528, %v588
        %v598 = vmul.f32 %v528, %v593
        %v599 = vmul.f32 %v532, %v588
        %v600 = vmul.f32 %v532, %v593
        %v601 = vmul.f32 %v536, %v588
        %v602 = vmul.f32 %v536, %v593
        %v603 = vmul.f32 %v540, %v588
        %v604 = vmul.f32 %v540, %v593
        %v605 = vmul.f32 %v544, %v588
        %v606 = vmul.f32 %v544, %v593
        %v607 = vmul.f32 %v548, %v588
        %v608 = vmul.f32 %v548, %v593
        %v609 = vmul.f32 %v552, %v588
        %v610 = vmul.f32 %v552, %v593
        %v611 = vmul.f32 %v556, %v588
        %v612 = vmul.f32 %v556, %v593
        %v613 = vmul.f32 %v560, %v588
        %v614 = vmul.f32 %v560, %v593
        %v615 = vmul.f32 %v564, %v588
        %v616 = vmul.f32 %v564, %v593
        %v617 = vmul.f32 %v568, %v588
        %v618 = vmul.f32 %v568, %v593
        %v619 = vmul.f32 %v572, %v588
        %v620 = vmul.f32 %v572, %v593
        %v621 = vmul.f32 %v576, %v588
        %v622 = vmul.f32 %v576, %v593
        %v623 = vmul.f32 %v580, %v588
        %v624 = vmul.f32 %v580, %v593
        %v625 = vmul.f32 %v584, %v588
        %v626 = vmul.f32 %v584, %v593
        %v627 = vlaneseq
        %v628 = vshrl.u32 %v627, 7
        %v629 = vsub.s32 1, %v628
        %v630 = vrot.slane %v393, %v629
        %v631 = vlaneseq
        %v632 = vshrl.u32 %v631, 7
        %v633 = vsub.s32 1, %v632
        %v634 = vrot.slane %v395, %v633
        %v635 = vlaneseq
        %v636 = vshrl.u32 %v635, 7
        %v637 = vsub.s32 1, %v636
        %v638 = vrot.slane %v397, %v637
        %v639 = vlaneseq
        %v640 = vshrl.u32 %v639, 7
        %v641 = vsub.s32 1, %v640
        %v642 = vrot.slane %v399, %v641
        %v643 = vlaneseq
        %v644 = vshrl.u32 %v643, 7
        %v645 = vsub.s32 1, %v644
        %v646 = vrot.slane %v401, %v645
        %v647 = vlaneseq
        %v648 = vshrl.u32 %v647, 7
        %v649 = vsub.s32 1, %v648
        %v650 = vrot.slane %v403, %v649
        %v651 = vlaneseq
        %v652 = vshrl.u32 %v651, 7
        %v653 = vsub.s32 1, %v652
        %v654 = vrot.slane %v405, %v653
        %v655 = vlaneseq
        %v656 = vshrl.u32 %v655, 7
        %v657 = vsub.s32 1, %v656
        %v658 = vrot.slane %v407, %v657
        %v659 = vlaneseq
        %v660 = vshrl.u32 %v659, 7
        %v661 = vsub.s32 1, %v660
        %v662 = vrot.slane %v409, %v661
        %v663 = vlaneseq
        %v664 = vshrl.u32 %v663, 7
        %v665 = vsub.s32 1, %v664
        %v666 = vrot.slane %v411, %v665
        %v667 = vlaneseq
        %v668 = vshrl.u32 %v667, 7
        %v669 = vsub.s32 1, %v668
        %v670 = vrot.slane %v413, %v669
        %v671 = vlaneseq
        %v672 = vshrl.u32 %v671, 7
        %v673 = vsub.s32 1, %v672
        %v674 = vrot.slane %v415, %v673
        %v675 = vlaneseq
        %v676 = vshrl.u32 %v675, 7
        %v677 = vsub.s32 1, %v676
        %v678 = vrot.slane %v417, %v677
        %v679 = vlaneseq
        %v680 = vshrl.u32 %v679, 7
        %v681 = vsub.s32 1, %v680
        %v682 = vrot.slane %v419, %v681
        %v683 = vlaneseq
        %v684 = vshrl.u32 %v683, 7
        %v685 = vsub.s32 1, %v684
        %v686 = vrot.slane %v421, %v685
        %v687 = vlaneseq
        %v688 = vshrl.u32 %v687, 7
        %v689 = vsub.s32 1, %v688
        %v690 = vrot.slane %v423, %v689
        %692 = vset.pattern.permute.xlu0 0
        %693 = vperm.xlu0 %692, %v491
        %v694 = vpop.permute.xlu0 %693
        %697 = vset.pattern.permute.xlu0 0
        %698 = vperm.xlu0 %697, %v492
        %v699 = vpop.permute.xlu0 %698
        %v701 = vmul.f32 %v630, %v694
        %v702 = vmul.f32 %v630, %v699
        %v703 = vmul.f32 %v634, %v694
        %v704 = vmul.f32 %v634, %v699
        %v705 = vmul.f32 %v638, %v694
        %v706 = vmul.f32 %v638, %v699
        %v707 = vmul.f32 %v642, %v694
        %v708 = vmul.f32 %v642, %v699
        %v709 = vmul.f32 %v646, %v694
        %v710 = vmul.f32 %v646, %v699
        %v711 = vmul.f32 %v650, %v694
        %v712 = vmul.f32 %v650, %v699
        %v713 = vmul.f32 %v654, %v694
        %v714 = vmul.f32 %v654, %v699
        %v715 = vmul.f32 %v658, %v694
        %v716 = vmul.f32 %v658, %v699
        %v717 = vmul.f32 %v662, %v694
        %v718 = vmul.f32 %v662, %v699
        %v719 = vmul.f32 %v666, %v694
        %v720 = vmul.f32 %v666, %v699
        %v721 = vmul.f32 %v670, %v694
        %v722 = vmul.f32 %v670, %v699
        %v723 = vmul.f32 %v674, %v694
        %v724 = vmul.f32 %v674, %v699
        %v725 = vmul.f32 %v678, %v694
        %v726 = vmul.f32 %v678, %v699
        %v727 = vmul.f32 %v682, %v694
        %v728 = vmul.f32 %v682, %v699
        %v729 = vmul.f32 %v686, %v694
        %v730 = vmul.f32 %v686, %v699
        %v731 = vmul.f32 %v690, %v694
        %v732 = vmul.f32 %v690, %v699
        %v733 = vadd.f32 %v595, %v701
        %v734 = vadd.f32 %v596, %v702
        %v735 = vadd.f32 %v597, %v703
        %v736 = vadd.f32 %v598, %v704
        %v737 = vadd.f32 %v599, %v705
        %v738 = vadd.f32 %v600, %v706
        %v739 = vadd.f32 %v601, %v707
        %v740 = vadd.f32 %v602, %v708
        %v741 = vadd.f32 %v603, %v709
        %v742 = vadd.f32 %v604, %v710
        %v743 = vadd.f32 %v605, %v711
        %v744 = vadd.f32 %v606, %v712
        %v745 = vadd.f32 %v607, %v713
        %v746 = vadd.f32 %v608, %v714
        %v747 = vadd.f32 %v609, %v715
        %v748 = vadd.f32 %v610, %v716
        %v749 = vadd.f32 %v611, %v717
        %v750 = vadd.f32 %v612, %v718
        %v751 = vadd.f32 %v613, %v719
        %v752 = vadd.f32 %v614, %v720
        %v753 = vadd.f32 %v615, %v721
        %v754 = vadd.f32 %v616, %v722
        %v755 = vadd.f32 %v617, %v723
        %v756 = vadd.f32 %v618, %v724
        %v757 = vadd.f32 %v619, %v725
        %v758 = vadd.f32 %v620, %v726
        %v759 = vadd.f32 %v621, %v727
        %v760 = vadd.f32 %v622, %v728
        %v761 = vadd.f32 %v623, %v729
        %v762 = vadd.f32 %v624, %v730
        %v763 = vadd.f32 %v625, %v731
        %v764 = vadd.f32 %v626, %v732
        %v765 = vlaneseq
        %v766 = vshrl.u32 %v765, 7
        %v767 = vsub.s32 2, %v766
        %v768 = vrot.slane %v393, %v767
        %v769 = vlaneseq
        %v770 = vshrl.u32 %v769, 7
        %v771 = vsub.s32 2, %v770
        %v772 = vrot.slane %v395, %v771
        %v773 = vlaneseq
        %v774 = vshrl.u32 %v773, 7
        %v775 = vsub.s32 2, %v774
        %v776 = vrot.slane %v397, %v775
        %v777 = vlaneseq
        %v778 = vshrl.u32 %v777, 7
        %v779 = vsub.s32 2, %v778
        %v780 = vrot.slane %v399, %v779
        %v781 = vlaneseq
        %v782 = vshrl.u32 %v781, 7
        %v783 = vsub.s32 2, %v782
        %v784 = vrot.slane %v401, %v783
        %v785 = vlaneseq
        %v786 = vshrl.u32 %v785, 7
        %v787 = vsub.s32 2, %v786
        %v788 = vrot.slane %v403, %v787
        %v789 = vlaneseq
        %v790 = vshrl.u32 %v789, 7
        %v791 = vsub.s32 2, %v790
        %v792 = vrot.slane %v405, %v791
        %v793 = vlaneseq
        %v794 = vshrl.u32 %v793, 7
        %v795 = vsub.s32 2, %v794
        %v796 = vrot.slane %v407, %v795
        %v797 = vlaneseq
        %v798 = vshrl.u32 %v797, 7
        %v799 = vsub.s32 2, %v798
        %v800 = vrot.slane %v409, %v799
        %v801 = vlaneseq
        %v802 = vshrl.u32 %v801, 7
        %v803 = vsub.s32 2, %v802
        %v804 = vrot.slane %v411, %v803
        %v805 = vlaneseq
        %v806 = vshrl.u32 %v805, 7
        %v807 = vsub.s32 2, %v806
        %v808 = vrot.slane %v413, %v807
        %v809 = vlaneseq
        %v810 = vshrl.u32 %v809, 7
        %v811 = vsub.s32 2, %v810
        %v812 = vrot.slane %v415, %v811
        %v813 = vlaneseq
        %v814 = vshrl.u32 %v813, 7
        %v815 = vsub.s32 2, %v814
        %v816 = vrot.slane %v417, %v815
        %v817 = vlaneseq
        %v818 = vshrl.u32 %v817, 7
        %v819 = vsub.s32 2, %v818
        %v820 = vrot.slane %v419, %v819
        %v821 = vlaneseq
        %v822 = vshrl.u32 %v821, 7
        %v823 = vsub.s32 2, %v822
        %v824 = vrot.slane %v421, %v823
        %v825 = vlaneseq
        %v826 = vshrl.u32 %v825, 7
        %v827 = vsub.s32 2, %v826
        %v828 = vrot.slane %v423, %v827
        %830 = vset.pattern.permute.xlu0 0
        %831 = vperm.xlu0 %830, %v493
        %v832 = vpop.permute.xlu0 %831
        %835 = vset.pattern.permute.xlu0 0
        %836 = vperm.xlu0 %835, %v494
        %v837 = vpop.permute.xlu0 %836
        %v839 = vmul.f32 %v768, %v832
        %v840 = vmul.f32 %v768, %v837
        %v841 = vmul.f32 %v772, %v832
        %v842 = vmul.f32 %v772, %v837
        %v843 = vmul.f32 %v776, %v832
        %v844 = vmul.f32 %v776, %v837
        %v845 = vmul.f32 %v780, %v832
        %v846 = vmul.f32 %v780, %v837
        %v847 = vmul.f32 %v784, %v832
        %v848 = vmul.f32 %v784, %v837
        %v849 = vmul.f32 %v788, %v832
        %v850 = vmul.f32 %v788, %v837
        %v851 = vmul.f32 %v792, %v832
        %v852 = vmul.f32 %v792, %v837
        %v853 = vmul.f32 %v796, %v832
        %v854 = vmul.f32 %v796, %v837
        %v855 = vmul.f32 %v800, %v832
        %v856 = vmul.f32 %v800, %v837
        %v857 = vmul.f32 %v804, %v832
        %v858 = vmul.f32 %v804, %v837
        %v859 = vmul.f32 %v808, %v832
        %v860 = vmul.f32 %v808, %v837
        %v861 = vmul.f32 %v812, %v832
        %v862 = vmul.f32 %v812, %v837
        %v863 = vmul.f32 %v816, %v832
        %v864 = vmul.f32 %v816, %v837
        %v865 = vmul.f32 %v820, %v832
        %v866 = vmul.f32 %v820, %v837
        %v867 = vmul.f32 %v824, %v832
        %v868 = vmul.f32 %v824, %v837
        %v869 = vmul.f32 %v828, %v832
        %v870 = vmul.f32 %v828, %v837
        %v871 = vadd.f32 %v733, %v839
        %v872 = vadd.f32 %v734, %v840
        %v873 = vadd.f32 %v735, %v841
        %v874 = vadd.f32 %v736, %v842
        %v875 = vadd.f32 %v737, %v843
        %v876 = vadd.f32 %v738, %v844
        %v877 = vadd.f32 %v739, %v845
        %v878 = vadd.f32 %v740, %v846
        %v879 = vadd.f32 %v741, %v847
        %v880 = vadd.f32 %v742, %v848
        %v881 = vadd.f32 %v743, %v849
        %v882 = vadd.f32 %v744, %v850
        %v883 = vadd.f32 %v745, %v851
        %v884 = vadd.f32 %v746, %v852
        %v885 = vadd.f32 %v747, %v853
        %v886 = vadd.f32 %v748, %v854
        %v887 = vadd.f32 %v749, %v855
        %v888 = vadd.f32 %v750, %v856
        %v889 = vadd.f32 %v751, %v857
        %v890 = vadd.f32 %v752, %v858
        %v891 = vadd.f32 %v753, %v859
        %v892 = vadd.f32 %v754, %v860
        %v893 = vadd.f32 %v755, %v861
        %v894 = vadd.f32 %v756, %v862
        %v895 = vadd.f32 %v757, %v863
        %v896 = vadd.f32 %v758, %v864
        %v897 = vadd.f32 %v759, %v865
        %v898 = vadd.f32 %v760, %v866
        %v899 = vadd.f32 %v761, %v867
        %v900 = vadd.f32 %v762, %v868
        %v901 = vadd.f32 %v763, %v869
        %v902 = vadd.f32 %v764, %v870
        %v903 = vlaneseq
        %v904 = vshrl.u32 %v903, 7
        %v905 = vsub.s32 3, %v904
        %v906 = vrot.slane %v393, %v905
        %v907 = vlaneseq
        %v908 = vshrl.u32 %v907, 7
        %v909 = vsub.s32 3, %v908
        %v910 = vrot.slane %v395, %v909
        %v911 = vlaneseq
        %v912 = vshrl.u32 %v911, 7
        %v913 = vsub.s32 3, %v912
        %v914 = vrot.slane %v397, %v913
        %v915 = vlaneseq
        %v916 = vshrl.u32 %v915, 7
        %v917 = vsub.s32 3, %v916
        %v918 = vrot.slane %v399, %v917
        %v919 = vlaneseq
        %v920 = vshrl.u32 %v919, 7
        %v921 = vsub.s32 3, %v920
        %v922 = vrot.slane %v401, %v921
        %v923 = vlaneseq
        %v924 = vshrl.u32 %v923, 7
        %v925 = vsub.s32 3, %v924
        %v926 = vrot.slane %v403, %v925
        %v927 = vlaneseq
        %v928 = vshrl.u32 %v927, 7
        %v929 = vsub.s32 3, %v928
        %v930 = vrot.slane %v405, %v929
        %v931 = vlaneseq
        %v932 = vshrl.u32 %v931, 7
        %v933 = vsub.s32 3, %v932
        %v934 = vrot.slane %v407, %v933
        %v935 = vlaneseq
        %v936 = vshrl.u32 %v935, 7
        %v937 = vsub.s32 3, %v936
        %v938 = vrot.slane %v409, %v937
        %v939 = vlaneseq
        %v940 = vshrl.u32 %v939, 7
        %v941 = vsub.s32 3, %v940
        %v942 = vrot.slane %v411, %v941
        %v943 = vlaneseq
        %v944 = vshrl.u32 %v943, 7
        %v945 = vsub.s32 3, %v944
        %v946 = vrot.slane %v413, %v945
        %v947 = vlaneseq
        %v948 = vshrl.u32 %v947, 7
        %v949 = vsub.s32 3, %v948
        %v950 = vrot.slane %v415, %v949
        %v951 = vlaneseq
        %v952 = vshrl.u32 %v951, 7
        %v953 = vsub.s32 3, %v952
        %v954 = vrot.slane %v417, %v953
        %v955 = vlaneseq
        %v956 = vshrl.u32 %v955, 7
        %v957 = vsub.s32 3, %v956
        %v958 = vrot.slane %v419, %v957
        %v959 = vlaneseq
        %v960 = vshrl.u32 %v959, 7
        %v961 = vsub.s32 3, %v960
        %v962 = vrot.slane %v421, %v961
        %v963 = vlaneseq
        %v964 = vshrl.u32 %v963, 7
        %v965 = vsub.s32 3, %v964
        %v966 = vrot.slane %v423, %v965
        %968 = vset.pattern.permute.xlu0 0
        %969 = vperm.xlu0 %968, %v495
        %v970 = vpop.permute.xlu0 %969
        %973 = vset.pattern.permute.xlu0 0
        %974 = vperm.xlu0 %973, %v496
        %v975 = vpop.permute.xlu0 %974
        %v977 = vmul.f32 %v906, %v970
        %v978 = vmul.f32 %v906, %v975
        %v979 = vmul.f32 %v910, %v970
        %v980 = vmul.f32 %v910, %v975
        %v981 = vmul.f32 %v914, %v970
        %v982 = vmul.f32 %v914, %v975
        %v983 = vmul.f32 %v918, %v970
        %v984 = vmul.f32 %v918, %v975
        %v985 = vmul.f32 %v922, %v970
        %v986 = vmul.f32 %v922, %v975
        %v987 = vmul.f32 %v926, %v970
        %v988 = vmul.f32 %v926, %v975
        %v989 = vmul.f32 %v930, %v970
        %v990 = vmul.f32 %v930, %v975
        %v991 = vmul.f32 %v934, %v970
        %v992 = vmul.f32 %v934, %v975
        %v993 = vmul.f32 %v938, %v970
        %v994 = vmul.f32 %v938, %v975
        %v995 = vmul.f32 %v942, %v970
        %v996 = vmul.f32 %v942, %v975
        %v997 = vmul.f32 %v946, %v970
        %v998 = vmul.f32 %v946, %v975
        %v999 = vmul.f32 %v950, %v970
        %v1000 = vmul.f32 %v950, %v975
        %v1001 = vmul.f32 %v954, %v970
        %v1002 = vmul.f32 %v954, %v975
        %v1003 = vmul.f32 %v958, %v970
        %v1004 = vmul.f32 %v958, %v975
        %v1005 = vmul.f32 %v962, %v970
        %v1006 = vmul.f32 %v962, %v975
        %v1007 = vmul.f32 %v966, %v970
        %v1008 = vmul.f32 %v966, %v975
        %v1009 = vadd.f32 %v871, %v977
        %v1010 = vadd.f32 %v872, %v978
        %v1011 = vadd.f32 %v873, %v979
        %v1012 = vadd.f32 %v874, %v980
        %v1013 = vadd.f32 %v875, %v981
        %v1014 = vadd.f32 %v876, %v982
        %v1015 = vadd.f32 %v877, %v983
        %v1016 = vadd.f32 %v878, %v984
        %v1017 = vadd.f32 %v879, %v985
        %v1018 = vadd.f32 %v880, %v986
        %v1019 = vadd.f32 %v881, %v987
        %v1020 = vadd.f32 %v882, %v988
        %v1021 = vadd.f32 %v883, %v989
        %v1022 = vadd.f32 %v884, %v990
        %v1023 = vadd.f32 %v885, %v991
        %v1024 = vadd.f32 %v886, %v992
        %v1025 = vadd.f32 %v887, %v993
        %v1026 = vadd.f32 %v888, %v994
        %v1027 = vadd.f32 %v889, %v995
        %v1028 = vadd.f32 %v890, %v996
        %v1029 = vadd.f32 %v891, %v997
        %v1030 = vadd.f32 %v892, %v998
        %v1031 = vadd.f32 %v893, %v999
        %v1032 = vadd.f32 %v894, %v1000
        %v1033 = vadd.f32 %v895, %v1001
        %v1034 = vadd.f32 %v896, %v1002
        %v1035 = vadd.f32 %v897, %v1003
        %v1036 = vadd.f32 %v898, %v1004
        %v1037 = vadd.f32 %v899, %v1005
        %v1038 = vadd.f32 %v900, %v1006
        %v1039 = vadd.f32 %v901, %v1007
        %v1040 = vadd.f32 %v902, %v1008
        %v1041 = vlaneseq
        %v1042 = vshrl.u32 %v1041, 7
        %v1043 = vsub.s32 4, %v1042
        %v1044 = vrot.slane %v393, %v1043
        %v1045 = vlaneseq
        %v1046 = vshrl.u32 %v1045, 7
        %v1047 = vsub.s32 4, %v1046
        %v1048 = vrot.slane %v395, %v1047
        %v1049 = vlaneseq
        %v1050 = vshrl.u32 %v1049, 7
        %v1051 = vsub.s32 4, %v1050
        %v1052 = vrot.slane %v397, %v1051
        %v1053 = vlaneseq
        %v1054 = vshrl.u32 %v1053, 7
        %v1055 = vsub.s32 4, %v1054
        %v1056 = vrot.slane %v399, %v1055
        %v1057 = vlaneseq
        %v1058 = vshrl.u32 %v1057, 7
        %v1059 = vsub.s32 4, %v1058
        %v1060 = vrot.slane %v401, %v1059
        %v1061 = vlaneseq
        %v1062 = vshrl.u32 %v1061, 7
        %v1063 = vsub.s32 4, %v1062
        %v1064 = vrot.slane %v403, %v1063
        %v1065 = vlaneseq
        %v1066 = vshrl.u32 %v1065, 7
        %v1067 = vsub.s32 4, %v1066
        %v1068 = vrot.slane %v405, %v1067
        %v1069 = vlaneseq
        %v1070 = vshrl.u32 %v1069, 7
        %v1071 = vsub.s32 4, %v1070
        %v1072 = vrot.slane %v407, %v1071
        %v1073 = vlaneseq
        %v1074 = vshrl.u32 %v1073, 7
        %v1075 = vsub.s32 4, %v1074
        %v1076 = vrot.slane %v409, %v1075
        %v1077 = vlaneseq
        %v1078 = vshrl.u32 %v1077, 7
        %v1079 = vsub.s32 4, %v1078
        %v1080 = vrot.slane %v411, %v1079
        %v1081 = vlaneseq
        %v1082 = vshrl.u32 %v1081, 7
        %v1083 = vsub.s32 4, %v1082
        %v1084 = vrot.slane %v413, %v1083
        %v1085 = vlaneseq
        %v1086 = vshrl.u32 %v1085, 7
        %v1087 = vsub.s32 4, %v1086
        %v1088 = vrot.slane %v415, %v1087
        %v1089 = vlaneseq
        %v1090 = vshrl.u32 %v1089, 7
        %v1091 = vsub.s32 4, %v1090
        %v1092 = vrot.slane %v417, %v1091
        %v1093 = vlaneseq
        %v1094 = vshrl.u32 %v1093, 7
        %v1095 = vsub.s32 4, %v1094
        %v1096 = vrot.slane %v419, %v1095
        %v1097 = vlaneseq
        %v1098 = vshrl.u32 %v1097, 7
        %v1099 = vsub.s32 4, %v1098
        %v1100 = vrot.slane %v421, %v1099
        %v1101 = vlaneseq
        %v1102 = vshrl.u32 %v1101, 7
        %v1103 = vsub.s32 4, %v1102
        %v1104 = vrot.slane %v423, %v1103
        %1106 = vset.pattern.permute.xlu0 0
        %1107 = vperm.xlu0 %1106, %v497
        %v1108 = vpop.permute.xlu0 %1107
        %1111 = vset.pattern.permute.xlu0 0
        %1112 = vperm.xlu0 %1111, %v498
        %v1113 = vpop.permute.xlu0 %1112
        %v1115 = vmul.f32 %v1044, %v1108
        %v1116 = vmul.f32 %v1044, %v1113
        %v1117 = vmul.f32 %v1048, %v1108
        %v1118 = vmul.f32 %v1048, %v1113
        %v1119 = vmul.f32 %v1052, %v1108
        %v1120 = vmul.f32 %v1052, %v1113
        %v1121 = vmul.f32 %v1056, %v1108
        %v1122 = vmul.f32 %v1056, %v1113
        %v1123 = vmul.f32 %v1060, %v1108
        %v1124 = vmul.f32 %v1060, %v1113
        %v1125 = vmul.f32 %v1064, %v1108
        %v1126 = vmul.f32 %v1064, %v1113
        %v1127 = vmul.f32 %v1068, %v1108
        %v1128 = vmul.f32 %v1068, %v1113
        %v1129 = vmul.f32 %v1072, %v1108
        %v1130 = vmul.f32 %v1072, %v1113
        %v1131 = vmul.f32 %v1076, %v1108
        %v1132 = vmul.f32 %v1076, %v1113
        %v1133 = vmul.f32 %v1080, %v1108
        %v1134 = vmul.f32 %v1080, %v1113
        %v1135 = vmul.f32 %v1084, %v1108
        %v1136 = vmul.f32 %v1084, %v1113
        %v1137 = vmul.f32 %v1088, %v1108
        %v1138 = vmul.f32 %v1088, %v1113
        %v1139 = vmul.f32 %v1092, %v1108
        %v1140 = vmul.f32 %v1092, %v1113
        %v1141 = vmul.f32 %v1096, %v1108
        %v1142 = vmul.f32 %v1096, %v1113
        %v1143 = vmul.f32 %v1100, %v1108
        %v1144 = vmul.f32 %v1100, %v1113
        %v1145 = vmul.f32 %v1104, %v1108
        %v1146 = vmul.f32 %v1104, %v1113
        %v1147 = vadd.f32 %v1009, %v1115
        %v1148 = vadd.f32 %v1010, %v1116
        %v1149 = vadd.f32 %v1011, %v1117
        %v1150 = vadd.f32 %v1012, %v1118
        %v1151 = vadd.f32 %v1013, %v1119
        %v1152 = vadd.f32 %v1014, %v1120
        %v1153 = vadd.f32 %v1015, %v1121
        %v1154 = vadd.f32 %v1016, %v1122
        %v1155 = vadd.f32 %v1017, %v1123
        %v1156 = vadd.f32 %v1018, %v1124
        %v1157 = vadd.f32 %v1019, %v1125
        %v1158 = vadd.f32 %v1020, %v1126
        %v1159 = vadd.f32 %v1021, %v1127
        %v1160 = vadd.f32 %v1022, %v1128
        %v1161 = vadd.f32 %v1023, %v1129
        %v1162 = vadd.f32 %v1024, %v1130
        %v1163 = vadd.f32 %v1025, %v1131
        %v1164 = vadd.f32 %v1026, %v1132
        %v1165 = vadd.f32 %v1027, %v1133
        %v1166 = vadd.f32 %v1028, %v1134
        %v1167 = vadd.f32 %v1029, %v1135
        %v1168 = vadd.f32 %v1030, %v1136
        %v1169 = vadd.f32 %v1031, %v1137
        %v1170 = vadd.f32 %v1032, %v1138
        %v1171 = vadd.f32 %v1033, %v1139
        %v1172 = vadd.f32 %v1034, %v1140
        %v1173 = vadd.f32 %v1035, %v1141
        %v1174 = vadd.f32 %v1036, %v1142
        %v1175 = vadd.f32 %v1037, %v1143
        %v1176 = vadd.f32 %v1038, %v1144
        %v1177 = vadd.f32 %v1039, %v1145
        %v1178 = vadd.f32 %v1040, %v1146
        %v1179 = vlaneseq
        %v1180 = vshrl.u32 %v1179, 7
        %v1181 = vsub.s32 5, %v1180
        %v1182 = vrot.slane %v393, %v1181
        %v1183 = vlaneseq
        %v1184 = vshrl.u32 %v1183, 7
        %v1185 = vsub.s32 5, %v1184
        %v1186 = vrot.slane %v395, %v1185
        %v1187 = vlaneseq
        %v1188 = vshrl.u32 %v1187, 7
        %v1189 = vsub.s32 5, %v1188
        %v1190 = vrot.slane %v397, %v1189
        %v1191 = vlaneseq
        %v1192 = vshrl.u32 %v1191, 7
        %v1193 = vsub.s32 5, %v1192
        %v1194 = vrot.slane %v399, %v1193
        %v1195 = vlaneseq
        %v1196 = vshrl.u32 %v1195, 7
        %v1197 = vsub.s32 5, %v1196
        %v1198 = vrot.slane %v401, %v1197
        %v1199 = vlaneseq
        %v1200 = vshrl.u32 %v1199, 7
        %v1201 = vsub.s32 5, %v1200
        %v1202 = vrot.slane %v403, %v1201
        %v1203 = vlaneseq
        %v1204 = vshrl.u32 %v1203, 7
        %v1205 = vsub.s32 5, %v1204
        %v1206 = vrot.slane %v405, %v1205
        %v1207 = vlaneseq
        %v1208 = vshrl.u32 %v1207, 7
        %v1209 = vsub.s32 5, %v1208
        %v1210 = vrot.slane %v407, %v1209
        %v1211 = vlaneseq
        %v1212 = vshrl.u32 %v1211, 7
        %v1213 = vsub.s32 5, %v1212
        %v1214 = vrot.slane %v409, %v1213
        %v1215 = vlaneseq
        %v1216 = vshrl.u32 %v1215, 7
        %v1217 = vsub.s32 5, %v1216
        %v1218 = vrot.slane %v411, %v1217
        %v1219 = vlaneseq
        %v1220 = vshrl.u32 %v1219, 7
        %v1221 = vsub.s32 5, %v1220
        %v1222 = vrot.slane %v413, %v1221
        %v1223 = vlaneseq
        %v1224 = vshrl.u32 %v1223, 7
        %v1225 = vsub.s32 5, %v1224
        %v1226 = vrot.slane %v415, %v1225
        %v1227 = vlaneseq
        %v1228 = vshrl.u32 %v1227, 7
        %v1229 = vsub.s32 5, %v1228
        %v1230 = vrot.slane %v417, %v1229
        %v1231 = vlaneseq
        %v1232 = vshrl.u32 %v1231, 7
        %v1233 = vsub.s32 5, %v1232
        %v1234 = vrot.slane %v419, %v1233
        %v1235 = vlaneseq
        %v1236 = vshrl.u32 %v1235, 7
        %v1237 = vsub.s32 5, %v1236
        %v1238 = vrot.slane %v421, %v1237
        %v1239 = vlaneseq
        %v1240 = vshrl.u32 %v1239, 7
        %v1241 = vsub.s32 5, %v1240
        %v1242 = vrot.slane %v423, %v1241
        %1244 = vset.pattern.permute.xlu0 0
        %1245 = vperm.xlu0 %1244, %v499
        %v1246 = vpop.permute.xlu0 %1245
        %1249 = vset.pattern.permute.xlu0 0
        %1250 = vperm.xlu0 %1249, %v500
        %v1251 = vpop.permute.xlu0 %1250
        %v1253 = vmul.f32 %v1182, %v1246
        %v1254 = vmul.f32 %v1182, %v1251
        %v1255 = vmul.f32 %v1186, %v1246
        %v1256 = vmul.f32 %v1186, %v1251
        %v1257 = vmul.f32 %v1190, %v1246
        %v1258 = vmul.f32 %v1190, %v1251
        %v1259 = vmul.f32 %v1194, %v1246
        %v1260 = vmul.f32 %v1194, %v1251
        %v1261 = vmul.f32 %v1198, %v1246
        %v1262 = vmul.f32 %v1198, %v1251
        %v1263 = vmul.f32 %v1202, %v1246
        %v1264 = vmul.f32 %v1202, %v1251
        %v1265 = vmul.f32 %v1206, %v1246
        %v1266 = vmul.f32 %v1206, %v1251
        %v1267 = vmul.f32 %v1210, %v1246
        %v1268 = vmul.f32 %v1210, %v1251
        %v1269 = vmul.f32 %v1214, %v1246
        %v1270 = vmul.f32 %v1214, %v1251
        %v1271 = vmul.f32 %v1218, %v1246
        %v1272 = vmul.f32 %v1218, %v1251
        %v1273 = vmul.f32 %v1222, %v1246
        %v1274 = vmul.f32 %v1222, %v1251
        %v1275 = vmul.f32 %v1226, %v1246
        %v1276 = vmul.f32 %v1226, %v1251
        %v1277 = vmul.f32 %v1230, %v1246
        %v1278 = vmul.f32 %v1230, %v1251
        %v1279 = vmul.f32 %v1234, %v1246
        %v1280 = vmul.f32 %v1234, %v1251
        %v1281 = vmul.f32 %v1238, %v1246
        %v1282 = vmul.f32 %v1238, %v1251
        %v1283 = vmul.f32 %v1242, %v1246
        %v1284 = vmul.f32 %v1242, %v1251
        %v1285 = vadd.f32 %v1147, %v1253
        %v1286 = vadd.f32 %v1148, %v1254
        %v1287 = vadd.f32 %v1149, %v1255
        %v1288 = vadd.f32 %v1150, %v1256
        %v1289 = vadd.f32 %v1151, %v1257
        %v1290 = vadd.f32 %v1152, %v1258
        %v1291 = vadd.f32 %v1153, %v1259
        %v1292 = vadd.f32 %v1154, %v1260
        %v1293 = vadd.f32 %v1155, %v1261
        %v1294 = vadd.f32 %v1156, %v1262
        %v1295 = vadd.f32 %v1157, %v1263
        %v1296 = vadd.f32 %v1158, %v1264
        %v1297 = vadd.f32 %v1159, %v1265
        %v1298 = vadd.f32 %v1160, %v1266
        %v1299 = vadd.f32 %v1161, %v1267
        %v1300 = vadd.f32 %v1162, %v1268
        %v1301 = vadd.f32 %v1163, %v1269
        %v1302 = vadd.f32 %v1164, %v1270
        %v1303 = vadd.f32 %v1165, %v1271
        %v1304 = vadd.f32 %v1166, %v1272
        %v1305 = vadd.f32 %v1167, %v1273
        %v1306 = vadd.f32 %v1168, %v1274
        %v1307 = vadd.f32 %v1169, %v1275
        %v1308 = vadd.f32 %v1170, %v1276
        %v1309 = vadd.f32 %v1171, %v1277
        %v1310 = vadd.f32 %v1172, %v1278
        %v1311 = vadd.f32 %v1173, %v1279
        %v1312 = vadd.f32 %v1174, %v1280
        %v1313 = vadd.f32 %v1175, %v1281
        %v1314 = vadd.f32 %v1176, %v1282
        %v1315 = vadd.f32 %v1177, %v1283
        %v1316 = vadd.f32 %v1178, %v1284
        %v1317 = vlaneseq
        %v1318 = vshrl.u32 %v1317, 7
        %v1319 = vsub.s32 6, %v1318
        %v1320 = vrot.slane %v393, %v1319
        %v1321 = vlaneseq
        %v1322 = vshrl.u32 %v1321, 7
        %v1323 = vsub.s32 6, %v1322
        %v1324 = vrot.slane %v395, %v1323
        %v1325 = vlaneseq
        %v1326 = vshrl.u32 %v1325, 7
        %v1327 = vsub.s32 6, %v1326
        %v1328 = vrot.slane %v397, %v1327
        %v1329 = vlaneseq
        %v1330 = vshrl.u32 %v1329, 7
        %v1331 = vsub.s32 6, %v1330
        %v1332 = vrot.slane %v399, %v1331
        %v1333 = vlaneseq
        %v1334 = vshrl.u32 %v1333, 7
        %v1335 = vsub.s32 6, %v1334
        %v1336 = vrot.slane %v401, %v1335
        %v1337 = vlaneseq
        %v1338 = vshrl.u32 %v1337, 7
        %v1339 = vsub.s32 6, %v1338
        %v1340 = vrot.slane %v403, %v1339
        %v1341 = vlaneseq
        %v1342 = vshrl.u32 %v1341, 7
        %v1343 = vsub.s32 6, %v1342
        %v1344 = vrot.slane %v405, %v1343
        %v1345 = vlaneseq
        %v1346 = vshrl.u32 %v1345, 7
        %v1347 = vsub.s32 6, %v1346
        %v1348 = vrot.slane %v407, %v1347
        %v1349 = vlaneseq
        %v1350 = vshrl.u32 %v1349, 7
        %v1351 = vsub.s32 6, %v1350
        %v1352 = vrot.slane %v409, %v1351
        %v1353 = vlaneseq
        %v1354 = vshrl.u32 %v1353, 7
        %v1355 = vsub.s32 6, %v1354
        %v1356 = vrot.slane %v411, %v1355
        %v1357 = vlaneseq
        %v1358 = vshrl.u32 %v1357, 7
        %v1359 = vsub.s32 6, %v1358
        %v1360 = vrot.slane %v413, %v1359
        %v1361 = vlaneseq
        %v1362 = vshrl.u32 %v1361, 7
        %v1363 = vsub.s32 6, %v1362
        %v1364 = vrot.slane %v415, %v1363
        %v1365 = vlaneseq
        %v1366 = vshrl.u32 %v1365, 7
        %v1367 = vsub.s32 6, %v1366
        %v1368 = vrot.slane %v417, %v1367
        %v1369 = vlaneseq
        %v1370 = vshrl.u32 %v1369, 7
        %v1371 = vsub.s32 6, %v1370
        %v1372 = vrot.slane %v419, %v1371
        %v1373 = vlaneseq
        %v1374 = vshrl.u32 %v1373, 7
        %v1375 = vsub.s32 6, %v1374
        %v1376 = vrot.slane %v421, %v1375
        %v1377 = vlaneseq
        %v1378 = vshrl.u32 %v1377, 7
        %v1379 = vsub.s32 6, %v1378
        %v1380 = vrot.slane %v423, %v1379
        %1382 = vset.pattern.permute.xlu0 0
        %1383 = vperm.xlu0 %1382, %v501
        %v1384 = vpop.permute.xlu0 %1383
        %1387 = vset.pattern.permute.xlu0 0
        %1388 = vperm.xlu0 %1387, %v502
        %v1389 = vpop.permute.xlu0 %1388
        %v1391 = vmul.f32 %v1320, %v1384
        %v1392 = vmul.f32 %v1320, %v1389
        %v1393 = vmul.f32 %v1324, %v1384
        %v1394 = vmul.f32 %v1324, %v1389
        %v1395 = vmul.f32 %v1328, %v1384
        %v1396 = vmul.f32 %v1328, %v1389
        %v1397 = vmul.f32 %v1332, %v1384
        %v1398 = vmul.f32 %v1332, %v1389
        %v1399 = vmul.f32 %v1336, %v1384
        %v1400 = vmul.f32 %v1336, %v1389
        %v1401 = vmul.f32 %v1340, %v1384
        %v1402 = vmul.f32 %v1340, %v1389
        %v1403 = vmul.f32 %v1344, %v1384
        %v1404 = vmul.f32 %v1344, %v1389
        %v1405 = vmul.f32 %v1348, %v1384
        %v1406 = vmul.f32 %v1348, %v1389
        %v1407 = vmul.f32 %v1352, %v1384
        %v1408 = vmul.f32 %v1352, %v1389
        %v1409 = vmul.f32 %v1356, %v1384
        %v1410 = vmul.f32 %v1356, %v1389
        %v1411 = vmul.f32 %v1360, %v1384
        %v1412 = vmul.f32 %v1360, %v1389
        %v1413 = vmul.f32 %v1364, %v1384
        %v1414 = vmul.f32 %v1364, %v1389
        %v1415 = vmul.f32 %v1368, %v1384
        %v1416 = vmul.f32 %v1368, %v1389
        %v1417 = vmul.f32 %v1372, %v1384
        %v1418 = vmul.f32 %v1372, %v1389
        %v1419 = vmul.f32 %v1376, %v1384
        %v1420 = vmul.f32 %v1376, %v1389
        %v1421 = vmul.f32 %v1380, %v1384
        %v1422 = vmul.f32 %v1380, %v1389
        %v1423 = vadd.f32 %v1285, %v1391
        %v1424 = vadd.f32 %v1286, %v1392
        %v1425 = vadd.f32 %v1287, %v1393
        %v1426 = vadd.f32 %v1288, %v1394
        %v1427 = vadd.f32 %v1289, %v1395
        %v1428 = vadd.f32 %v1290, %v1396
        %v1429 = vadd.f32 %v1291, %v1397
        %v1430 = vadd.f32 %v1292, %v1398
        %v1431 = vadd.f32 %v1293, %v1399
        %v1432 = vadd.f32 %v1294, %v1400
        %v1433 = vadd.f32 %v1295, %v1401
        %v1434 = vadd.f32 %v1296, %v1402
        %v1435 = vadd.f32 %v1297, %v1403
        %v1436 = vadd.f32 %v1298, %v1404
        %v1437 = vadd.f32 %v1299, %v1405
        %v1438 = vadd.f32 %v1300, %v1406
        %v1439 = vadd.f32 %v1301, %v1407
        %v1440 = vadd.f32 %v1302, %v1408
        %v1441 = vadd.f32 %v1303, %v1409
        %v1442 = vadd.f32 %v1304, %v1410
        %v1443 = vadd.f32 %v1305, %v1411
        %v1444 = vadd.f32 %v1306, %v1412
        %v1445 = vadd.f32 %v1307, %v1413
        %v1446 = vadd.f32 %v1308, %v1414
        %v1447 = vadd.f32 %v1309, %v1415
        %v1448 = vadd.f32 %v1310, %v1416
        %v1449 = vadd.f32 %v1311, %v1417
        %v1450 = vadd.f32 %v1312, %v1418
        %v1451 = vadd.f32 %v1313, %v1419
        %v1452 = vadd.f32 %v1314, %v1420
        %v1453 = vadd.f32 %v1315, %v1421
        %v1454 = vadd.f32 %v1316, %v1422
        %v1455 = vlaneseq
        %v1456 = vshrl.u32 %v1455, 7
        %v1457 = vsub.s32 7, %v1456
        %v1458 = vrot.slane %v393, %v1457
        %v1459 = vlaneseq
        %v1460 = vshrl.u32 %v1459, 7
        %v1461 = vsub.s32 7, %v1460
        %v1462 = vrot.slane %v395, %v1461
        %v1463 = vlaneseq
        %v1464 = vshrl.u32 %v1463, 7
        %v1465 = vsub.s32 7, %v1464
        %v1466 = vrot.slane %v397, %v1465
        %v1467 = vlaneseq
        %v1468 = vshrl.u32 %v1467, 7
        %v1469 = vsub.s32 7, %v1468
        %v1470 = vrot.slane %v399, %v1469
        %v1471 = vlaneseq
        %v1472 = vshrl.u32 %v1471, 7
        %v1473 = vsub.s32 7, %v1472
        %v1474 = vrot.slane %v401, %v1473
        %v1475 = vlaneseq
        %v1476 = vshrl.u32 %v1475, 7
        %v1477 = vsub.s32 7, %v1476
        %v1478 = vrot.slane %v403, %v1477
        %v1479 = vlaneseq
        %v1480 = vshrl.u32 %v1479, 7
        %v1481 = vsub.s32 7, %v1480
        %v1482 = vrot.slane %v405, %v1481
        %v1483 = vlaneseq
        %v1484 = vshrl.u32 %v1483, 7
        %v1485 = vsub.s32 7, %v1484
        %v1486 = vrot.slane %v407, %v1485
        %v1487 = vlaneseq
        %v1488 = vshrl.u32 %v1487, 7
        %v1489 = vsub.s32 7, %v1488
        %v1490 = vrot.slane %v409, %v1489
        %v1491 = vlaneseq
        %v1492 = vshrl.u32 %v1491, 7
        %v1493 = vsub.s32 7, %v1492
        %v1494 = vrot.slane %v411, %v1493
        %v1495 = vlaneseq
        %v1496 = vshrl.u32 %v1495, 7
        %v1497 = vsub.s32 7, %v1496
        %v1498 = vrot.slane %v413, %v1497
        %v1499 = vlaneseq
        %v1500 = vshrl.u32 %v1499, 7
        %v1501 = vsub.s32 7, %v1500
        %v1502 = vrot.slane %v415, %v1501
        %v1503 = vlaneseq
        %v1504 = vshrl.u32 %v1503, 7
        %v1505 = vsub.s32 7, %v1504
        %v1506 = vrot.slane %v417, %v1505
        %v1507 = vlaneseq
        %v1508 = vshrl.u32 %v1507, 7
        %v1509 = vsub.s32 7, %v1508
        %v1510 = vrot.slane %v419, %v1509
        %v1511 = vlaneseq
        %v1512 = vshrl.u32 %v1511, 7
        %v1513 = vsub.s32 7, %v1512
        %v1514 = vrot.slane %v421, %v1513
        %v1515 = vlaneseq
        %v1516 = vshrl.u32 %v1515, 7
        %v1517 = vsub.s32 7, %v1516
        %v1518 = vrot.slane %v423, %v1517
        %1520 = vset.pattern.permute.xlu0 0
        %1521 = vperm.xlu0 %1520, %v503
        %v1522 = vpop.permute.xlu0 %1521
        %1525 = vset.pattern.permute.xlu0 0
        %1526 = vperm.xlu0 %1525, %v504
        %v1527 = vpop.permute.xlu0 %1526
        %v1529 = vmul.f32 %v1458, %v1522
        %v1530 = vmul.f32 %v1458, %v1527
        %v1531 = vmul.f32 %v1462, %v1522
        %v1532 = vmul.f32 %v1462, %v1527
        %v1533 = vmul.f32 %v1466, %v1522
        %v1534 = vmul.f32 %v1466, %v1527
        %v1535 = vmul.f32 %v1470, %v1522
        %v1536 = vmul.f32 %v1470, %v1527
        %v1537 = vmul.f32 %v1474, %v1522
        %v1538 = vmul.f32 %v1474, %v1527
        %v1539 = vmul.f32 %v1478, %v1522
        %v1540 = vmul.f32 %v1478, %v1527
        %v1541 = vmul.f32 %v1482, %v1522
        %v1542 = vmul.f32 %v1482, %v1527
        %v1543 = vmul.f32 %v1486, %v1522
        %v1544 = vmul.f32 %v1486, %v1527
        %v1545 = vmul.f32 %v1490, %v1522
        %v1546 = vmul.f32 %v1490, %v1527
        %v1547 = vmul.f32 %v1494, %v1522
        %v1548 = vmul.f32 %v1494, %v1527
        %v1549 = vmul.f32 %v1498, %v1522
        %v1550 = vmul.f32 %v1498, %v1527
        %v1551 = vmul.f32 %v1502, %v1522
        %v1552 = vmul.f32 %v1502, %v1527
        %v1553 = vmul.f32 %v1506, %v1522
        %v1554 = vmul.f32 %v1506, %v1527
        %v1555 = vmul.f32 %v1510, %v1522
        %v1556 = vmul.f32 %v1510, %v1527
        %v1557 = vmul.f32 %v1514, %v1522
        %v1558 = vmul.f32 %v1514, %v1527
        %v1559 = vmul.f32 %v1518, %v1522
        %v1560 = vmul.f32 %v1518, %v1527
        %v1561 = vadd.f32 %v1423, %v1529
        %v1562 = vadd.f32 %v1424, %v1530
        %v1563 = vadd.f32 %v1425, %v1531
        %v1564 = vadd.f32 %v1426, %v1532
        %v1565 = vadd.f32 %v1427, %v1533
        %v1566 = vadd.f32 %v1428, %v1534
        %v1567 = vadd.f32 %v1429, %v1535
        %v1568 = vadd.f32 %v1430, %v1536
        %v1569 = vadd.f32 %v1431, %v1537
        %v1570 = vadd.f32 %v1432, %v1538
        %v1571 = vadd.f32 %v1433, %v1539
        %v1572 = vadd.f32 %v1434, %v1540
        %v1573 = vadd.f32 %v1435, %v1541
        %v1574 = vadd.f32 %v1436, %v1542
        %v1575 = vadd.f32 %v1437, %v1543
        %v1576 = vadd.f32 %v1438, %v1544
        %v1577 = vadd.f32 %v1439, %v1545
        %v1578 = vadd.f32 %v1440, %v1546
        %v1579 = vadd.f32 %v1441, %v1547
        %v1580 = vadd.f32 %v1442, %v1548
        %v1581 = vadd.f32 %v1443, %v1549
        %v1582 = vadd.f32 %v1444, %v1550
        %v1583 = vadd.f32 %v1445, %v1551
        %v1584 = vadd.f32 %v1446, %v1552
        %v1585 = vadd.f32 %v1447, %v1553
        %v1586 = vadd.f32 %v1448, %v1554
        %v1587 = vadd.f32 %v1449, %v1555
        %v1588 = vadd.f32 %v1450, %v1556
        %v1589 = vadd.f32 %v1451, %v1557
        %v1590 = vadd.f32 %v1452, %v1558
        %v1591 = vadd.f32 %v1453, %v1559
        %v1592 = vadd.f32 %v1454, %v1560
        %v1593 = vlaneseq
        %v1594 = vshrl.u32 %v1593, 7
        %v1595 = vsub.s32 0, %v1594
        %v1596 = vrot.slane %v394, %v1595
        %v1597 = vlaneseq
        %v1598 = vshrl.u32 %v1597, 7
        %v1599 = vsub.s32 0, %v1598
        %v1600 = vrot.slane %v396, %v1599
        %v1601 = vlaneseq
        %v1602 = vshrl.u32 %v1601, 7
        %v1603 = vsub.s32 0, %v1602
        %v1604 = vrot.slane %v398, %v1603
        %v1605 = vlaneseq
        %v1606 = vshrl.u32 %v1605, 7
        %v1607 = vsub.s32 0, %v1606
        %v1608 = vrot.slane %v400, %v1607
        %v1609 = vlaneseq
        %v1610 = vshrl.u32 %v1609, 7
        %v1611 = vsub.s32 0, %v1610
        %v1612 = vrot.slane %v402, %v1611
        %v1613 = vlaneseq
        %v1614 = vshrl.u32 %v1613, 7
        %v1615 = vsub.s32 0, %v1614
        %v1616 = vrot.slane %v404, %v1615
        %v1617 = vlaneseq
        %v1618 = vshrl.u32 %v1617, 7
        %v1619 = vsub.s32 0, %v1618
        %v1620 = vrot.slane %v406, %v1619
        %v1621 = vlaneseq
        %v1622 = vshrl.u32 %v1621, 7
        %v1623 = vsub.s32 0, %v1622
        %v1624 = vrot.slane %v408, %v1623
        %v1625 = vlaneseq
        %v1626 = vshrl.u32 %v1625, 7
        %v1627 = vsub.s32 0, %v1626
        %v1628 = vrot.slane %v410, %v1627
        %v1629 = vlaneseq
        %v1630 = vshrl.u32 %v1629, 7
        %v1631 = vsub.s32 0, %v1630
        %v1632 = vrot.slane %v412, %v1631
        %v1633 = vlaneseq
        %v1634 = vshrl.u32 %v1633, 7
        %v1635 = vsub.s32 0, %v1634
        %v1636 = vrot.slane %v414, %v1635
        %v1637 = vlaneseq
        %v1638 = vshrl.u32 %v1637, 7
        %v1639 = vsub.s32 0, %v1638
        %v1640 = vrot.slane %v416, %v1639
        %v1641 = vlaneseq
        %v1642 = vshrl.u32 %v1641, 7
        %v1643 = vsub.s32 0, %v1642
        %v1644 = vrot.slane %v418, %v1643
        %v1645 = vlaneseq
        %v1646 = vshrl.u32 %v1645, 7
        %v1647 = vsub.s32 0, %v1646
        %v1648 = vrot.slane %v420, %v1647
        %v1649 = vlaneseq
        %v1650 = vshrl.u32 %v1649, 7
        %v1651 = vsub.s32 0, %v1650
        %v1652 = vrot.slane %v422, %v1651
        %v1653 = vlaneseq
        %v1654 = vshrl.u32 %v1653, 7
        %v1655 = vsub.s32 0, %v1654
        %v1656 = vrot.slane %v424, %v1655
        %1658 = vset.pattern.permute.xlu0 0
        %1659 = vperm.xlu0 %1658, %v505
        %v1660 = vpop.permute.xlu0 %1659
        %1663 = vset.pattern.permute.xlu0 0
        %1664 = vperm.xlu0 %1663, %v506
        %v1665 = vpop.permute.xlu0 %1664
        %v1667 = vmul.f32 %v1596, %v1660
        %v1668 = vmul.f32 %v1596, %v1665
        %v1669 = vmul.f32 %v1600, %v1660
        %v1670 = vmul.f32 %v1600, %v1665
        %v1671 = vmul.f32 %v1604, %v1660
        %v1672 = vmul.f32 %v1604, %v1665
        %v1673 = vmul.f32 %v1608, %v1660
        %v1674 = vmul.f32 %v1608, %v1665
        %v1675 = vmul.f32 %v1612, %v1660
        %v1676 = vmul.f32 %v1612, %v1665
        %v1677 = vmul.f32 %v1616, %v1660
        %v1678 = vmul.f32 %v1616, %v1665
        %v1679 = vmul.f32 %v1620, %v1660
        %v1680 = vmul.f32 %v1620, %v1665
        %v1681 = vmul.f32 %v1624, %v1660
        %v1682 = vmul.f32 %v1624, %v1665
        %v1683 = vmul.f32 %v1628, %v1660
        %v1684 = vmul.f32 %v1628, %v1665
        %v1685 = vmul.f32 %v1632, %v1660
        %v1686 = vmul.f32 %v1632, %v1665
        %v1687 = vmul.f32 %v1636, %v1660
        %v1688 = vmul.f32 %v1636, %v1665
        %v1689 = vmul.f32 %v1640, %v1660
        %v1690 = vmul.f32 %v1640, %v1665
        %v1691 = vmul.f32 %v1644, %v1660
        %v1692 = vmul.f32 %v1644, %v1665
        %v1693 = vmul.f32 %v1648, %v1660
        %v1694 = vmul.f32 %v1648, %v1665
        %v1695 = vmul.f32 %v1652, %v1660
        %v1696 = vmul.f32 %v1652, %v1665
        %v1697 = vmul.f32 %v1656, %v1660
        %v1698 = vmul.f32 %v1656, %v1665
        %v1699 = vadd.f32 %v1561, %v1667
        %v1700 = vadd.f32 %v1562, %v1668
        %v1701 = vadd.f32 %v1563, %v1669
        %v1702 = vadd.f32 %v1564, %v1670
        %v1703 = vadd.f32 %v1565, %v1671
        %v1704 = vadd.f32 %v1566, %v1672
        %v1705 = vadd.f32 %v1567, %v1673
        %v1706 = vadd.f32 %v1568, %v1674
        %v1707 = vadd.f32 %v1569, %v1675
        %v1708 = vadd.f32 %v1570, %v1676
        %v1709 = vadd.f32 %v1571, %v1677
        %v1710 = vadd.f32 %v1572, %v1678
        %v1711 = vadd.f32 %v1573, %v1679
        %v1712 = vadd.f32 %v1574, %v1680
        %v1713 = vadd.f32 %v1575, %v1681
        %v1714 = vadd.f32 %v1576, %v1682
        %v1715 = vadd.f32 %v1577, %v1683
        %v1716 = vadd.f32 %v1578, %v1684
        %v1717 = vadd.f32 %v1579, %v1685
        %v1718 = vadd.f32 %v1580, %v1686
        %v1719 = vadd.f32 %v1581, %v1687
        %v1720 = vadd.f32 %v1582, %v1688
        %v1721 = vadd.f32 %v1583, %v1689
        %v1722 = vadd.f32 %v1584, %v1690
        %v1723 = vadd.f32 %v1585, %v1691
        %v1724 = vadd.f32 %v1586, %v1692
        %v1725 = vadd.f32 %v1587, %v1693
        %v1726 = vadd.f32 %v1588, %v1694
        %v1727 = vadd.f32 %v1589, %v1695
        %v1728 = vadd.f32 %v1590, %v1696
        %v1729 = vadd.f32 %v1591, %v1697
        %v1730 = vadd.f32 %v1592, %v1698
        %v1731 = vlaneseq
        %v1732 = vshrl.u32 %v1731, 7
        %v1733 = vsub.s32 1, %v1732
        %v1734 = vrot.slane %v394, %v1733
        %v1735 = vlaneseq
        %v1736 = vshrl.u32 %v1735, 7
        %v1737 = vsub.s32 1, %v1736
        %v1738 = vrot.slane %v396, %v1737
        %v1739 = vlaneseq
        %v1740 = vshrl.u32 %v1739, 7
        %v1741 = vsub.s32 1, %v1740
        %v1742 = vrot.slane %v398, %v1741
        %v1743 = vlaneseq
        %v1744 = vshrl.u32 %v1743, 7
        %v1745 = vsub.s32 1, %v1744
        %v1746 = vrot.slane %v400, %v1745
        %v1747 = vlaneseq
        %v1748 = vshrl.u32 %v1747, 7
        %v1749 = vsub.s32 1, %v1748
        %v1750 = vrot.slane %v402, %v1749
        %v1751 = vlaneseq
        %v1752 = vshrl.u32 %v1751, 7
        %v1753 = vsub.s32 1, %v1752
        %v1754 = vrot.slane %v404, %v1753
        %v1755 = vlaneseq
        %v1756 = vshrl.u32 %v1755, 7
        %v1757 = vsub.s32 1, %v1756
        %v1758 = vrot.slane %v406, %v1757
        %v1759 = vlaneseq
        %v1760 = vshrl.u32 %v1759, 7
        %v1761 = vsub.s32 1, %v1760
        %v1762 = vrot.slane %v408, %v1761
        %v1763 = vlaneseq
        %v1764 = vshrl.u32 %v1763, 7
        %v1765 = vsub.s32 1, %v1764
        %v1766 = vrot.slane %v410, %v1765
        %v1767 = vlaneseq
        %v1768 = vshrl.u32 %v1767, 7
        %v1769 = vsub.s32 1, %v1768
        %v1770 = vrot.slane %v412, %v1769
        %v1771 = vlaneseq
        %v1772 = vshrl.u32 %v1771, 7
        %v1773 = vsub.s32 1, %v1772
        %v1774 = vrot.slane %v414, %v1773
        %v1775 = vlaneseq
        %v1776 = vshrl.u32 %v1775, 7
        %v1777 = vsub.s32 1, %v1776
        %v1778 = vrot.slane %v416, %v1777
        %v1779 = vlaneseq
        %v1780 = vshrl.u32 %v1779, 7
        %v1781 = vsub.s32 1, %v1780
        %v1782 = vrot.slane %v418, %v1781
        %v1783 = vlaneseq
        %v1784 = vshrl.u32 %v1783, 7
        %v1785 = vsub.s32 1, %v1784
        %v1786 = vrot.slane %v420, %v1785
        %v1787 = vlaneseq
        %v1788 = vshrl.u32 %v1787, 7
        %v1789 = vsub.s32 1, %v1788
        %v1790 = vrot.slane %v422, %v1789
        %v1791 = vlaneseq
        %v1792 = vshrl.u32 %v1791, 7
        %v1793 = vsub.s32 1, %v1792
        %v1794 = vrot.slane %v424, %v1793
        %1796 = vset.pattern.permute.xlu0 0
        %1797 = vperm.xlu0 %1796, %v507
        %v1798 = vpop.permute.xlu0 %1797
        %1801 = vset.pattern.permute.xlu0 0
        %1802 = vperm.xlu0 %1801, %v508
        %v1803 = vpop.permute.xlu0 %1802
        %v1805 = vmul.f32 %v1734, %v1798
        %v1806 = vmul.f32 %v1734, %v1803
        %v1807 = vmul.f32 %v1738, %v1798
        %v1808 = vmul.f32 %v1738, %v1803
        %v1809 = vmul.f32 %v1742, %v1798
        %v1810 = vmul.f32 %v1742, %v1803
        %v1811 = vmul.f32 %v1746, %v1798
        %v1812 = vmul.f32 %v1746, %v1803
        %v1813 = vmul.f32 %v1750, %v1798
        %v1814 = vmul.f32 %v1750, %v1803
        %v1815 = vmul.f32 %v1754, %v1798
        %v1816 = vmul.f32 %v1754, %v1803
        %v1817 = vmul.f32 %v1758, %v1798
        %v1818 = vmul.f32 %v1758, %v1803
        %v1819 = vmul.f32 %v1762, %v1798
        %v1820 = vmul.f32 %v1762, %v1803
        %v1821 = vmul.f32 %v1766, %v1798
        %v1822 = vmul.f32 %v1766, %v1803
        %v1823 = vmul.f32 %v1770, %v1798
        %v1824 = vmul.f32 %v1770, %v1803
        %v1825 = vmul.f32 %v1774, %v1798
        %v1826 = vmul.f32 %v1774, %v1803
        %v1827 = vmul.f32 %v1778, %v1798
        %v1828 = vmul.f32 %v1778, %v1803
        %v1829 = vmul.f32 %v1782, %v1798
        %v1830 = vmul.f32 %v1782, %v1803
        %v1831 = vmul.f32 %v1786, %v1798
        %v1832 = vmul.f32 %v1786, %v1803
        %v1833 = vmul.f32 %v1790, %v1798
        %v1834 = vmul.f32 %v1790, %v1803
        %v1835 = vmul.f32 %v1794, %v1798
        %v1836 = vmul.f32 %v1794, %v1803
        %v1837 = vadd.f32 %v1699, %v1805
        %v1838 = vadd.f32 %v1700, %v1806
        %v1839 = vadd.f32 %v1701, %v1807
        %v1840 = vadd.f32 %v1702, %v1808
        %v1841 = vadd.f32 %v1703, %v1809
        %v1842 = vadd.f32 %v1704, %v1810
        %v1843 = vadd.f32 %v1705, %v1811
        %v1844 = vadd.f32 %v1706, %v1812
        %v1845 = vadd.f32 %v1707, %v1813
        %v1846 = vadd.f32 %v1708, %v1814
        %v1847 = vadd.f32 %v1709, %v1815
        %v1848 = vadd.f32 %v1710, %v1816
        %v1849 = vadd.f32 %v1711, %v1817
        %v1850 = vadd.f32 %v1712, %v1818
        %v1851 = vadd.f32 %v1713, %v1819
        %v1852 = vadd.f32 %v1714, %v1820
        %v1853 = vadd.f32 %v1715, %v1821
        %v1854 = vadd.f32 %v1716, %v1822
        %v1855 = vadd.f32 %v1717, %v1823
        %v1856 = vadd.f32 %v1718, %v1824
        %v1857 = vadd.f32 %v1719, %v1825
        %v1858 = vadd.f32 %v1720, %v1826
        %v1859 = vadd.f32 %v1721, %v1827
        %v1860 = vadd.f32 %v1722, %v1828
        %v1861 = vadd.f32 %v1723, %v1829
        %v1862 = vadd.f32 %v1724, %v1830
        %v1863 = vadd.f32 %v1725, %v1831
        %v1864 = vadd.f32 %v1726, %v1832
        %v1865 = vadd.f32 %v1727, %v1833
        %v1866 = vadd.f32 %v1728, %v1834
        %v1867 = vadd.f32 %v1729, %v1835
        %v1868 = vadd.f32 %v1730, %v1836
        %v1869 = vlaneseq
        %v1870 = vshrl.u32 %v1869, 7
        %v1871 = vsub.s32 2, %v1870
        %v1872 = vrot.slane %v394, %v1871
        %v1873 = vlaneseq
        %v1874 = vshrl.u32 %v1873, 7
        %v1875 = vsub.s32 2, %v1874
        %v1876 = vrot.slane %v396, %v1875
        %v1877 = vlaneseq
        %v1878 = vshrl.u32 %v1877, 7
        %v1879 = vsub.s32 2, %v1878
        %v1880 = vrot.slane %v398, %v1879
        %v1881 = vlaneseq
        %v1882 = vshrl.u32 %v1881, 7
        %v1883 = vsub.s32 2, %v1882
        %v1884 = vrot.slane %v400, %v1883
        %v1885 = vlaneseq
        %v1886 = vshrl.u32 %v1885, 7
        %v1887 = vsub.s32 2, %v1886
        %v1888 = vrot.slane %v402, %v1887
        %v1889 = vlaneseq
        %v1890 = vshrl.u32 %v1889, 7
        %v1891 = vsub.s32 2, %v1890
        %v1892 = vrot.slane %v404, %v1891
        %v1893 = vlaneseq
        %v1894 = vshrl.u32 %v1893, 7
        %v1895 = vsub.s32 2, %v1894
        %v1896 = vrot.slane %v406, %v1895
        %v1897 = vlaneseq
        %v1898 = vshrl.u32 %v1897, 7
        %v1899 = vsub.s32 2, %v1898
        %v1900 = vrot.slane %v408, %v1899
        %v1901 = vlaneseq
        %v1902 = vshrl.u32 %v1901, 7
        %v1903 = vsub.s32 2, %v1902
        %v1904 = vrot.slane %v410, %v1903
        %v1905 = vlaneseq
        %v1906 = vshrl.u32 %v1905, 7
        %v1907 = vsub.s32 2, %v1906
        %v1908 = vrot.slane %v412, %v1907
        %v1909 = vlaneseq
        %v1910 = vshrl.u32 %v1909, 7
        %v1911 = vsub.s32 2, %v1910
        %v1912 = vrot.slane %v414, %v1911
        %v1913 = vlaneseq
        %v1914 = vshrl.u32 %v1913, 7
        %v1915 = vsub.s32 2, %v1914
        %v1916 = vrot.slane %v416, %v1915
        %v1917 = vlaneseq
        %v1918 = vshrl.u32 %v1917, 7
        %v1919 = vsub.s32 2, %v1918
        %v1920 = vrot.slane %v418, %v1919
        %v1921 = vlaneseq
        %v1922 = vshrl.u32 %v1921, 7
        %v1923 = vsub.s32 2, %v1922
        %v1924 = vrot.slane %v420, %v1923
        %v1925 = vlaneseq
        %v1926 = vshrl.u32 %v1925, 7
        %v1927 = vsub.s32 2, %v1926
        %v1928 = vrot.slane %v422, %v1927
        %v1929 = vlaneseq
        %v1930 = vshrl.u32 %v1929, 7
        %v1931 = vsub.s32 2, %v1930
        %v1932 = vrot.slane %v424, %v1931
        %1934 = vset.pattern.permute.xlu0 0
        %1935 = vperm.xlu0 %1934, %v509
        %v1936 = vpop.permute.xlu0 %1935
        %1939 = vset.pattern.permute.xlu0 0
        %1940 = vperm.xlu0 %1939, %v510
        %v1941 = vpop.permute.xlu0 %1940
        %v1943 = vmul.f32 %v1872, %v1936
        %v1944 = vmul.f32 %v1872, %v1941
        %v1945 = vmul.f32 %v1876, %v1936
        %v1946 = vmul.f32 %v1876, %v1941
        %v1947 = vmul.f32 %v1880, %v1936
        %v1948 = vmul.f32 %v1880, %v1941
        %v1949 = vmul.f32 %v1884, %v1936
        %v1950 = vmul.f32 %v1884, %v1941
        %v1951 = vmul.f32 %v1888, %v1936
        %v1952 = vmul.f32 %v1888, %v1941
        %v1953 = vmul.f32 %v1892, %v1936
        %v1954 = vmul.f32 %v1892, %v1941
        %v1955 = vmul.f32 %v1896, %v1936
        %v1956 = vmul.f32 %v1896, %v1941
        %v1957 = vmul.f32 %v1900, %v1936
        %v1958 = vmul.f32 %v1900, %v1941
        %v1959 = vmul.f32 %v1904, %v1936
        %v1960 = vmul.f32 %v1904, %v1941
        %v1961 = vmul.f32 %v1908, %v1936
        %v1962 = vmul.f32 %v1908, %v1941
        %v1963 = vmul.f32 %v1912, %v1936
        %v1964 = vmul.f32 %v1912, %v1941
        %v1965 = vmul.f32 %v1916, %v1936
        %v1966 = vmul.f32 %v1916, %v1941
        %v1967 = vmul.f32 %v1920, %v1936
        %v1968 = vmul.f32 %v1920, %v1941
        %v1969 = vmul.f32 %v1924, %v1936
        %v1970 = vmul.f32 %v1924, %v1941
        %v1971 = vmul.f32 %v1928, %v1936
        %v1972 = vmul.f32 %v1928, %v1941
        %v1973 = vmul.f32 %v1932, %v1936
        %v1974 = vmul.f32 %v1932, %v1941
        %v1975 = vadd.f32 %v1837, %v1943
        %v1976 = vadd.f32 %v1838, %v1944
        %v1977 = vadd.f32 %v1839, %v1945
        %v1978 = vadd.f32 %v1840, %v1946
        %v1979 = vadd.f32 %v1841, %v1947
        %v1980 = vadd.f32 %v1842, %v1948
        %v1981 = vadd.f32 %v1843, %v1949
        %v1982 = vadd.f32 %v1844, %v1950
        %v1983 = vadd.f32 %v1845, %v1951
        %v1984 = vadd.f32 %v1846, %v1952
        %v1985 = vadd.f32 %v1847, %v1953
        %v1986 = vadd.f32 %v1848, %v1954
        %v1987 = vadd.f32 %v1849, %v1955
        %v1988 = vadd.f32 %v1850, %v1956
        %v1989 = vadd.f32 %v1851, %v1957
        %v1990 = vadd.f32 %v1852, %v1958
        %v1991 = vadd.f32 %v1853, %v1959
        %v1992 = vadd.f32 %v1854, %v1960
        %v1993 = vadd.f32 %v1855, %v1961
        %v1994 = vadd.f32 %v1856, %v1962
        %v1995 = vadd.f32 %v1857, %v1963
        %v1996 = vadd.f32 %v1858, %v1964
        %v1997 = vadd.f32 %v1859, %v1965
        %v1998 = vadd.f32 %v1860, %v1966
        %v1999 = vadd.f32 %v1861, %v1967
        %v2000 = vadd.f32 %v1862, %v1968
        %v2001 = vadd.f32 %v1863, %v1969
        %v2002 = vadd.f32 %v1864, %v1970
        %v2003 = vadd.f32 %v1865, %v1971
        %v2004 = vadd.f32 %v1866, %v1972
        %v2005 = vadd.f32 %v1867, %v1973
        %v2006 = vadd.f32 %v1868, %v1974
        %v2007 = vlaneseq
        %v2008 = vshrl.u32 %v2007, 7
        %v2009 = vsub.s32 3, %v2008
        %v2010 = vrot.slane %v394, %v2009
        %v2011 = vlaneseq
        %v2012 = vshrl.u32 %v2011, 7
        %v2013 = vsub.s32 3, %v2012
        %v2014 = vrot.slane %v396, %v2013
        %v2015 = vlaneseq
        %v2016 = vshrl.u32 %v2015, 7
        %v2017 = vsub.s32 3, %v2016
        %v2018 = vrot.slane %v398, %v2017
        %v2019 = vlaneseq
        %v2020 = vshrl.u32 %v2019, 7
        %v2021 = vsub.s32 3, %v2020
        %v2022 = vrot.slane %v400, %v2021
        %v2023 = vlaneseq
        %v2024 = vshrl.u32 %v2023, 7
        %v2025 = vsub.s32 3, %v2024
        %v2026 = vrot.slane %v402, %v2025
        %v2027 = vlaneseq
        %v2028 = vshrl.u32 %v2027, 7
        %v2029 = vsub.s32 3, %v2028
        %v2030 = vrot.slane %v404, %v2029
        %v2031 = vlaneseq
        %v2032 = vshrl.u32 %v2031, 7
        %v2033 = vsub.s32 3, %v2032
        %v2034 = vrot.slane %v406, %v2033
        %v2035 = vlaneseq
        %v2036 = vshrl.u32 %v2035, 7
        %v2037 = vsub.s32 3, %v2036
        %v2038 = vrot.slane %v408, %v2037
        %v2039 = vlaneseq
        %v2040 = vshrl.u32 %v2039, 7
        %v2041 = vsub.s32 3, %v2040
        %v2042 = vrot.slane %v410, %v2041
        %v2043 = vlaneseq
        %v2044 = vshrl.u32 %v2043, 7
        %v2045 = vsub.s32 3, %v2044
        %v2046 = vrot.slane %v412, %v2045
        %v2047 = vlaneseq
        %v2048 = vshrl.u32 %v2047, 7
        %v2049 = vsub.s32 3, %v2048
        %v2050 = vrot.slane %v414, %v2049
        %v2051 = vlaneseq
        %v2052 = vshrl.u32 %v2051, 7
        %v2053 = vsub.s32 3, %v2052
        %v2054 = vrot.slane %v416, %v2053
        %v2055 = vlaneseq
        %v2056 = vshrl.u32 %v2055, 7
        %v2057 = vsub.s32 3, %v2056
        %v2058 = vrot.slane %v418, %v2057
        %v2059 = vlaneseq
        %v2060 = vshrl.u32 %v2059, 7
        %v2061 = vsub.s32 3, %v2060
        %v2062 = vrot.slane %v420, %v2061
        %v2063 = vlaneseq
        %v2064 = vshrl.u32 %v2063, 7
        %v2065 = vsub.s32 3, %v2064
        %v2066 = vrot.slane %v422, %v2065
        %v2067 = vlaneseq
        %v2068 = vshrl.u32 %v2067, 7
        %v2069 = vsub.s32 3, %v2068
        %v2070 = vrot.slane %v424, %v2069
        %2072 = vset.pattern.permute.xlu0 0
        %2073 = vperm.xlu0 %2072, %v511
        %v2074 = vpop.permute.xlu0 %2073
        %2077 = vset.pattern.permute.xlu0 0
        %2078 = vperm.xlu0 %2077, %v512
        %v2079 = vpop.permute.xlu0 %2078
        %v2081 = vmul.f32 %v2010, %v2074
        %v2082 = vmul.f32 %v2010, %v2079
        %v2083 = vmul.f32 %v2014, %v2074
        %v2084 = vmul.f32 %v2014, %v2079
        %v2085 = vmul.f32 %v2018, %v2074
        %v2086 = vmul.f32 %v2018, %v2079
        %v2087 = vmul.f32 %v2022, %v2074
        %v2088 = vmul.f32 %v2022, %v2079
        %v2089 = vmul.f32 %v2026, %v2074
        %v2090 = vmul.f32 %v2026, %v2079
        %v2091 = vmul.f32 %v2030, %v2074
        %v2092 = vmul.f32 %v2030, %v2079
        %v2093 = vmul.f32 %v2034, %v2074
        %v2094 = vmul.f32 %v2034, %v2079
        %v2095 = vmul.f32 %v2038, %v2074
        %v2096 = vmul.f32 %v2038, %v2079
        %v2097 = vmul.f32 %v2042, %v2074
        %v2098 = vmul.f32 %v2042, %v2079
        %v2099 = vmul.f32 %v2046, %v2074
        %v2100 = vmul.f32 %v2046, %v2079
        %v2101 = vmul.f32 %v2050, %v2074
        %v2102 = vmul.f32 %v2050, %v2079
        %v2103 = vmul.f32 %v2054, %v2074
        %v2104 = vmul.f32 %v2054, %v2079
        %v2105 = vmul.f32 %v2058, %v2074
        %v2106 = vmul.f32 %v2058, %v2079
        %v2107 = vmul.f32 %v2062, %v2074
        %v2108 = vmul.f32 %v2062, %v2079
        %v2109 = vmul.f32 %v2066, %v2074
        %v2110 = vmul.f32 %v2066, %v2079
        %v2111 = vmul.f32 %v2070, %v2074
        %v2112 = vmul.f32 %v2070, %v2079
        %v2113 = vadd.f32 %v1975, %v2081
        %v2114 = vadd.f32 %v1976, %v2082
        %v2115 = vadd.f32 %v1977, %v2083
        %v2116 = vadd.f32 %v1978, %v2084
        %v2117 = vadd.f32 %v1979, %v2085
        %v2118 = vadd.f32 %v1980, %v2086
        %v2119 = vadd.f32 %v1981, %v2087
        %v2120 = vadd.f32 %v1982, %v2088
        %v2121 = vadd.f32 %v1983, %v2089
        %v2122 = vadd.f32 %v1984, %v2090
        %v2123 = vadd.f32 %v1985, %v2091
        %v2124 = vadd.f32 %v1986, %v2092
        %v2125 = vadd.f32 %v1987, %v2093
        %v2126 = vadd.f32 %v1988, %v2094
        %v2127 = vadd.f32 %v1989, %v2095
        %v2128 = vadd.f32 %v1990, %v2096
        %v2129 = vadd.f32 %v1991, %v2097
        %v2130 = vadd.f32 %v1992, %v2098
        %v2131 = vadd.f32 %v1993, %v2099
        %v2132 = vadd.f32 %v1994, %v2100
        %v2133 = vadd.f32 %v1995, %v2101
        %v2134 = vadd.f32 %v1996, %v2102
        %v2135 = vadd.f32 %v1997, %v2103
        %v2136 = vadd.f32 %v1998, %v2104
        %v2137 = vadd.f32 %v1999, %v2105
        %v2138 = vadd.f32 %v2000, %v2106
        %v2139 = vadd.f32 %v2001, %v2107
        %v2140 = vadd.f32 %v2002, %v2108
        %v2141 = vadd.f32 %v2003, %v2109
        %v2142 = vadd.f32 %v2004, %v2110
        %v2143 = vadd.f32 %v2005, %v2111
        %v2144 = vadd.f32 %v2006, %v2112
        %v2145 = vlaneseq
        %v2146 = vshrl.u32 %v2145, 7
        %v2147 = vsub.s32 4, %v2146
        %v2148 = vrot.slane %v394, %v2147
        %v2149 = vlaneseq
        %v2150 = vshrl.u32 %v2149, 7
        %v2151 = vsub.s32 4, %v2150
        %v2152 = vrot.slane %v396, %v2151
        %v2153 = vlaneseq
        %v2154 = vshrl.u32 %v2153, 7
        %v2155 = vsub.s32 4, %v2154
        %v2156 = vrot.slane %v398, %v2155
        %v2157 = vlaneseq
        %v2158 = vshrl.u32 %v2157, 7
        %v2159 = vsub.s32 4, %v2158
        %v2160 = vrot.slane %v400, %v2159
        %v2161 = vlaneseq
        %v2162 = vshrl.u32 %v2161, 7
        %v2163 = vsub.s32 4, %v2162
        %v2164 = vrot.slane %v402, %v2163
        %v2165 = vlaneseq
        %v2166 = vshrl.u32 %v2165, 7
        %v2167 = vsub.s32 4, %v2166
        %v2168 = vrot.slane %v404, %v2167
        %v2169 = vlaneseq
        %v2170 = vshrl.u32 %v2169, 7
        %v2171 = vsub.s32 4, %v2170
        %v2172 = vrot.slane %v406, %v2171
        %v2173 = vlaneseq
        %v2174 = vshrl.u32 %v2173, 7
        %v2175 = vsub.s32 4, %v2174
        %v2176 = vrot.slane %v408, %v2175
        %v2177 = vlaneseq
        %v2178 = vshrl.u32 %v2177, 7
        %v2179 = vsub.s32 4, %v2178
        %v2180 = vrot.slane %v410, %v2179
        %v2181 = vlaneseq
        %v2182 = vshrl.u32 %v2181, 7
        %v2183 = vsub.s32 4, %v2182
        %v2184 = vrot.slane %v412, %v2183
        %v2185 = vlaneseq
        %v2186 = vshrl.u32 %v2185, 7
        %v2187 = vsub.s32 4, %v2186
        %v2188 = vrot.slane %v414, %v2187
        %v2189 = vlaneseq
        %v2190 = vshrl.u32 %v2189, 7
        %v2191 = vsub.s32 4, %v2190
        %v2192 = vrot.slane %v416, %v2191
        %v2193 = vlaneseq
        %v2194 = vshrl.u32 %v2193, 7
        %v2195 = vsub.s32 4, %v2194
        %v2196 = vrot.slane %v418, %v2195
        %v2197 = vlaneseq
        %v2198 = vshrl.u32 %v2197, 7
        %v2199 = vsub.s32 4, %v2198
        %v2200 = vrot.slane %v420, %v2199
        %v2201 = vlaneseq
        %v2202 = vshrl.u32 %v2201, 7
        %v2203 = vsub.s32 4, %v2202
        %v2204 = vrot.slane %v422, %v2203
        %v2205 = vlaneseq
        %v2206 = vshrl.u32 %v2205, 7
        %v2207 = vsub.s32 4, %v2206
        %v2208 = vrot.slane %v424, %v2207
        %2210 = vset.pattern.permute.xlu0 0
        %2211 = vperm.xlu0 %2210, %v513
        %v2212 = vpop.permute.xlu0 %2211
        %2215 = vset.pattern.permute.xlu0 0
        %2216 = vperm.xlu0 %2215, %v514
        %v2217 = vpop.permute.xlu0 %2216
        %v2219 = vmul.f32 %v2148, %v2212
        %v2220 = vmul.f32 %v2148, %v2217
        %v2221 = vmul.f32 %v2152, %v2212
        %v2222 = vmul.f32 %v2152, %v2217
        %v2223 = vmul.f32 %v2156, %v2212
        %v2224 = vmul.f32 %v2156, %v2217
        %v2225 = vmul.f32 %v2160, %v2212
        %v2226 = vmul.f32 %v2160, %v2217
        %v2227 = vmul.f32 %v2164, %v2212
        %v2228 = vmul.f32 %v2164, %v2217
        %v2229 = vmul.f32 %v2168, %v2212
        %v2230 = vmul.f32 %v2168, %v2217
        %v2231 = vmul.f32 %v2172, %v2212
        %v2232 = vmul.f32 %v2172, %v2217
        %v2233 = vmul.f32 %v2176, %v2212
        %v2234 = vmul.f32 %v2176, %v2217
        %v2235 = vmul.f32 %v2180, %v2212
        %v2236 = vmul.f32 %v2180, %v2217
        %v2237 = vmul.f32 %v2184, %v2212
        %v2238 = vmul.f32 %v2184, %v2217
        %v2239 = vmul.f32 %v2188, %v2212
        %v2240 = vmul.f32 %v2188, %v2217
        %v2241 = vmul.f32 %v2192, %v2212
        %v2242 = vmul.f32 %v2192, %v2217
        %v2243 = vmul.f32 %v2196, %v2212
        %v2244 = vmul.f32 %v2196, %v2217
        %v2245 = vmul.f32 %v2200, %v2212
        %v2246 = vmul.f32 %v2200, %v2217
        %v2247 = vmul.f32 %v2204, %v2212
        %v2248 = vmul.f32 %v2204, %v2217
        %v2249 = vmul.f32 %v2208, %v2212
        %v2250 = vmul.f32 %v2208, %v2217
        %v2251 = vadd.f32 %v2113, %v2219
        %v2252 = vadd.f32 %v2114, %v2220
        %v2253 = vadd.f32 %v2115, %v2221
        %v2254 = vadd.f32 %v2116, %v2222
        %v2255 = vadd.f32 %v2117, %v2223
        %v2256 = vadd.f32 %v2118, %v2224
        %v2257 = vadd.f32 %v2119, %v2225
        %v2258 = vadd.f32 %v2120, %v2226
        %v2259 = vadd.f32 %v2121, %v2227
        %v2260 = vadd.f32 %v2122, %v2228
        %v2261 = vadd.f32 %v2123, %v2229
        %v2262 = vadd.f32 %v2124, %v2230
        %v2263 = vadd.f32 %v2125, %v2231
        %v2264 = vadd.f32 %v2126, %v2232
        %v2265 = vadd.f32 %v2127, %v2233
        %v2266 = vadd.f32 %v2128, %v2234
        %v2267 = vadd.f32 %v2129, %v2235
        %v2268 = vadd.f32 %v2130, %v2236
        %v2269 = vadd.f32 %v2131, %v2237
        %v2270 = vadd.f32 %v2132, %v2238
        %v2271 = vadd.f32 %v2133, %v2239
        %v2272 = vadd.f32 %v2134, %v2240
        %v2273 = vadd.f32 %v2135, %v2241
        %v2274 = vadd.f32 %v2136, %v2242
        %v2275 = vadd.f32 %v2137, %v2243
        %v2276 = vadd.f32 %v2138, %v2244
        %v2277 = vadd.f32 %v2139, %v2245
        %v2278 = vadd.f32 %v2140, %v2246
        %v2279 = vadd.f32 %v2141, %v2247
        %v2280 = vadd.f32 %v2142, %v2248
        %v2281 = vadd.f32 %v2143, %v2249
        %v2282 = vadd.f32 %v2144, %v2250
        %v2283 = vlaneseq
        %v2284 = vshrl.u32 %v2283, 7
        %v2285 = vsub.s32 5, %v2284
        %v2286 = vrot.slane %v394, %v2285
        %v2287 = vlaneseq
        %v2288 = vshrl.u32 %v2287, 7
        %v2289 = vsub.s32 5, %v2288
        %v2290 = vrot.slane %v396, %v2289
        %v2291 = vlaneseq
        %v2292 = vshrl.u32 %v2291, 7
        %v2293 = vsub.s32 5, %v2292
        %v2294 = vrot.slane %v398, %v2293
        %v2295 = vlaneseq
        %v2296 = vshrl.u32 %v2295, 7
        %v2297 = vsub.s32 5, %v2296
        %v2298 = vrot.slane %v400, %v2297
        %v2299 = vlaneseq
        %v2300 = vshrl.u32 %v2299, 7
        %v2301 = vsub.s32 5, %v2300
        %v2302 = vrot.slane %v402, %v2301
        %v2303 = vlaneseq
        %v2304 = vshrl.u32 %v2303, 7
        %v2305 = vsub.s32 5, %v2304
        %v2306 = vrot.slane %v404, %v2305
        %v2307 = vlaneseq
        %v2308 = vshrl.u32 %v2307, 7
        %v2309 = vsub.s32 5, %v2308
        %v2310 = vrot.slane %v406, %v2309
        %v2311 = vlaneseq
        %v2312 = vshrl.u32 %v2311, 7
        %v2313 = vsub.s32 5, %v2312
        %v2314 = vrot.slane %v408, %v2313
        %v2315 = vlaneseq
        %v2316 = vshrl.u32 %v2315, 7
        %v2317 = vsub.s32 5, %v2316
        %v2318 = vrot.slane %v410, %v2317
        %v2319 = vlaneseq
        %v2320 = vshrl.u32 %v2319, 7
        %v2321 = vsub.s32 5, %v2320
        %v2322 = vrot.slane %v412, %v2321
        %v2323 = vlaneseq
        %v2324 = vshrl.u32 %v2323, 7
        %v2325 = vsub.s32 5, %v2324
        %v2326 = vrot.slane %v414, %v2325
        %v2327 = vlaneseq
        %v2328 = vshrl.u32 %v2327, 7
        %v2329 = vsub.s32 5, %v2328
        %v2330 = vrot.slane %v416, %v2329
        %v2331 = vlaneseq
        %v2332 = vshrl.u32 %v2331, 7
        %v2333 = vsub.s32 5, %v2332
        %v2334 = vrot.slane %v418, %v2333
        %v2335 = vlaneseq
        %v2336 = vshrl.u32 %v2335, 7
        %v2337 = vsub.s32 5, %v2336
        %v2338 = vrot.slane %v420, %v2337
        %v2339 = vlaneseq
        %v2340 = vshrl.u32 %v2339, 7
        %v2341 = vsub.s32 5, %v2340
        %v2342 = vrot.slane %v422, %v2341
        %v2343 = vlaneseq
        %v2344 = vshrl.u32 %v2343, 7
        %v2345 = vsub.s32 5, %v2344
        %v2346 = vrot.slane %v424, %v2345
        %2348 = vset.pattern.permute.xlu0 0
        %2349 = vperm.xlu0 %2348, %v515
        %v2350 = vpop.permute.xlu0 %2349
        %2353 = vset.pattern.permute.xlu0 0
        %2354 = vperm.xlu0 %2353, %v516
        %v2355 = vpop.permute.xlu0 %2354
        %v2357 = vmul.f32 %v2286, %v2350
        %v2358 = vmul.f32 %v2286, %v2355
        %v2359 = vmul.f32 %v2290, %v2350
        %v2360 = vmul.f32 %v2290, %v2355
        %v2361 = vmul.f32 %v2294, %v2350
        %v2362 = vmul.f32 %v2294, %v2355
        %v2363 = vmul.f32 %v2298, %v2350
        %v2364 = vmul.f32 %v2298, %v2355
        %v2365 = vmul.f32 %v2302, %v2350
        %v2366 = vmul.f32 %v2302, %v2355
        %v2367 = vmul.f32 %v2306, %v2350
        %v2368 = vmul.f32 %v2306, %v2355
        %v2369 = vmul.f32 %v2310, %v2350
        %v2370 = vmul.f32 %v2310, %v2355
        %v2371 = vmul.f32 %v2314, %v2350
        %v2372 = vmul.f32 %v2314, %v2355
        %v2373 = vmul.f32 %v2318, %v2350
        %v2374 = vmul.f32 %v2318, %v2355
        %v2375 = vmul.f32 %v2322, %v2350
        %v2376 = vmul.f32 %v2322, %v2355
        %v2377 = vmul.f32 %v2326, %v2350
        %v2378 = vmul.f32 %v2326, %v2355
        %v2379 = vmul.f32 %v2330, %v2350
        %v2380 = vmul.f32 %v2330, %v2355
        %v2381 = vmul.f32 %v2334, %v2350
        %v2382 = vmul.f32 %v2334, %v2355
        %v2383 = vmul.f32 %v2338, %v2350
        %v2384 = vmul.f32 %v2338, %v2355
        %v2385 = vmul.f32 %v2342, %v2350
        %v2386 = vmul.f32 %v2342, %v2355
        %v2387 = vmul.f32 %v2346, %v2350
        %v2388 = vmul.f32 %v2346, %v2355
        %v2389 = vadd.f32 %v2251, %v2357
        %v2390 = vadd.f32 %v2252, %v2358
        %v2391 = vadd.f32 %v2253, %v2359
        %v2392 = vadd.f32 %v2254, %v2360
        %v2393 = vadd.f32 %v2255, %v2361
        %v2394 = vadd.f32 %v2256, %v2362
        %v2395 = vadd.f32 %v2257, %v2363
        %v2396 = vadd.f32 %v2258, %v2364
        %v2397 = vadd.f32 %v2259, %v2365
        %v2398 = vadd.f32 %v2260, %v2366
        %v2399 = vadd.f32 %v2261, %v2367
        %v2400 = vadd.f32 %v2262, %v2368
        %v2401 = vadd.f32 %v2263, %v2369
        %v2402 = vadd.f32 %v2264, %v2370
        %v2403 = vadd.f32 %v2265, %v2371
        %v2404 = vadd.f32 %v2266, %v2372
        %v2405 = vadd.f32 %v2267, %v2373
        %v2406 = vadd.f32 %v2268, %v2374
        %v2407 = vadd.f32 %v2269, %v2375
        %v2408 = vadd.f32 %v2270, %v2376
        %v2409 = vadd.f32 %v2271, %v2377
        %v2410 = vadd.f32 %v2272, %v2378
        %v2411 = vadd.f32 %v2273, %v2379
        %v2412 = vadd.f32 %v2274, %v2380
        %v2413 = vadd.f32 %v2275, %v2381
        %v2414 = vadd.f32 %v2276, %v2382
        %v2415 = vadd.f32 %v2277, %v2383
        %v2416 = vadd.f32 %v2278, %v2384
        %v2417 = vadd.f32 %v2279, %v2385
        %v2418 = vadd.f32 %v2280, %v2386
        %v2419 = vadd.f32 %v2281, %v2387
        %v2420 = vadd.f32 %v2282, %v2388
        %v2421 = vlaneseq
        %v2422 = vshrl.u32 %v2421, 7
        %v2423 = vsub.s32 6, %v2422
        %v2424 = vrot.slane %v394, %v2423
        %v2425 = vlaneseq
        %v2426 = vshrl.u32 %v2425, 7
        %v2427 = vsub.s32 6, %v2426
        %v2428 = vrot.slane %v396, %v2427
        %v2429 = vlaneseq
        %v2430 = vshrl.u32 %v2429, 7
        %v2431 = vsub.s32 6, %v2430
        %v2432 = vrot.slane %v398, %v2431
        %v2433 = vlaneseq
        %v2434 = vshrl.u32 %v2433, 7
        %v2435 = vsub.s32 6, %v2434
        %v2436 = vrot.slane %v400, %v2435
        %v2437 = vlaneseq
        %v2438 = vshrl.u32 %v2437, 7
        %v2439 = vsub.s32 6, %v2438
        %v2440 = vrot.slane %v402, %v2439
        %v2441 = vlaneseq
        %v2442 = vshrl.u32 %v2441, 7
        %v2443 = vsub.s32 6, %v2442
        %v2444 = vrot.slane %v404, %v2443
        %v2445 = vlaneseq
        %v2446 = vshrl.u32 %v2445, 7
        %v2447 = vsub.s32 6, %v2446
        %v2448 = vrot.slane %v406, %v2447
        %v2449 = vlaneseq
        %v2450 = vshrl.u32 %v2449, 7
        %v2451 = vsub.s32 6, %v2450
        %v2452 = vrot.slane %v408, %v2451
        %v2453 = vlaneseq
        %v2454 = vshrl.u32 %v2453, 7
        %v2455 = vsub.s32 6, %v2454
        %v2456 = vrot.slane %v410, %v2455
        %v2457 = vlaneseq
        %v2458 = vshrl.u32 %v2457, 7
        %v2459 = vsub.s32 6, %v2458
        %v2460 = vrot.slane %v412, %v2459
        %v2461 = vlaneseq
        %v2462 = vshrl.u32 %v2461, 7
        %v2463 = vsub.s32 6, %v2462
        %v2464 = vrot.slane %v414, %v2463
        %v2465 = vlaneseq
        %v2466 = vshrl.u32 %v2465, 7
        %v2467 = vsub.s32 6, %v2466
        %v2468 = vrot.slane %v416, %v2467
        %v2469 = vlaneseq
        %v2470 = vshrl.u32 %v2469, 7
        %v2471 = vsub.s32 6, %v2470
        %v2472 = vrot.slane %v418, %v2471
        %v2473 = vlaneseq
        %v2474 = vshrl.u32 %v2473, 7
        %v2475 = vsub.s32 6, %v2474
        %v2476 = vrot.slane %v420, %v2475
        %v2477 = vlaneseq
        %v2478 = vshrl.u32 %v2477, 7
        %v2479 = vsub.s32 6, %v2478
        %v2480 = vrot.slane %v422, %v2479
        %v2481 = vlaneseq
        %v2482 = vshrl.u32 %v2481, 7
        %v2483 = vsub.s32 6, %v2482
        %v2484 = vrot.slane %v424, %v2483
        %2486 = vset.pattern.permute.xlu0 0
        %2487 = vperm.xlu0 %2486, %v517
        %v2488 = vpop.permute.xlu0 %2487
        %2491 = vset.pattern.permute.xlu0 0
        %2492 = vperm.xlu0 %2491, %v518
        %v2493 = vpop.permute.xlu0 %2492
        %v2495 = vmul.f32 %v2424, %v2488
        %v2496 = vmul.f32 %v2424, %v2493
        %v2497 = vmul.f32 %v2428, %v2488
        %v2498 = vmul.f32 %v2428, %v2493
        %v2499 = vmul.f32 %v2432, %v2488
        %v2500 = vmul.f32 %v2432, %v2493
        %v2501 = vmul.f32 %v2436, %v2488
        %v2502 = vmul.f32 %v2436, %v2493
        %v2503 = vmul.f32 %v2440, %v2488
        %v2504 = vmul.f32 %v2440, %v2493
        %v2505 = vmul.f32 %v2444, %v2488
        %v2506 = vmul.f32 %v2444, %v2493
        %v2507 = vmul.f32 %v2448, %v2488
        %v2508 = vmul.f32 %v2448, %v2493
        %v2509 = vmul.f32 %v2452, %v2488
        %v2510 = vmul.f32 %v2452, %v2493
        %v2511 = vmul.f32 %v2456, %v2488
        %v2512 = vmul.f32 %v2456, %v2493
        %v2513 = vmul.f32 %v2460, %v2488
        %v2514 = vmul.f32 %v2460, %v2493
        %v2515 = vmul.f32 %v2464, %v2488
        %v2516 = vmul.f32 %v2464, %v2493
        %v2517 = vmul.f32 %v2468, %v2488
        %v2518 = vmul.f32 %v2468, %v2493
        %v2519 = vmul.f32 %v2472, %v2488
        %v2520 = vmul.f32 %v2472, %v2493
        %v2521 = vmul.f32 %v2476, %v2488
        %v2522 = vmul.f32 %v2476, %v2493
        %v2523 = vmul.f32 %v2480, %v2488
        %v2524 = vmul.f32 %v2480, %v2493
        %v2525 = vmul.f32 %v2484, %v2488
        %v2526 = vmul.f32 %v2484, %v2493
        %v2527 = vadd.f32 %v2389, %v2495
        %v2528 = vadd.f32 %v2390, %v2496
        %v2529 = vadd.f32 %v2391, %v2497
        %v2530 = vadd.f32 %v2392, %v2498
        %v2531 = vadd.f32 %v2393, %v2499
        %v2532 = vadd.f32 %v2394, %v2500
        %v2533 = vadd.f32 %v2395, %v2501
        %v2534 = vadd.f32 %v2396, %v2502
        %v2535 = vadd.f32 %v2397, %v2503
        %v2536 = vadd.f32 %v2398, %v2504
        %v2537 = vadd.f32 %v2399, %v2505
        %v2538 = vadd.f32 %v2400, %v2506
        %v2539 = vadd.f32 %v2401, %v2507
        %v2540 = vadd.f32 %v2402, %v2508
        %v2541 = vadd.f32 %v2403, %v2509
        %v2542 = vadd.f32 %v2404, %v2510
        %v2543 = vadd.f32 %v2405, %v2511
        %v2544 = vadd.f32 %v2406, %v2512
        %v2545 = vadd.f32 %v2407, %v2513
        %v2546 = vadd.f32 %v2408, %v2514
        %v2547 = vadd.f32 %v2409, %v2515
        %v2548 = vadd.f32 %v2410, %v2516
        %v2549 = vadd.f32 %v2411, %v2517
        %v2550 = vadd.f32 %v2412, %v2518
        %v2551 = vadd.f32 %v2413, %v2519
        %v2552 = vadd.f32 %v2414, %v2520
        %v2553 = vadd.f32 %v2415, %v2521
        %v2554 = vadd.f32 %v2416, %v2522
        %v2555 = vadd.f32 %v2417, %v2523
        %v2556 = vadd.f32 %v2418, %v2524
        %v2557 = vadd.f32 %v2419, %v2525
        %v2558 = vadd.f32 %v2420, %v2526
        %v2559 = vlaneseq
        %v2560 = vshrl.u32 %v2559, 7
        %v2561 = vsub.s32 7, %v2560
        %v2562 = vrot.slane %v394, %v2561
        %v2563 = vlaneseq
        %v2564 = vshrl.u32 %v2563, 7
        %v2565 = vsub.s32 7, %v2564
        %v2566 = vrot.slane %v396, %v2565
        %v2567 = vlaneseq
        %v2568 = vshrl.u32 %v2567, 7
        %v2569 = vsub.s32 7, %v2568
        %v2570 = vrot.slane %v398, %v2569
        %v2571 = vlaneseq
        %v2572 = vshrl.u32 %v2571, 7
        %v2573 = vsub.s32 7, %v2572
        %v2574 = vrot.slane %v400, %v2573
        %v2575 = vlaneseq
        %v2576 = vshrl.u32 %v2575, 7
        %v2577 = vsub.s32 7, %v2576
        %v2578 = vrot.slane %v402, %v2577
        %v2579 = vlaneseq
        %v2580 = vshrl.u32 %v2579, 7
        %v2581 = vsub.s32 7, %v2580
        %v2582 = vrot.slane %v404, %v2581
        %v2583 = vlaneseq
        %v2584 = vshrl.u32 %v2583, 7
        %v2585 = vsub.s32 7, %v2584
        %v2586 = vrot.slane %v406, %v2585
        %v2587 = vlaneseq
        %v2588 = vshrl.u32 %v2587, 7
        %v2589 = vsub.s32 7, %v2588
        %v2590 = vrot.slane %v408, %v2589
        %v2591 = vlaneseq
        %v2592 = vshrl.u32 %v2591, 7
        %v2593 = vsub.s32 7, %v2592
        %v2594 = vrot.slane %v410, %v2593
        %v2595 = vlaneseq
        %v2596 = vshrl.u32 %v2595, 7
        %v2597 = vsub.s32 7, %v2596
        %v2598 = vrot.slane %v412, %v2597
        %v2599 = vlaneseq
        %v2600 = vshrl.u32 %v2599, 7
        %v2601 = vsub.s32 7, %v2600
        %v2602 = vrot.slane %v414, %v2601
        %v2603 = vlaneseq
        %v2604 = vshrl.u32 %v2603, 7
        %v2605 = vsub.s32 7, %v2604
        %v2606 = vrot.slane %v416, %v2605
        %v2607 = vlaneseq
        %v2608 = vshrl.u32 %v2607, 7
        %v2609 = vsub.s32 7, %v2608
        %v2610 = vrot.slane %v418, %v2609
        %v2611 = vlaneseq
        %v2612 = vshrl.u32 %v2611, 7
        %v2613 = vsub.s32 7, %v2612
        %v2614 = vrot.slane %v420, %v2613
        %v2615 = vlaneseq
        %v2616 = vshrl.u32 %v2615, 7
        %v2617 = vsub.s32 7, %v2616
        %v2618 = vrot.slane %v422, %v2617
        %v2619 = vlaneseq
        %v2620 = vshrl.u32 %v2619, 7
        %v2621 = vsub.s32 7, %v2620
        %v2622 = vrot.slane %v424, %v2621
        %2624 = vset.pattern.permute.xlu0 0
        %2625 = vperm.xlu0 %2624, %v519
        %v2626 = vpop.permute.xlu0 %2625
        %2629 = vset.pattern.permute.xlu0 0
        %2630 = vperm.xlu0 %2629, %v520
        %v2631 = vpop.permute.xlu0 %2630
        %v2633 = vmul.f32 %v2562, %v2626
        %v2634 = vmul.f32 %v2562, %v2631
        %v2635 = vmul.f32 %v2566, %v2626
        %v2636 = vmul.f32 %v2566, %v2631
        %v2637 = vmul.f32 %v2570, %v2626
        %v2638 = vmul.f32 %v2570, %v2631
        %v2639 = vmul.f32 %v2574, %v2626
        %v2640 = vmul.f32 %v2574, %v2631
        %v2641 = vmul.f32 %v2578, %v2626
        %v2642 = vmul.f32 %v2578, %v2631
        %v2643 = vmul.f32 %v2582, %v2626
        %v2644 = vmul.f32 %v2582, %v2631
        %v2645 = vmul.f32 %v2586, %v2626
        %v2646 = vmul.f32 %v2586, %v2631
        %v2647 = vmul.f32 %v2590, %v2626
        %v2648 = vmul.f32 %v2590, %v2631
        %v2649 = vmul.f32 %v2594, %v2626
        %v2650 = vmul.f32 %v2594, %v2631
        %v2651 = vmul.f32 %v2598, %v2626
        %v2652 = vmul.f32 %v2598, %v2631
        %v2653 = vmul.f32 %v2602, %v2626
        %v2654 = vmul.f32 %v2602, %v2631
        %v2655 = vmul.f32 %v2606, %v2626
        %v2656 = vmul.f32 %v2606, %v2631
        %v2657 = vmul.f32 %v2610, %v2626
        %v2658 = vmul.f32 %v2610, %v2631
        %v2659 = vmul.f32 %v2614, %v2626
        %v2660 = vmul.f32 %v2614, %v2631
        %v2661 = vmul.f32 %v2618, %v2626
        %v2662 = vmul.f32 %v2618, %v2631
        %v2663 = vmul.f32 %v2622, %v2626
        %v2664 = vmul.f32 %v2622, %v2631
        %v2665 = vadd.f32 %v2527, %v2633
        %v2666 = vadd.f32 %v2528, %v2634
        %v2667 = vadd.f32 %v2529, %v2635
        %v2668 = vadd.f32 %v2530, %v2636
        %v2669 = vadd.f32 %v2531, %v2637
        %v2670 = vadd.f32 %v2532, %v2638
        %v2671 = vadd.f32 %v2533, %v2639
        %v2672 = vadd.f32 %v2534, %v2640
        %v2673 = vadd.f32 %v2535, %v2641
        %v2674 = vadd.f32 %v2536, %v2642
        %v2675 = vadd.f32 %v2537, %v2643
        %v2676 = vadd.f32 %v2538, %v2644
        %v2677 = vadd.f32 %v2539, %v2645
        %v2678 = vadd.f32 %v2540, %v2646
        %v2679 = vadd.f32 %v2541, %v2647
        %v2680 = vadd.f32 %v2542, %v2648
        %v2681 = vadd.f32 %v2543, %v2649
        %v2682 = vadd.f32 %v2544, %v2650
        %v2683 = vadd.f32 %v2545, %v2651
        %v2684 = vadd.f32 %v2546, %v2652
        %v2685 = vadd.f32 %v2547, %v2653
        %v2686 = vadd.f32 %v2548, %v2654
        %v2687 = vadd.f32 %v2549, %v2655
        %v2688 = vadd.f32 %v2550, %v2656
        %v2689 = vadd.f32 %v2551, %v2657
        %v2690 = vadd.f32 %v2552, %v2658
        %v2691 = vadd.f32 %v2553, %v2659
        %v2692 = vadd.f32 %v2554, %v2660
        %v2693 = vadd.f32 %v2555, %v2661
        %v2694 = vadd.f32 %v2556, %v2662
        %v2695 = vadd.f32 %v2557, %v2663
        %v2696 = vadd.f32 %v2558, %v2664
        %v2697 = vlaneseq
        %v2698 = vshrl.u32 %v2697, 7
        %v2699 = vsub.s32 0, %v2698
        %v2700 = vrot.slane %v425, %v2699
        %v2701 = vlaneseq
        %v2702 = vshrl.u32 %v2701, 7
        %v2703 = vsub.s32 0, %v2702
        %v2704 = vrot.slane %v427, %v2703
        %v2705 = vlaneseq
        %v2706 = vshrl.u32 %v2705, 7
        %v2707 = vsub.s32 0, %v2706
        %v2708 = vrot.slane %v429, %v2707
        %v2709 = vlaneseq
        %v2710 = vshrl.u32 %v2709, 7
        %v2711 = vsub.s32 0, %v2710
        %v2712 = vrot.slane %v431, %v2711
        %v2713 = vlaneseq
        %v2714 = vshrl.u32 %v2713, 7
        %v2715 = vsub.s32 0, %v2714
        %v2716 = vrot.slane %v433, %v2715
        %v2717 = vlaneseq
        %v2718 = vshrl.u32 %v2717, 7
        %v2719 = vsub.s32 0, %v2718
        %v2720 = vrot.slane %v435, %v2719
        %v2721 = vlaneseq
        %v2722 = vshrl.u32 %v2721, 7
        %v2723 = vsub.s32 0, %v2722
        %v2724 = vrot.slane %v437, %v2723
        %v2725 = vlaneseq
        %v2726 = vshrl.u32 %v2725, 7
        %v2727 = vsub.s32 0, %v2726
        %v2728 = vrot.slane %v439, %v2727
        %v2729 = vlaneseq
        %v2730 = vshrl.u32 %v2729, 7
        %v2731 = vsub.s32 0, %v2730
        %v2732 = vrot.slane %v441, %v2731
        %v2733 = vlaneseq
        %v2734 = vshrl.u32 %v2733, 7
        %v2735 = vsub.s32 0, %v2734
        %v2736 = vrot.slane %v443, %v2735
        %v2737 = vlaneseq
        %v2738 = vshrl.u32 %v2737, 7
        %v2739 = vsub.s32 0, %v2738
        %v2740 = vrot.slane %v445, %v2739
        %v2741 = vlaneseq
        %v2742 = vshrl.u32 %v2741, 7
        %v2743 = vsub.s32 0, %v2742
        %v2744 = vrot.slane %v447, %v2743
        %v2745 = vlaneseq
        %v2746 = vshrl.u32 %v2745, 7
        %v2747 = vsub.s32 0, %v2746
        %v2748 = vrot.slane %v449, %v2747
        %v2749 = vlaneseq
        %v2750 = vshrl.u32 %v2749, 7
        %v2751 = vsub.s32 0, %v2750
        %v2752 = vrot.slane %v451, %v2751
        %v2753 = vlaneseq
        %v2754 = vshrl.u32 %v2753, 7
        %v2755 = vsub.s32 0, %v2754
        %v2756 = vrot.slane %v453, %v2755
        %v2757 = vlaneseq
        %v2758 = vshrl.u32 %v2757, 7
        %v2759 = vsub.s32 0, %v2758
        %v2760 = vrot.slane %v455, %v2759
        %v2761 = vmul.f32 %v2700, %v2665
        %v2762 = vmul.f32 %v2700, %v2666
        %v2763 = vmul.f32 %v2704, %v2665
        %v2764 = vmul.f32 %v2704, %v2666
        %v2765 = vmul.f32 %v2708, %v2665
        %v2766 = vmul.f32 %v2708, %v2666
        %v2767 = vmul.f32 %v2712, %v2665
        %v2768 = vmul.f32 %v2712, %v2666
        %v2769 = vmul.f32 %v2716, %v2665
        %v2770 = vmul.f32 %v2716, %v2666
        %v2771 = vmul.f32 %v2720, %v2665
        %v2772 = vmul.f32 %v2720, %v2666
        %v2773 = vmul.f32 %v2724, %v2665
        %v2774 = vmul.f32 %v2724, %v2666
        %v2775 = vmul.f32 %v2728, %v2665
        %v2776 = vmul.f32 %v2728, %v2666
        %v2777 = vmul.f32 %v2732, %v2665
        %v2778 = vmul.f32 %v2732, %v2666
        %v2779 = vmul.f32 %v2736, %v2665
        %v2780 = vmul.f32 %v2736, %v2666
        %v2781 = vmul.f32 %v2740, %v2665
        %v2782 = vmul.f32 %v2740, %v2666
        %v2783 = vmul.f32 %v2744, %v2665
        %v2784 = vmul.f32 %v2744, %v2666
        %v2785 = vmul.f32 %v2748, %v2665
        %v2786 = vmul.f32 %v2748, %v2666
        %v2787 = vmul.f32 %v2752, %v2665
        %v2788 = vmul.f32 %v2752, %v2666
        %v2789 = vmul.f32 %v2756, %v2665
        %v2790 = vmul.f32 %v2756, %v2666
        %v2791 = vmul.f32 %v2760, %v2665
        %v2792 = vmul.f32 %v2760, %v2666
        %v2793 = vlaneseq
        %v2794 = vshrl.u32 %v2793, 7
        %v2795 = vsub.s32 1, %v2794
        %v2796 = vrot.slane %v425, %v2795
        %v2797 = vlaneseq
        %v2798 = vshrl.u32 %v2797, 7
        %v2799 = vsub.s32 1, %v2798
        %v2800 = vrot.slane %v427, %v2799
        %v2801 = vlaneseq
        %v2802 = vshrl.u32 %v2801, 7
        %v2803 = vsub.s32 1, %v2802
        %v2804 = vrot.slane %v429, %v2803
        %v2805 = vlaneseq
        %v2806 = vshrl.u32 %v2805, 7
        %v2807 = vsub.s32 1, %v2806
        %v2808 = vrot.slane %v431, %v2807
        %v2809 = vlaneseq
        %v2810 = vshrl.u32 %v2809, 7
        %v2811 = vsub.s32 1, %v2810
        %v2812 = vrot.slane %v433, %v2811
        %v2813 = vlaneseq
        %v2814 = vshrl.u32 %v2813, 7
        %v2815 = vsub.s32 1, %v2814
        %v2816 = vrot.slane %v435, %v2815
        %v2817 = vlaneseq
        %v2818 = vshrl.u32 %v2817, 7
        %v2819 = vsub.s32 1, %v2818
        %v2820 = vrot.slane %v437, %v2819
        %v2821 = vlaneseq
        %v2822 = vshrl.u32 %v2821, 7
        %v2823 = vsub.s32 1, %v2822
        %v2824 = vrot.slane %v439, %v2823
        %v2825 = vlaneseq
        %v2826 = vshrl.u32 %v2825, 7
        %v2827 = vsub.s32 1, %v2826
        %v2828 = vrot.slane %v441, %v2827
        %v2829 = vlaneseq
        %v2830 = vshrl.u32 %v2829, 7
        %v2831 = vsub.s32 1, %v2830
        %v2832 = vrot.slane %v443, %v2831
        %v2833 = vlaneseq
        %v2834 = vshrl.u32 %v2833, 7
        %v2835 = vsub.s32 1, %v2834
        %v2836 = vrot.slane %v445, %v2835
        %v2837 = vlaneseq
        %v2838 = vshrl.u32 %v2837, 7
        %v2839 = vsub.s32 1, %v2838
        %v2840 = vrot.slane %v447, %v2839
        %v2841 = vlaneseq
        %v2842 = vshrl.u32 %v2841, 7
        %v2843 = vsub.s32 1, %v2842
        %v2844 = vrot.slane %v449, %v2843
        %v2845 = vlaneseq
        %v2846 = vshrl.u32 %v2845, 7
        %v2847 = vsub.s32 1, %v2846
        %v2848 = vrot.slane %v451, %v2847
        %v2849 = vlaneseq
        %v2850 = vshrl.u32 %v2849, 7
        %v2851 = vsub.s32 1, %v2850
        %v2852 = vrot.slane %v453, %v2851
        %v2853 = vlaneseq
        %v2854 = vshrl.u32 %v2853, 7
        %v2855 = vsub.s32 1, %v2854
        %v2856 = vrot.slane %v455, %v2855
        %v2857 = vmul.f32 %v2796, %v2667
        %v2858 = vmul.f32 %v2796, %v2668
        %v2859 = vmul.f32 %v2800, %v2667
        %v2860 = vmul.f32 %v2800, %v2668
        %v2861 = vmul.f32 %v2804, %v2667
        %v2862 = vmul.f32 %v2804, %v2668
        %v2863 = vmul.f32 %v2808, %v2667
        %v2864 = vmul.f32 %v2808, %v2668
        %v2865 = vmul.f32 %v2812, %v2667
        %v2866 = vmul.f32 %v2812, %v2668
        %v2867 = vmul.f32 %v2816, %v2667
        %v2868 = vmul.f32 %v2816, %v2668
        %v2869 = vmul.f32 %v2820, %v2667
        %v2870 = vmul.f32 %v2820, %v2668
        %v2871 = vmul.f32 %v2824, %v2667
        %v2872 = vmul.f32 %v2824, %v2668
        %v2873 = vmul.f32 %v2828, %v2667
        %v2874 = vmul.f32 %v2828, %v2668
        %v2875 = vmul.f32 %v2832, %v2667
        %v2876 = vmul.f32 %v2832, %v2668
        %v2877 = vmul.f32 %v2836, %v2667
        %v2878 = vmul.f32 %v2836, %v2668
        %v2879 = vmul.f32 %v2840, %v2667
        %v2880 = vmul.f32 %v2840, %v2668
        %v2881 = vmul.f32 %v2844, %v2667
        %v2882 = vmul.f32 %v2844, %v2668
        %v2883 = vmul.f32 %v2848, %v2667
        %v2884 = vmul.f32 %v2848, %v2668
        %v2885 = vmul.f32 %v2852, %v2667
        %v2886 = vmul.f32 %v2852, %v2668
        %v2887 = vmul.f32 %v2856, %v2667
        %v2888 = vmul.f32 %v2856, %v2668
        %v2889 = vadd.f32 %v2761, %v2857
        %v2890 = vadd.f32 %v2762, %v2858
        %v2891 = vadd.f32 %v2763, %v2859
        %v2892 = vadd.f32 %v2764, %v2860
        %v2893 = vadd.f32 %v2765, %v2861
        %v2894 = vadd.f32 %v2766, %v2862
        %v2895 = vadd.f32 %v2767, %v2863
        %v2896 = vadd.f32 %v2768, %v2864
        %v2897 = vadd.f32 %v2769, %v2865
        %v2898 = vadd.f32 %v2770, %v2866
        %v2899 = vadd.f32 %v2771, %v2867
        %v2900 = vadd.f32 %v2772, %v2868
        %v2901 = vadd.f32 %v2773, %v2869
        %v2902 = vadd.f32 %v2774, %v2870
        %v2903 = vadd.f32 %v2775, %v2871
        %v2904 = vadd.f32 %v2776, %v2872
        %v2905 = vadd.f32 %v2777, %v2873
        %v2906 = vadd.f32 %v2778, %v2874
        %v2907 = vadd.f32 %v2779, %v2875
        %v2908 = vadd.f32 %v2780, %v2876
        %v2909 = vadd.f32 %v2781, %v2877
        %v2910 = vadd.f32 %v2782, %v2878
        %v2911 = vadd.f32 %v2783, %v2879
        %v2912 = vadd.f32 %v2784, %v2880
        %v2913 = vadd.f32 %v2785, %v2881
        %v2914 = vadd.f32 %v2786, %v2882
        %v2915 = vadd.f32 %v2787, %v2883
        %v2916 = vadd.f32 %v2788, %v2884
        %v2917 = vadd.f32 %v2789, %v2885
        %v2918 = vadd.f32 %v2790, %v2886
        %v2919 = vadd.f32 %v2791, %v2887
        %v2920 = vadd.f32 %v2792, %v2888
        %v2921 = vlaneseq
        %v2922 = vshrl.u32 %v2921, 7
        %v2923 = vsub.s32 2, %v2922
        %v2924 = vrot.slane %v425, %v2923
        %v2925 = vlaneseq
        %v2926 = vshrl.u32 %v2925, 7
        %v2927 = vsub.s32 2, %v2926
        %v2928 = vrot.slane %v427, %v2927
        %v2929 = vlaneseq
        %v2930 = vshrl.u32 %v2929, 7
        %v2931 = vsub.s32 2, %v2930
        %v2932 = vrot.slane %v429, %v2931
        %v2933 = vlaneseq
        %v2934 = vshrl.u32 %v2933, 7
        %v2935 = vsub.s32 2, %v2934
        %v2936 = vrot.slane %v431, %v2935
        %v2937 = vlaneseq
        %v2938 = vshrl.u32 %v2937, 7
        %v2939 = vsub.s32 2, %v2938
        %v2940 = vrot.slane %v433, %v2939
        %v2941 = vlaneseq
        %v2942 = vshrl.u32 %v2941, 7
        %v2943 = vsub.s32 2, %v2942
        %v2944 = vrot.slane %v435, %v2943
        %v2945 = vlaneseq
        %v2946 = vshrl.u32 %v2945, 7
        %v2947 = vsub.s32 2, %v2946
        %v2948 = vrot.slane %v437, %v2947
        %v2949 = vlaneseq
        %v2950 = vshrl.u32 %v2949, 7
        %v2951 = vsub.s32 2, %v2950
        %v2952 = vrot.slane %v439, %v2951
        %v2953 = vlaneseq
        %v2954 = vshrl.u32 %v2953, 7
        %v2955 = vsub.s32 2, %v2954
        %v2956 = vrot.slane %v441, %v2955
        %v2957 = vlaneseq
        %v2958 = vshrl.u32 %v2957, 7
        %v2959 = vsub.s32 2, %v2958
        %v2960 = vrot.slane %v443, %v2959
        %v2961 = vlaneseq
        %v2962 = vshrl.u32 %v2961, 7
        %v2963 = vsub.s32 2, %v2962
        %v2964 = vrot.slane %v445, %v2963
        %v2965 = vlaneseq
        %v2966 = vshrl.u32 %v2965, 7
        %v2967 = vsub.s32 2, %v2966
        %v2968 = vrot.slane %v447, %v2967
        %v2969 = vlaneseq
        %v2970 = vshrl.u32 %v2969, 7
        %v2971 = vsub.s32 2, %v2970
        %v2972 = vrot.slane %v449, %v2971
        %v2973 = vlaneseq
        %v2974 = vshrl.u32 %v2973, 7
        %v2975 = vsub.s32 2, %v2974
        %v2976 = vrot.slane %v451, %v2975
        %v2977 = vlaneseq
        %v2978 = vshrl.u32 %v2977, 7
        %v2979 = vsub.s32 2, %v2978
        %v2980 = vrot.slane %v453, %v2979
        %v2981 = vlaneseq
        %v2982 = vshrl.u32 %v2981, 7
        %v2983 = vsub.s32 2, %v2982
        %v2984 = vrot.slane %v455, %v2983
        %v2985 = vmul.f32 %v2924, %v2669
        %v2986 = vmul.f32 %v2924, %v2670
        %v2987 = vmul.f32 %v2928, %v2669
        %v2988 = vmul.f32 %v2928, %v2670
        %v2989 = vmul.f32 %v2932, %v2669
        %v2990 = vmul.f32 %v2932, %v2670
        %v2991 = vmul.f32 %v2936, %v2669
        %v2992 = vmul.f32 %v2936, %v2670
        %v2993 = vmul.f32 %v2940, %v2669
        %v2994 = vmul.f32 %v2940, %v2670
        %v2995 = vmul.f32 %v2944, %v2669
        %v2996 = vmul.f32 %v2944, %v2670
        %v2997 = vmul.f32 %v2948, %v2669
        %v2998 = vmul.f32 %v2948, %v2670
        %v2999 = vmul.f32 %v2952, %v2669
        %v3000 = vmul.f32 %v2952, %v2670
        %v3001 = vmul.f32 %v2956, %v2669
        %v3002 = vmul.f32 %v2956, %v2670
        %v3003 = vmul.f32 %v2960, %v2669
        %v3004 = vmul.f32 %v2960, %v2670
        %v3005 = vmul.f32 %v2964, %v2669
        %v3006 = vmul.f32 %v2964, %v2670
        %v3007 = vmul.f32 %v2968, %v2669
        %v3008 = vmul.f32 %v2968, %v2670
        %v3009 = vmul.f32 %v2972, %v2669
        %v3010 = vmul.f32 %v2972, %v2670
        %v3011 = vmul.f32 %v2976, %v2669
        %v3012 = vmul.f32 %v2976, %v2670
        %v3013 = vmul.f32 %v2980, %v2669
        %v3014 = vmul.f32 %v2980, %v2670
        %v3015 = vmul.f32 %v2984, %v2669
        %v3016 = vmul.f32 %v2984, %v2670
        %v3017 = vadd.f32 %v2889, %v2985
        %v3018 = vadd.f32 %v2890, %v2986
        %v3019 = vadd.f32 %v2891, %v2987
        %v3020 = vadd.f32 %v2892, %v2988
        %v3021 = vadd.f32 %v2893, %v2989
        %v3022 = vadd.f32 %v2894, %v2990
        %v3023 = vadd.f32 %v2895, %v2991
        %v3024 = vadd.f32 %v2896, %v2992
        %v3025 = vadd.f32 %v2897, %v2993
        %v3026 = vadd.f32 %v2898, %v2994
        %v3027 = vadd.f32 %v2899, %v2995
        %v3028 = vadd.f32 %v2900, %v2996
        %v3029 = vadd.f32 %v2901, %v2997
        %v3030 = vadd.f32 %v2902, %v2998
        %v3031 = vadd.f32 %v2903, %v2999
        %v3032 = vadd.f32 %v2904, %v3000
        %v3033 = vadd.f32 %v2905, %v3001
        %v3034 = vadd.f32 %v2906, %v3002
        %v3035 = vadd.f32 %v2907, %v3003
        %v3036 = vadd.f32 %v2908, %v3004
        %v3037 = vadd.f32 %v2909, %v3005
        %v3038 = vadd.f32 %v2910, %v3006
        %v3039 = vadd.f32 %v2911, %v3007
        %v3040 = vadd.f32 %v2912, %v3008
        %v3041 = vadd.f32 %v2913, %v3009
        %v3042 = vadd.f32 %v2914, %v3010
        %v3043 = vadd.f32 %v2915, %v3011
        %v3044 = vadd.f32 %v2916, %v3012
        %v3045 = vadd.f32 %v2917, %v3013
        %v3046 = vadd.f32 %v2918, %v3014
        %v3047 = vadd.f32 %v2919, %v3015
        %v3048 = vadd.f32 %v2920, %v3016
        %v3049 = vlaneseq
        %v3050 = vshrl.u32 %v3049, 7
        %v3051 = vsub.s32 3, %v3050
        %v3052 = vrot.slane %v425, %v3051
        %v3053 = vlaneseq
        %v3054 = vshrl.u32 %v3053, 7
        %v3055 = vsub.s32 3, %v3054
        %v3056 = vrot.slane %v427, %v3055
        %v3057 = vlaneseq
        %v3058 = vshrl.u32 %v3057, 7
        %v3059 = vsub.s32 3, %v3058
        %v3060 = vrot.slane %v429, %v3059
        %v3061 = vlaneseq
        %v3062 = vshrl.u32 %v3061, 7
        %v3063 = vsub.s32 3, %v3062
        %v3064 = vrot.slane %v431, %v3063
        %v3065 = vlaneseq
        %v3066 = vshrl.u32 %v3065, 7
        %v3067 = vsub.s32 3, %v3066
        %v3068 = vrot.slane %v433, %v3067
        %v3069 = vlaneseq
        %v3070 = vshrl.u32 %v3069, 7
        %v3071 = vsub.s32 3, %v3070
        %v3072 = vrot.slane %v435, %v3071
        %v3073 = vlaneseq
        %v3074 = vshrl.u32 %v3073, 7
        %v3075 = vsub.s32 3, %v3074
        %v3076 = vrot.slane %v437, %v3075
        %v3077 = vlaneseq
        %v3078 = vshrl.u32 %v3077, 7
        %v3079 = vsub.s32 3, %v3078
        %v3080 = vrot.slane %v439, %v3079
        %v3081 = vlaneseq
        %v3082 = vshrl.u32 %v3081, 7
        %v3083 = vsub.s32 3, %v3082
        %v3084 = vrot.slane %v441, %v3083
        %v3085 = vlaneseq
        %v3086 = vshrl.u32 %v3085, 7
        %v3087 = vsub.s32 3, %v3086
        %v3088 = vrot.slane %v443, %v3087
        %v3089 = vlaneseq
        %v3090 = vshrl.u32 %v3089, 7
        %v3091 = vsub.s32 3, %v3090
        %v3092 = vrot.slane %v445, %v3091
        %v3093 = vlaneseq
        %v3094 = vshrl.u32 %v3093, 7
        %v3095 = vsub.s32 3, %v3094
        %v3096 = vrot.slane %v447, %v3095
        %v3097 = vlaneseq
        %v3098 = vshrl.u32 %v3097, 7
        %v3099 = vsub.s32 3, %v3098
        %v3100 = vrot.slane %v449, %v3099
        %v3101 = vlaneseq
        %v3102 = vshrl.u32 %v3101, 7
        %v3103 = vsub.s32 3, %v3102
        %v3104 = vrot.slane %v451, %v3103
        %v3105 = vlaneseq
        %v3106 = vshrl.u32 %v3105, 7
        %v3107 = vsub.s32 3, %v3106
        %v3108 = vrot.slane %v453, %v3107
        %v3109 = vlaneseq
        %v3110 = vshrl.u32 %v3109, 7
        %v3111 = vsub.s32 3, %v3110
        %v3112 = vrot.slane %v455, %v3111
        %v3113 = vmul.f32 %v3052, %v2671
        %v3114 = vmul.f32 %v3052, %v2672
        %v3115 = vmul.f32 %v3056, %v2671
        %v3116 = vmul.f32 %v3056, %v2672
        %v3117 = vmul.f32 %v3060, %v2671
        %v3118 = vmul.f32 %v3060, %v2672
        %v3119 = vmul.f32 %v3064, %v2671
        %v3120 = vmul.f32 %v3064, %v2672
        %v3121 = vmul.f32 %v3068, %v2671
        %v3122 = vmul.f32 %v3068, %v2672
        %v3123 = vmul.f32 %v3072, %v2671
        %v3124 = vmul.f32 %v3072, %v2672
        %v3125 = vmul.f32 %v3076, %v2671
        %v3126 = vmul.f32 %v3076, %v2672
        %v3127 = vmul.f32 %v3080, %v2671
        %v3128 = vmul.f32 %v3080, %v2672
        %v3129 = vmul.f32 %v3084, %v2671
        %v3130 = vmul.f32 %v3084, %v2672
        %v3131 = vmul.f32 %v3088, %v2671
        %v3132 = vmul.f32 %v3088, %v2672
        %v3133 = vmul.f32 %v3092, %v2671
        %v3134 = vmul.f32 %v3092, %v2672
        %v3135 = vmul.f32 %v3096, %v2671
        %v3136 = vmul.f32 %v3096, %v2672
        %v3137 = vmul.f32 %v3100, %v2671
        %v3138 = vmul.f32 %v3100, %v2672
        %v3139 = vmul.f32 %v3104, %v2671
        %v3140 = vmul.f32 %v3104, %v2672
        %v3141 = vmul.f32 %v3108, %v2671
        %v3142 = vmul.f32 %v3108, %v2672
        %v3143 = vmul.f32 %v3112, %v2671
        %v3144 = vmul.f32 %v3112, %v2672
        %v3145 = vadd.f32 %v3017, %v3113
        %v3146 = vadd.f32 %v3018, %v3114
        %v3147 = vadd.f32 %v3019, %v3115
        %v3148 = vadd.f32 %v3020, %v3116
        %v3149 = vadd.f32 %v3021, %v3117
        %v3150 = vadd.f32 %v3022, %v3118
        %v3151 = vadd.f32 %v3023, %v3119
        %v3152 = vadd.f32 %v3024, %v3120
        %v3153 = vadd.f32 %v3025, %v3121
        %v3154 = vadd.f32 %v3026, %v3122
        %v3155 = vadd.f32 %v3027, %v3123
        %v3156 = vadd.f32 %v3028, %v3124
        %v3157 = vadd.f32 %v3029, %v3125
        %v3158 = vadd.f32 %v3030, %v3126
        %v3159 = vadd.f32 %v3031, %v3127
        %v3160 = vadd.f32 %v3032, %v3128
        %v3161 = vadd.f32 %v3033, %v3129
        %v3162 = vadd.f32 %v3034, %v3130
        %v3163 = vadd.f32 %v3035, %v3131
        %v3164 = vadd.f32 %v3036, %v3132
        %v3165 = vadd.f32 %v3037, %v3133
        %v3166 = vadd.f32 %v3038, %v3134
        %v3167 = vadd.f32 %v3039, %v3135
        %v3168 = vadd.f32 %v3040, %v3136
        %v3169 = vadd.f32 %v3041, %v3137
        %v3170 = vadd.f32 %v3042, %v3138
        %v3171 = vadd.f32 %v3043, %v3139
        %v3172 = vadd.f32 %v3044, %v3140
        %v3173 = vadd.f32 %v3045, %v3141
        %v3174 = vadd.f32 %v3046, %v3142
        %v3175 = vadd.f32 %v3047, %v3143
        %v3176 = vadd.f32 %v3048, %v3144
        %v3177 = vlaneseq
        %v3178 = vshrl.u32 %v3177, 7
        %v3179 = vsub.s32 4, %v3178
        %v3180 = vrot.slane %v425, %v3179
        %v3181 = vlaneseq
        %v3182 = vshrl.u32 %v3181, 7
        %v3183 = vsub.s32 4, %v3182
        %v3184 = vrot.slane %v427, %v3183
        %v3185 = vlaneseq
        %v3186 = vshrl.u32 %v3185, 7
        %v3187 = vsub.s32 4, %v3186
        %v3188 = vrot.slane %v429, %v3187
        %v3189 = vlaneseq
        %v3190 = vshrl.u32 %v3189, 7
        %v3191 = vsub.s32 4, %v3190
        %v3192 = vrot.slane %v431, %v3191
        %v3193 = vlaneseq
        %v3194 = vshrl.u32 %v3193, 7
        %v3195 = vsub.s32 4, %v3194
        %v3196 = vrot.slane %v433, %v3195
        %v3197 = vlaneseq
        %v3198 = vshrl.u32 %v3197, 7
        %v3199 = vsub.s32 4, %v3198
        %v3200 = vrot.slane %v435, %v3199
        %v3201 = vlaneseq
        %v3202 = vshrl.u32 %v3201, 7
        %v3203 = vsub.s32 4, %v3202
        %v3204 = vrot.slane %v437, %v3203
        %v3205 = vlaneseq
        %v3206 = vshrl.u32 %v3205, 7
        %v3207 = vsub.s32 4, %v3206
        %v3208 = vrot.slane %v439, %v3207
        %v3209 = vlaneseq
        %v3210 = vshrl.u32 %v3209, 7
        %v3211 = vsub.s32 4, %v3210
        %v3212 = vrot.slane %v441, %v3211
        %v3213 = vlaneseq
        %v3214 = vshrl.u32 %v3213, 7
        %v3215 = vsub.s32 4, %v3214
        %v3216 = vrot.slane %v443, %v3215
        %v3217 = vlaneseq
        %v3218 = vshrl.u32 %v3217, 7
        %v3219 = vsub.s32 4, %v3218
        %v3220 = vrot.slane %v445, %v3219
        %v3221 = vlaneseq
        %v3222 = vshrl.u32 %v3221, 7
        %v3223 = vsub.s32 4, %v3222
        %v3224 = vrot.slane %v447, %v3223
        %v3225 = vlaneseq
        %v3226 = vshrl.u32 %v3225, 7
        %v3227 = vsub.s32 4, %v3226
        %v3228 = vrot.slane %v449, %v3227
        %v3229 = vlaneseq
        %v3230 = vshrl.u32 %v3229, 7
        %v3231 = vsub.s32 4, %v3230
        %v3232 = vrot.slane %v451, %v3231
        %v3233 = vlaneseq
        %v3234 = vshrl.u32 %v3233, 7
        %v3235 = vsub.s32 4, %v3234
        %v3236 = vrot.slane %v453, %v3235
        %v3237 = vlaneseq
        %v3238 = vshrl.u32 %v3237, 7
        %v3239 = vsub.s32 4, %v3238
        %v3240 = vrot.slane %v455, %v3239
        %v3241 = vmul.f32 %v3180, %v2673
        %v3242 = vmul.f32 %v3180, %v2674
        %v3243 = vmul.f32 %v3184, %v2673
        %v3244 = vmul.f32 %v3184, %v2674
        %v3245 = vmul.f32 %v3188, %v2673
        %v3246 = vmul.f32 %v3188, %v2674
        %v3247 = vmul.f32 %v3192, %v2673
        %v3248 = vmul.f32 %v3192, %v2674
        %v3249 = vmul.f32 %v3196, %v2673
        %v3250 = vmul.f32 %v3196, %v2674
        %v3251 = vmul.f32 %v3200, %v2673
        %v3252 = vmul.f32 %v3200, %v2674
        %v3253 = vmul.f32 %v3204, %v2673
        %v3254 = vmul.f32 %v3204, %v2674
        %v3255 = vmul.f32 %v3208, %v2673
        %v3256 = vmul.f32 %v3208, %v2674
        %v3257 = vmul.f32 %v3212, %v2673
        %v3258 = vmul.f32 %v3212, %v2674
        %v3259 = vmul.f32 %v3216, %v2673
        %v3260 = vmul.f32 %v3216, %v2674
        %v3261 = vmul.f32 %v3220, %v2673
        %v3262 = vmul.f32 %v3220, %v2674
        %v3263 = vmul.f32 %v3224, %v2673
        %v3264 = vmul.f32 %v3224, %v2674
        %v3265 = vmul.f32 %v3228, %v2673
        %v3266 = vmul.f32 %v3228, %v2674
        %v3267 = vmul.f32 %v3232, %v2673
        %v3268 = vmul.f32 %v3232, %v2674
        %v3269 = vmul.f32 %v3236, %v2673
        %v3270 = vmul.f32 %v3236, %v2674
        %v3271 = vmul.f32 %v3240, %v2673
        %v3272 = vmul.f32 %v3240, %v2674
        %v3273 = vadd.f32 %v3145, %v3241
        %v3274 = vadd.f32 %v3146, %v3242
        %v3275 = vadd.f32 %v3147, %v3243
        %v3276 = vadd.f32 %v3148, %v3244
        %v3277 = vadd.f32 %v3149, %v3245
        %v3278 = vadd.f32 %v3150, %v3246
        %v3279 = vadd.f32 %v3151, %v3247
        %v3280 = vadd.f32 %v3152, %v3248
        %v3281 = vadd.f32 %v3153, %v3249
        %v3282 = vadd.f32 %v3154, %v3250
        %v3283 = vadd.f32 %v3155, %v3251
        %v3284 = vadd.f32 %v3156, %v3252
        %v3285 = vadd.f32 %v3157, %v3253
        %v3286 = vadd.f32 %v3158, %v3254
        %v3287 = vadd.f32 %v3159, %v3255
        %v3288 = vadd.f32 %v3160, %v3256
        %v3289 = vadd.f32 %v3161, %v3257
        %v3290 = vadd.f32 %v3162, %v3258
        %v3291 = vadd.f32 %v3163, %v3259
        %v3292 = vadd.f32 %v3164, %v3260
        %v3293 = vadd.f32 %v3165, %v3261
        %v3294 = vadd.f32 %v3166, %v3262
        %v3295 = vadd.f32 %v3167, %v3263
        %v3296 = vadd.f32 %v3168, %v3264
        %v3297 = vadd.f32 %v3169, %v3265
        %v3298 = vadd.f32 %v3170, %v3266
        %v3299 = vadd.f32 %v3171, %v3267
        %v3300 = vadd.f32 %v3172, %v3268
        %v3301 = vadd.f32 %v3173, %v3269
        %v3302 = vadd.f32 %v3174, %v3270
        %v3303 = vadd.f32 %v3175, %v3271
        %v3304 = vadd.f32 %v3176, %v3272
        %v3305 = vlaneseq
        %v3306 = vshrl.u32 %v3305, 7
        %v3307 = vsub.s32 5, %v3306
        %v3308 = vrot.slane %v425, %v3307
        %v3309 = vlaneseq
        %v3310 = vshrl.u32 %v3309, 7
        %v3311 = vsub.s32 5, %v3310
        %v3312 = vrot.slane %v427, %v3311
        %v3313 = vlaneseq
        %v3314 = vshrl.u32 %v3313, 7
        %v3315 = vsub.s32 5, %v3314
        %v3316 = vrot.slane %v429, %v3315
        %v3317 = vlaneseq
        %v3318 = vshrl.u32 %v3317, 7
        %v3319 = vsub.s32 5, %v3318
        %v3320 = vrot.slane %v431, %v3319
        %v3321 = vlaneseq
        %v3322 = vshrl.u32 %v3321, 7
        %v3323 = vsub.s32 5, %v3322
        %v3324 = vrot.slane %v433, %v3323
        %v3325 = vlaneseq
        %v3326 = vshrl.u32 %v3325, 7
        %v3327 = vsub.s32 5, %v3326
        %v3328 = vrot.slane %v435, %v3327
        %v3329 = vlaneseq
        %v3330 = vshrl.u32 %v3329, 7
        %v3331 = vsub.s32 5, %v3330
        %v3332 = vrot.slane %v437, %v3331
        %v3333 = vlaneseq
        %v3334 = vshrl.u32 %v3333, 7
        %v3335 = vsub.s32 5, %v3334
        %v3336 = vrot.slane %v439, %v3335
        %v3337 = vlaneseq
        %v3338 = vshrl.u32 %v3337, 7
        %v3339 = vsub.s32 5, %v3338
        %v3340 = vrot.slane %v441, %v3339
        %v3341 = vlaneseq
        %v3342 = vshrl.u32 %v3341, 7
        %v3343 = vsub.s32 5, %v3342
        %v3344 = vrot.slane %v443, %v3343
        %v3345 = vlaneseq
        %v3346 = vshrl.u32 %v3345, 7
        %v3347 = vsub.s32 5, %v3346
        %v3348 = vrot.slane %v445, %v3347
        %v3349 = vlaneseq
        %v3350 = vshrl.u32 %v3349, 7
        %v3351 = vsub.s32 5, %v3350
        %v3352 = vrot.slane %v447, %v3351
        %v3353 = vlaneseq
        %v3354 = vshrl.u32 %v3353, 7
        %v3355 = vsub.s32 5, %v3354
        %v3356 = vrot.slane %v449, %v3355
        %v3357 = vlaneseq
        %v3358 = vshrl.u32 %v3357, 7
        %v3359 = vsub.s32 5, %v3358
        %v3360 = vrot.slane %v451, %v3359
        %v3361 = vlaneseq
        %v3362 = vshrl.u32 %v3361, 7
        %v3363 = vsub.s32 5, %v3362
        %v3364 = vrot.slane %v453, %v3363
        %v3365 = vlaneseq
        %v3366 = vshrl.u32 %v3365, 7
        %v3367 = vsub.s32 5, %v3366
        %v3368 = vrot.slane %v455, %v3367
        %v3369 = vmul.f32 %v3308, %v2675
        %v3370 = vmul.f32 %v3308, %v2676
        %v3371 = vmul.f32 %v3312, %v2675
        %v3372 = vmul.f32 %v3312, %v2676
        %v3373 = vmul.f32 %v3316, %v2675
        %v3374 = vmul.f32 %v3316, %v2676
        %v3375 = vmul.f32 %v3320, %v2675
        %v3376 = vmul.f32 %v3320, %v2676
        %v3377 = vmul.f32 %v3324, %v2675
        %v3378 = vmul.f32 %v3324, %v2676
        %v3379 = vmul.f32 %v3328, %v2675
        %v3380 = vmul.f32 %v3328, %v2676
        %v3381 = vmul.f32 %v3332, %v2675
        %v3382 = vmul.f32 %v3332, %v2676
        %v3383 = vmul.f32 %v3336, %v2675
        %v3384 = vmul.f32 %v3336, %v2676
        %v3385 = vmul.f32 %v3340, %v2675
        %v3386 = vmul.f32 %v3340, %v2676
        %v3387 = vmul.f32 %v3344, %v2675
        %v3388 = vmul.f32 %v3344, %v2676
        %v3389 = vmul.f32 %v3348, %v2675
        %v3390 = vmul.f32 %v3348, %v2676
        %v3391 = vmul.f32 %v3352, %v2675
        %v3392 = vmul.f32 %v3352, %v2676
        %v3393 = vmul.f32 %v3356, %v2675
        %v3394 = vmul.f32 %v3356, %v2676
        %v3395 = vmul.f32 %v3360, %v2675
        %v3396 = vmul.f32 %v3360, %v2676
        %v3397 = vmul.f32 %v3364, %v2675
        %v3398 = vmul.f32 %v3364, %v2676
        %v3399 = vmul.f32 %v3368, %v2675
        %v3400 = vmul.f32 %v3368, %v2676
        %v3401 = vadd.f32 %v3273, %v3369
        %v3402 = vadd.f32 %v3274, %v3370
        %v3403 = vadd.f32 %v3275, %v3371
        %v3404 = vadd.f32 %v3276, %v3372
        %v3405 = vadd.f32 %v3277, %v3373
        %v3406 = vadd.f32 %v3278, %v3374
        %v3407 = vadd.f32 %v3279, %v3375
        %v3408 = vadd.f32 %v3280, %v3376
        %v3409 = vadd.f32 %v3281, %v3377
        %v3410 = vadd.f32 %v3282, %v3378
        %v3411 = vadd.f32 %v3283, %v3379
        %v3412 = vadd.f32 %v3284, %v3380
        %v3413 = vadd.f32 %v3285, %v3381
        %v3414 = vadd.f32 %v3286, %v3382
        %v3415 = vadd.f32 %v3287, %v3383
        %v3416 = vadd.f32 %v3288, %v3384
        %v3417 = vadd.f32 %v3289, %v3385
        %v3418 = vadd.f32 %v3290, %v3386
        %v3419 = vadd.f32 %v3291, %v3387
        %v3420 = vadd.f32 %v3292, %v3388
        %v3421 = vadd.f32 %v3293, %v3389
        %v3422 = vadd.f32 %v3294, %v3390
        %v3423 = vadd.f32 %v3295, %v3391
        %v3424 = vadd.f32 %v3296, %v3392
        %v3425 = vadd.f32 %v3297, %v3393
        %v3426 = vadd.f32 %v3298, %v3394
        %v3427 = vadd.f32 %v3299, %v3395
        %v3428 = vadd.f32 %v3300, %v3396
        %v3429 = vadd.f32 %v3301, %v3397
        %v3430 = vadd.f32 %v3302, %v3398
        %v3431 = vadd.f32 %v3303, %v3399
        %v3432 = vadd.f32 %v3304, %v3400
        %v3433 = vlaneseq
        %v3434 = vshrl.u32 %v3433, 7
        %v3435 = vsub.s32 6, %v3434
        %v3436 = vrot.slane %v425, %v3435
        %v3437 = vlaneseq
        %v3438 = vshrl.u32 %v3437, 7
        %v3439 = vsub.s32 6, %v3438
        %v3440 = vrot.slane %v427, %v3439
        %v3441 = vlaneseq
        %v3442 = vshrl.u32 %v3441, 7
        %v3443 = vsub.s32 6, %v3442
        %v3444 = vrot.slane %v429, %v3443
        %v3445 = vlaneseq
        %v3446 = vshrl.u32 %v3445, 7
        %v3447 = vsub.s32 6, %v3446
        %v3448 = vrot.slane %v431, %v3447
        %v3449 = vlaneseq
        %v3450 = vshrl.u32 %v3449, 7
        %v3451 = vsub.s32 6, %v3450
        %v3452 = vrot.slane %v433, %v3451
        %v3453 = vlaneseq
        %v3454 = vshrl.u32 %v3453, 7
        %v3455 = vsub.s32 6, %v3454
        %v3456 = vrot.slane %v435, %v3455
        %v3457 = vlaneseq
        %v3458 = vshrl.u32 %v3457, 7
        %v3459 = vsub.s32 6, %v3458
        %v3460 = vrot.slane %v437, %v3459
        %v3461 = vlaneseq
        %v3462 = vshrl.u32 %v3461, 7
        %v3463 = vsub.s32 6, %v3462
        %v3464 = vrot.slane %v439, %v3463
        %v3465 = vlaneseq
        %v3466 = vshrl.u32 %v3465, 7
        %v3467 = vsub.s32 6, %v3466
        %v3468 = vrot.slane %v441, %v3467
        %v3469 = vlaneseq
        %v3470 = vshrl.u32 %v3469, 7
        %v3471 = vsub.s32 6, %v3470
        %v3472 = vrot.slane %v443, %v3471
        %v3473 = vlaneseq
        %v3474 = vshrl.u32 %v3473, 7
        %v3475 = vsub.s32 6, %v3474
        %v3476 = vrot.slane %v445, %v3475
        %v3477 = vlaneseq
        %v3478 = vshrl.u32 %v3477, 7
        %v3479 = vsub.s32 6, %v3478
        %v3480 = vrot.slane %v447, %v3479
        %v3481 = vlaneseq
        %v3482 = vshrl.u32 %v3481, 7
        %v3483 = vsub.s32 6, %v3482
        %v3484 = vrot.slane %v449, %v3483
        %v3485 = vlaneseq
        %v3486 = vshrl.u32 %v3485, 7
        %v3487 = vsub.s32 6, %v3486
        %v3488 = vrot.slane %v451, %v3487
        %v3489 = vlaneseq
        %v3490 = vshrl.u32 %v3489, 7
        %v3491 = vsub.s32 6, %v3490
        %v3492 = vrot.slane %v453, %v3491
        %v3493 = vlaneseq
        %v3494 = vshrl.u32 %v3493, 7
        %v3495 = vsub.s32 6, %v3494
        %v3496 = vrot.slane %v455, %v3495
        %v3497 = vmul.f32 %v3436, %v2677
        %v3498 = vmul.f32 %v3436, %v2678
        %v3499 = vmul.f32 %v3440, %v2677
        %v3500 = vmul.f32 %v3440, %v2678
        %v3501 = vmul.f32 %v3444, %v2677
        %v3502 = vmul.f32 %v3444, %v2678
        %v3503 = vmul.f32 %v3448, %v2677
        %v3504 = vmul.f32 %v3448, %v2678
        %v3505 = vmul.f32 %v3452, %v2677
        %v3506 = vmul.f32 %v3452, %v2678
        %v3507 = vmul.f32 %v3456, %v2677
        %v3508 = vmul.f32 %v3456, %v2678
        %v3509 = vmul.f32 %v3460, %v2677
        %v3510 = vmul.f32 %v3460, %v2678
        %v3511 = vmul.f32 %v3464, %v2677
        %v3512 = vmul.f32 %v3464, %v2678
        %v3513 = vmul.f32 %v3468, %v2677
        %v3514 = vmul.f32 %v3468, %v2678
        %v3515 = vmul.f32 %v3472, %v2677
        %v3516 = vmul.f32 %v3472, %v2678
        %v3517 = vmul.f32 %v3476, %v2677
        %v3518 = vmul.f32 %v3476, %v2678
        %v3519 = vmul.f32 %v3480, %v2677
        %v3520 = vmul.f32 %v3480, %v2678
        %v3521 = vmul.f32 %v3484, %v2677
        %v3522 = vmul.f32 %v3484, %v2678
        %v3523 = vmul.f32 %v3488, %v2677
        %v3524 = vmul.f32 %v3488, %v2678
        %v3525 = vmul.f32 %v3492, %v2677
        %v3526 = vmul.f32 %v3492, %v2678
        %v3527 = vmul.f32 %v3496, %v2677
        %v3528 = vmul.f32 %v3496, %v2678
        %v3529 = vadd.f32 %v3401, %v3497
        %v3530 = vadd.f32 %v3402, %v3498
        %v3531 = vadd.f32 %v3403, %v3499
        %v3532 = vadd.f32 %v3404, %v3500
        %v3533 = vadd.f32 %v3405, %v3501
        %v3534 = vadd.f32 %v3406, %v3502
        %v3535 = vadd.f32 %v3407, %v3503
        %v3536 = vadd.f32 %v3408, %v3504
        %v3537 = vadd.f32 %v3409, %v3505
        %v3538 = vadd.f32 %v3410, %v3506
        %v3539 = vadd.f32 %v3411, %v3507
        %v3540 = vadd.f32 %v3412, %v3508
        %v3541 = vadd.f32 %v3413, %v3509
        %v3542 = vadd.f32 %v3414, %v3510
        %v3543 = vadd.f32 %v3415, %v3511
        %v3544 = vadd.f32 %v3416, %v3512
        %v3545 = vadd.f32 %v3417, %v3513
        %v3546 = vadd.f32 %v3418, %v3514
        %v3547 = vadd.f32 %v3419, %v3515
        %v3548 = vadd.f32 %v3420, %v3516
        %v3549 = vadd.f32 %v3421, %v3517
        %v3550 = vadd.f32 %v3422, %v3518
        %v3551 = vadd.f32 %v3423, %v3519
        %v3552 = vadd.f32 %v3424, %v3520
        %v3553 = vadd.f32 %v3425, %v3521
        %v3554 = vadd.f32 %v3426, %v3522
        %v3555 = vadd.f32 %v3427, %v3523
        %v3556 = vadd.f32 %v3428, %v3524
        %v3557 = vadd.f32 %v3429, %v3525
        %v3558 = vadd.f32 %v3430, %v3526
        %v3559 = vadd.f32 %v3431, %v3527
        %v3560 = vadd.f32 %v3432, %v3528
        %v3561 = vlaneseq
        %v3562 = vshrl.u32 %v3561, 7
        %v3563 = vsub.s32 7, %v3562
        %v3564 = vrot.slane %v425, %v3563
        %v3565 = vlaneseq
        %v3566 = vshrl.u32 %v3565, 7
        %v3567 = vsub.s32 7, %v3566
        %v3568 = vrot.slane %v427, %v3567
        %v3569 = vlaneseq
        %v3570 = vshrl.u32 %v3569, 7
        %v3571 = vsub.s32 7, %v3570
        %v3572 = vrot.slane %v429, %v3571
        %v3573 = vlaneseq
        %v3574 = vshrl.u32 %v3573, 7
        %v3575 = vsub.s32 7, %v3574
        %v3576 = vrot.slane %v431, %v3575
        %v3577 = vlaneseq
        %v3578 = vshrl.u32 %v3577, 7
        %v3579 = vsub.s32 7, %v3578
        %v3580 = vrot.slane %v433, %v3579
        %v3581 = vlaneseq
        %v3582 = vshrl.u32 %v3581, 7
        %v3583 = vsub.s32 7, %v3582
        %v3584 = vrot.slane %v435, %v3583
        %v3585 = vlaneseq
        %v3586 = vshrl.u32 %v3585, 7
        %v3587 = vsub.s32 7, %v3586
        %v3588 = vrot.slane %v437, %v3587
        %v3589 = vlaneseq
        %v3590 = vshrl.u32 %v3589, 7
        %v3591 = vsub.s32 7, %v3590
        %v3592 = vrot.slane %v439, %v3591
        %v3593 = vlaneseq
        %v3594 = vshrl.u32 %v3593, 7
        %v3595 = vsub.s32 7, %v3594
        %v3596 = vrot.slane %v441, %v3595
        %v3597 = vlaneseq
        %v3598 = vshrl.u32 %v3597, 7
        %v3599 = vsub.s32 7, %v3598
        %v3600 = vrot.slane %v443, %v3599
        %v3601 = vlaneseq
        %v3602 = vshrl.u32 %v3601, 7
        %v3603 = vsub.s32 7, %v3602
        %v3604 = vrot.slane %v445, %v3603
        %v3605 = vlaneseq
        %v3606 = vshrl.u32 %v3605, 7
        %v3607 = vsub.s32 7, %v3606
        %v3608 = vrot.slane %v447, %v3607
        %v3609 = vlaneseq
        %v3610 = vshrl.u32 %v3609, 7
        %v3611 = vsub.s32 7, %v3610
        %v3612 = vrot.slane %v449, %v3611
        %v3613 = vlaneseq
        %v3614 = vshrl.u32 %v3613, 7
        %v3615 = vsub.s32 7, %v3614
        %v3616 = vrot.slane %v451, %v3615
        %v3617 = vlaneseq
        %v3618 = vshrl.u32 %v3617, 7
        %v3619 = vsub.s32 7, %v3618
        %v3620 = vrot.slane %v453, %v3619
        %v3621 = vlaneseq
        %v3622 = vshrl.u32 %v3621, 7
        %v3623 = vsub.s32 7, %v3622
        %v3624 = vrot.slane %v455, %v3623
        %v3625 = vmul.f32 %v3564, %v2679
        %v3626 = vmul.f32 %v3564, %v2680
        %v3627 = vmul.f32 %v3568, %v2679
        %v3628 = vmul.f32 %v3568, %v2680
        %v3629 = vmul.f32 %v3572, %v2679
        %v3630 = vmul.f32 %v3572, %v2680
        %v3631 = vmul.f32 %v3576, %v2679
        %v3632 = vmul.f32 %v3576, %v2680
        %v3633 = vmul.f32 %v3580, %v2679
        %v3634 = vmul.f32 %v3580, %v2680
        %v3635 = vmul.f32 %v3584, %v2679
        %v3636 = vmul.f32 %v3584, %v2680
        %v3637 = vmul.f32 %v3588, %v2679
        %v3638 = vmul.f32 %v3588, %v2680
        %v3639 = vmul.f32 %v3592, %v2679
        %v3640 = vmul.f32 %v3592, %v2680
        %v3641 = vmul.f32 %v3596, %v2679
        %v3642 = vmul.f32 %v3596, %v2680
        %v3643 = vmul.f32 %v3600, %v2679
        %v3644 = vmul.f32 %v3600, %v2680
        %v3645 = vmul.f32 %v3604, %v2679
        %v3646 = vmul.f32 %v3604, %v2680
        %v3647 = vmul.f32 %v3608, %v2679
        %v3648 = vmul.f32 %v3608, %v2680
        %v3649 = vmul.f32 %v3612, %v2679
        %v3650 = vmul.f32 %v3612, %v2680
        %v3651 = vmul.f32 %v3616, %v2679
        %v3652 = vmul.f32 %v3616, %v2680
        %v3653 = vmul.f32 %v3620, %v2679
        %v3654 = vmul.f32 %v3620, %v2680
        %v3655 = vmul.f32 %v3624, %v2679
        %v3656 = vmul.f32 %v3624, %v2680
        %v3657 = vadd.f32 %v3529, %v3625
        %v3658 = vadd.f32 %v3530, %v3626
        %v3659 = vadd.f32 %v3531, %v3627
        %v3660 = vadd.f32 %v3532, %v3628
        %v3661 = vadd.f32 %v3533, %v3629
        %v3662 = vadd.f32 %v3534, %v3630
        %v3663 = vadd.f32 %v3535, %v3631
        %v3664 = vadd.f32 %v3536, %v3632
        %v3665 = vadd.f32 %v3537, %v3633
        %v3666 = vadd.f32 %v3538, %v3634
        %v3667 = vadd.f32 %v3539, %v3635
        %v3668 = vadd.f32 %v3540, %v3636
        %v3669 = vadd.f32 %v3541, %v3637
        %v3670 = vadd.f32 %v3542, %v3638
        %v3671 = vadd.f32 %v3543, %v3639
        %v3672 = vadd.f32 %v3544, %v3640
        %v3673 = vadd.f32 %v3545, %v3641
        %v3674 = vadd.f32 %v3546, %v3642
        %v3675 = vadd.f32 %v3547, %v3643
        %v3676 = vadd.f32 %v3548, %v3644
        %v3677 = vadd.f32 %v3549, %v3645
        %v3678 = vadd.f32 %v3550, %v3646
        %v3679 = vadd.f32 %v3551, %v3647
        %v3680 = vadd.f32 %v3552, %v3648
        %v3681 = vadd.f32 %v3553, %v3649
        %v3682 = vadd.f32 %v3554, %v3650
        %v3683 = vadd.f32 %v3555, %v3651
        %v3684 = vadd.f32 %v3556, %v3652
        %v3685 = vadd.f32 %v3557, %v3653
        %v3686 = vadd.f32 %v3558, %v3654
        %v3687 = vadd.f32 %v3559, %v3655
        %v3688 = vadd.f32 %v3560, %v3656
        %v3689 = vlaneseq
        %v3690 = vshrl.u32 %v3689, 7
        %v3691 = vsub.s32 0, %v3690
        %v3692 = vrot.slane %v426, %v3691
        %v3693 = vlaneseq
        %v3694 = vshrl.u32 %v3693, 7
        %v3695 = vsub.s32 0, %v3694
        %v3696 = vrot.slane %v428, %v3695
        %v3697 = vlaneseq
        %v3698 = vshrl.u32 %v3697, 7
        %v3699 = vsub.s32 0, %v3698
        %v3700 = vrot.slane %v430, %v3699
        %v3701 = vlaneseq
        %v3702 = vshrl.u32 %v3701, 7
        %v3703 = vsub.s32 0, %v3702
        %v3704 = vrot.slane %v432, %v3703
        %v3705 = vlaneseq
        %v3706 = vshrl.u32 %v3705, 7
        %v3707 = vsub.s32 0, %v3706
        %v3708 = vrot.slane %v434, %v3707
        %v3709 = vlaneseq
        %v3710 = vshrl.u32 %v3709, 7
        %v3711 = vsub.s32 0, %v3710
        %v3712 = vrot.slane %v436, %v3711
        %v3713 = vlaneseq
        %v3714 = vshrl.u32 %v3713, 7
        %v3715 = vsub.s32 0, %v3714
        %v3716 = vrot.slane %v438, %v3715
        %v3717 = vlaneseq
        %v3718 = vshrl.u32 %v3717, 7
        %v3719 = vsub.s32 0, %v3718
        %v3720 = vrot.slane %v440, %v3719
        %v3721 = vlaneseq
        %v3722 = vshrl.u32 %v3721, 7
        %v3723 = vsub.s32 0, %v3722
        %v3724 = vrot.slane %v442, %v3723
        %v3725 = vlaneseq
        %v3726 = vshrl.u32 %v3725, 7
        %v3727 = vsub.s32 0, %v3726
        %v3728 = vrot.slane %v444, %v3727
        %v3729 = vlaneseq
        %v3730 = vshrl.u32 %v3729, 7
        %v3731 = vsub.s32 0, %v3730
        %v3732 = vrot.slane %v446, %v3731
        %v3733 = vlaneseq
        %v3734 = vshrl.u32 %v3733, 7
        %v3735 = vsub.s32 0, %v3734
        %v3736 = vrot.slane %v448, %v3735
        %v3737 = vlaneseq
        %v3738 = vshrl.u32 %v3737, 7
        %v3739 = vsub.s32 0, %v3738
        %v3740 = vrot.slane %v450, %v3739
        %v3741 = vlaneseq
        %v3742 = vshrl.u32 %v3741, 7
        %v3743 = vsub.s32 0, %v3742
        %v3744 = vrot.slane %v452, %v3743
        %v3745 = vlaneseq
        %v3746 = vshrl.u32 %v3745, 7
        %v3747 = vsub.s32 0, %v3746
        %v3748 = vrot.slane %v454, %v3747
        %v3749 = vlaneseq
        %v3750 = vshrl.u32 %v3749, 7
        %v3751 = vsub.s32 0, %v3750
        %v3752 = vrot.slane %v456, %v3751
        %v3753 = vmul.f32 %v3692, %v2681
        %v3754 = vmul.f32 %v3692, %v2682
        %v3755 = vmul.f32 %v3696, %v2681
        %v3756 = vmul.f32 %v3696, %v2682
        %v3757 = vmul.f32 %v3700, %v2681
        %v3758 = vmul.f32 %v3700, %v2682
        %v3759 = vmul.f32 %v3704, %v2681
        %v3760 = vmul.f32 %v3704, %v2682
        %v3761 = vmul.f32 %v3708, %v2681
        %v3762 = vmul.f32 %v3708, %v2682
        %v3763 = vmul.f32 %v3712, %v2681
        %v3764 = vmul.f32 %v3712, %v2682
        %v3765 = vmul.f32 %v3716, %v2681
        %v3766 = vmul.f32 %v3716, %v2682
        %v3767 = vmul.f32 %v3720, %v2681
        %v3768 = vmul.f32 %v3720, %v2682
        %v3769 = vmul.f32 %v3724, %v2681
        %v3770 = vmul.f32 %v3724, %v2682
        %v3771 = vmul.f32 %v3728, %v2681
        %v3772 = vmul.f32 %v3728, %v2682
        %v3773 = vmul.f32 %v3732, %v2681
        %v3774 = vmul.f32 %v3732, %v2682
        %v3775 = vmul.f32 %v3736, %v2681
        %v3776 = vmul.f32 %v3736, %v2682
        %v3777 = vmul.f32 %v3740, %v2681
        %v3778 = vmul.f32 %v3740, %v2682
        %v3779 = vmul.f32 %v3744, %v2681
        %v3780 = vmul.f32 %v3744, %v2682
        %v3781 = vmul.f32 %v3748, %v2681
        %v3782 = vmul.f32 %v3748, %v2682
        %v3783 = vmul.f32 %v3752, %v2681
        %v3784 = vmul.f32 %v3752, %v2682
        %v3785 = vadd.f32 %v3657, %v3753
        %v3786 = vadd.f32 %v3658, %v3754
        %v3787 = vadd.f32 %v3659, %v3755
        %v3788 = vadd.f32 %v3660, %v3756
        %v3789 = vadd.f32 %v3661, %v3757
        %v3790 = vadd.f32 %v3662, %v3758
        %v3791 = vadd.f32 %v3663, %v3759
        %v3792 = vadd.f32 %v3664, %v3760
        %v3793 = vadd.f32 %v3665, %v3761
        %v3794 = vadd.f32 %v3666, %v3762
        %v3795 = vadd.f32 %v3667, %v3763
        %v3796 = vadd.f32 %v3668, %v3764
        %v3797 = vadd.f32 %v3669, %v3765
        %v3798 = vadd.f32 %v3670, %v3766
        %v3799 = vadd.f32 %v3671, %v3767
        %v3800 = vadd.f32 %v3672, %v3768
        %v3801 = vadd.f32 %v3673, %v3769
        %v3802 = vadd.f32 %v3674, %v3770
        %v3803 = vadd.f32 %v3675, %v3771
        %v3804 = vadd.f32 %v3676, %v3772
        %v3805 = vadd.f32 %v3677, %v3773
        %v3806 = vadd.f32 %v3678, %v3774
        %v3807 = vadd.f32 %v3679, %v3775
        %v3808 = vadd.f32 %v3680, %v3776
        %v3809 = vadd.f32 %v3681, %v3777
        %v3810 = vadd.f32 %v3682, %v3778
        %v3811 = vadd.f32 %v3683, %v3779
        %v3812 = vadd.f32 %v3684, %v3780
        %v3813 = vadd.f32 %v3685, %v3781
        %v3814 = vadd.f32 %v3686, %v3782
        %v3815 = vadd.f32 %v3687, %v3783
        %v3816 = vadd.f32 %v3688, %v3784
        %v3817 = vlaneseq
        %v3818 = vshrl.u32 %v3817, 7
        %v3819 = vsub.s32 1, %v3818
        %v3820 = vrot.slane %v426, %v3819
        %v3821 = vlaneseq
        %v3822 = vshrl.u32 %v3821, 7
        %v3823 = vsub.s32 1, %v3822
        %v3824 = vrot.slane %v428, %v3823
        %v3825 = vlaneseq
        %v3826 = vshrl.u32 %v3825, 7
        %v3827 = vsub.s32 1, %v3826
        %v3828 = vrot.slane %v430, %v3827
        %v3829 = vlaneseq
        %v3830 = vshrl.u32 %v3829, 7
        %v3831 = vsub.s32 1, %v3830
        %v3832 = vrot.slane %v432, %v3831
        %v3833 = vlaneseq
        %v3834 = vshrl.u32 %v3833, 7
        %v3835 = vsub.s32 1, %v3834
        %v3836 = vrot.slane %v434, %v3835
        %v3837 = vlaneseq
        %v3838 = vshrl.u32 %v3837, 7
        %v3839 = vsub.s32 1, %v3838
        %v3840 = vrot.slane %v436, %v3839
        %v3841 = vlaneseq
        %v3842 = vshrl.u32 %v3841, 7
        %v3843 = vsub.s32 1, %v3842
        %v3844 = vrot.slane %v438, %v3843
        %v3845 = vlaneseq
        %v3846 = vshrl.u32 %v3845, 7
        %v3847 = vsub.s32 1, %v3846
        %v3848 = vrot.slane %v440, %v3847
        %v3849 = vlaneseq
        %v3850 = vshrl.u32 %v3849, 7
        %v3851 = vsub.s32 1, %v3850
        %v3852 = vrot.slane %v442, %v3851
        %v3853 = vlaneseq
        %v3854 = vshrl.u32 %v3853, 7
        %v3855 = vsub.s32 1, %v3854
        %v3856 = vrot.slane %v444, %v3855
        %v3857 = vlaneseq
        %v3858 = vshrl.u32 %v3857, 7
        %v3859 = vsub.s32 1, %v3858
        %v3860 = vrot.slane %v446, %v3859
        %v3861 = vlaneseq
        %v3862 = vshrl.u32 %v3861, 7
        %v3863 = vsub.s32 1, %v3862
        %v3864 = vrot.slane %v448, %v3863
        %v3865 = vlaneseq
        %v3866 = vshrl.u32 %v3865, 7
        %v3867 = vsub.s32 1, %v3866
        %v3868 = vrot.slane %v450, %v3867
        %v3869 = vlaneseq
        %v3870 = vshrl.u32 %v3869, 7
        %v3871 = vsub.s32 1, %v3870
        %v3872 = vrot.slane %v452, %v3871
        %v3873 = vlaneseq
        %v3874 = vshrl.u32 %v3873, 7
        %v3875 = vsub.s32 1, %v3874
        %v3876 = vrot.slane %v454, %v3875
        %v3877 = vlaneseq
        %v3878 = vshrl.u32 %v3877, 7
        %v3879 = vsub.s32 1, %v3878
        %v3880 = vrot.slane %v456, %v3879
        %v3881 = vmul.f32 %v3820, %v2683
        %v3882 = vmul.f32 %v3820, %v2684
        %v3883 = vmul.f32 %v3824, %v2683
        %v3884 = vmul.f32 %v3824, %v2684
        %v3885 = vmul.f32 %v3828, %v2683
        %v3886 = vmul.f32 %v3828, %v2684
        %v3887 = vmul.f32 %v3832, %v2683
        %v3888 = vmul.f32 %v3832, %v2684
        %v3889 = vmul.f32 %v3836, %v2683
        %v3890 = vmul.f32 %v3836, %v2684
        %v3891 = vmul.f32 %v3840, %v2683
        %v3892 = vmul.f32 %v3840, %v2684
        %v3893 = vmul.f32 %v3844, %v2683
        %v3894 = vmul.f32 %v3844, %v2684
        %v3895 = vmul.f32 %v3848, %v2683
        %v3896 = vmul.f32 %v3848, %v2684
        %v3897 = vmul.f32 %v3852, %v2683
        %v3898 = vmul.f32 %v3852, %v2684
        %v3899 = vmul.f32 %v3856, %v2683
        %v3900 = vmul.f32 %v3856, %v2684
        %v3901 = vmul.f32 %v3860, %v2683
        %v3902 = vmul.f32 %v3860, %v2684
        %v3903 = vmul.f32 %v3864, %v2683
        %v3904 = vmul.f32 %v3864, %v2684
        %v3905 = vmul.f32 %v3868, %v2683
        %v3906 = vmul.f32 %v3868, %v2684
        %v3907 = vmul.f32 %v3872, %v2683
        %v3908 = vmul.f32 %v3872, %v2684
        %v3909 = vmul.f32 %v3876, %v2683
        %v3910 = vmul.f32 %v3876, %v2684
        %v3911 = vmul.f32 %v3880, %v2683
        %v3912 = vmul.f32 %v3880, %v2684
        %v3913 = vadd.f32 %v3785, %v3881
        %v3914 = vadd.f32 %v3786, %v3882
        %v3915 = vadd.f32 %v3787, %v3883
        %v3916 = vadd.f32 %v3788, %v3884
        %v3917 = vadd.f32 %v3789, %v3885
        %v3918 = vadd.f32 %v3790, %v3886
        %v3919 = vadd.f32 %v3791, %v3887
        %v3920 = vadd.f32 %v3792, %v3888
        %v3921 = vadd.f32 %v3793, %v3889
        %v3922 = vadd.f32 %v3794, %v3890
        %v3923 = vadd.f32 %v3795, %v3891
        %v3924 = vadd.f32 %v3796, %v3892
        %v3925 = vadd.f32 %v3797, %v3893
        %v3926 = vadd.f32 %v3798, %v3894
        %v3927 = vadd.f32 %v3799, %v3895
        %v3928 = vadd.f32 %v3800, %v3896
        %v3929 = vadd.f32 %v3801, %v3897
        %v3930 = vadd.f32 %v3802, %v3898
        %v3931 = vadd.f32 %v3803, %v3899
        %v3932 = vadd.f32 %v3804, %v3900
        %v3933 = vadd.f32 %v3805, %v3901
        %v3934 = vadd.f32 %v3806, %v3902
        %v3935 = vadd.f32 %v3807, %v3903
        %v3936 = vadd.f32 %v3808, %v3904
        %v3937 = vadd.f32 %v3809, %v3905
        %v3938 = vadd.f32 %v3810, %v3906
        %v3939 = vadd.f32 %v3811, %v3907
        %v3940 = vadd.f32 %v3812, %v3908
        %v3941 = vadd.f32 %v3813, %v3909
        %v3942 = vadd.f32 %v3814, %v3910
        %v3943 = vadd.f32 %v3815, %v3911
        %v3944 = vadd.f32 %v3816, %v3912
        %v3945 = vlaneseq
        %v3946 = vshrl.u32 %v3945, 7
        %v3947 = vsub.s32 2, %v3946
        %v3948 = vrot.slane %v426, %v3947
        %v3949 = vlaneseq
        %v3950 = vshrl.u32 %v3949, 7
        %v3951 = vsub.s32 2, %v3950
        %v3952 = vrot.slane %v428, %v3951
        %v3953 = vlaneseq
        %v3954 = vshrl.u32 %v3953, 7
        %v3955 = vsub.s32 2, %v3954
        %v3956 = vrot.slane %v430, %v3955
        %v3957 = vlaneseq
        %v3958 = vshrl.u32 %v3957, 7
        %v3959 = vsub.s32 2, %v3958
        %v3960 = vrot.slane %v432, %v3959
        %v3961 = vlaneseq
        %v3962 = vshrl.u32 %v3961, 7
        %v3963 = vsub.s32 2, %v3962
        %v3964 = vrot.slane %v434, %v3963
        %v3965 = vlaneseq
        %v3966 = vshrl.u32 %v3965, 7
        %v3967 = vsub.s32 2, %v3966
        %v3968 = vrot.slane %v436, %v3967
        %v3969 = vlaneseq
        %v3970 = vshrl.u32 %v3969, 7
        %v3971 = vsub.s32 2, %v3970
        %v3972 = vrot.slane %v438, %v3971
        %v3973 = vlaneseq
        %v3974 = vshrl.u32 %v3973, 7
        %v3975 = vsub.s32 2, %v3974
        %v3976 = vrot.slane %v440, %v3975
        %v3977 = vlaneseq
        %v3978 = vshrl.u32 %v3977, 7
        %v3979 = vsub.s32 2, %v3978
        %v3980 = vrot.slane %v442, %v3979
        %v3981 = vlaneseq
        %v3982 = vshrl.u32 %v3981, 7
        %v3983 = vsub.s32 2, %v3982
        %v3984 = vrot.slane %v444, %v3983
        %v3985 = vlaneseq
        %v3986 = vshrl.u32 %v3985, 7
        %v3987 = vsub.s32 2, %v3986
        %v3988 = vrot.slane %v446, %v3987
        %v3989 = vlaneseq
        %v3990 = vshrl.u32 %v3989, 7
        %v3991 = vsub.s32 2, %v3990
        %v3992 = vrot.slane %v448, %v3991
        %v3993 = vlaneseq
        %v3994 = vshrl.u32 %v3993, 7
        %v3995 = vsub.s32 2, %v3994
        %v3996 = vrot.slane %v450, %v3995
        %v3997 = vlaneseq
        %v3998 = vshrl.u32 %v3997, 7
        %v3999 = vsub.s32 2, %v3998
        %v4000 = vrot.slane %v452, %v3999
        %v4001 = vlaneseq
        %v4002 = vshrl.u32 %v4001, 7
        %v4003 = vsub.s32 2, %v4002
        %v4004 = vrot.slane %v454, %v4003
        %v4005 = vlaneseq
        %v4006 = vshrl.u32 %v4005, 7
        %v4007 = vsub.s32 2, %v4006
        %v4008 = vrot.slane %v456, %v4007
        %v4009 = vmul.f32 %v3948, %v2685
        %v4010 = vmul.f32 %v3948, %v2686
        %v4011 = vmul.f32 %v3952, %v2685
        %v4012 = vmul.f32 %v3952, %v2686
        %v4013 = vmul.f32 %v3956, %v2685
        %v4014 = vmul.f32 %v3956, %v2686
        %v4015 = vmul.f32 %v3960, %v2685
        %v4016 = vmul.f32 %v3960, %v2686
        %v4017 = vmul.f32 %v3964, %v2685
        %v4018 = vmul.f32 %v3964, %v2686
        %v4019 = vmul.f32 %v3968, %v2685
        %v4020 = vmul.f32 %v3968, %v2686
        %v4021 = vmul.f32 %v3972, %v2685
        %v4022 = vmul.f32 %v3972, %v2686
        %v4023 = vmul.f32 %v3976, %v2685
        %v4024 = vmul.f32 %v3976, %v2686
        %v4025 = vmul.f32 %v3980, %v2685
        %v4026 = vmul.f32 %v3980, %v2686
        %v4027 = vmul.f32 %v3984, %v2685
        %v4028 = vmul.f32 %v3984, %v2686
        %v4029 = vmul.f32 %v3988, %v2685
        %v4030 = vmul.f32 %v3988, %v2686
        %v4031 = vmul.f32 %v3992, %v2685
        %v4032 = vmul.f32 %v3992, %v2686
        %v4033 = vmul.f32 %v3996, %v2685
        %v4034 = vmul.f32 %v3996, %v2686
        %v4035 = vmul.f32 %v4000, %v2685
        %v4036 = vmul.f32 %v4000, %v2686
        %v4037 = vmul.f32 %v4004, %v2685
        %v4038 = vmul.f32 %v4004, %v2686
        %v4039 = vmul.f32 %v4008, %v2685
        %v4040 = vmul.f32 %v4008, %v2686
        %v4041 = vadd.f32 %v3913, %v4009
        %v4042 = vadd.f32 %v3914, %v4010
        %v4043 = vadd.f32 %v3915, %v4011
        %v4044 = vadd.f32 %v3916, %v4012
        %v4045 = vadd.f32 %v3917, %v4013
        %v4046 = vadd.f32 %v3918, %v4014
        %v4047 = vadd.f32 %v3919, %v4015
        %v4048 = vadd.f32 %v3920, %v4016
        %v4049 = vadd.f32 %v3921, %v4017
        %v4050 = vadd.f32 %v3922, %v4018
        %v4051 = vadd.f32 %v3923, %v4019
        %v4052 = vadd.f32 %v3924, %v4020
        %v4053 = vadd.f32 %v3925, %v4021
        %v4054 = vadd.f32 %v3926, %v4022
        %v4055 = vadd.f32 %v3927, %v4023
        %v4056 = vadd.f32 %v3928, %v4024
        %v4057 = vadd.f32 %v3929, %v4025
        %v4058 = vadd.f32 %v3930, %v4026
        %v4059 = vadd.f32 %v3931, %v4027
        %v4060 = vadd.f32 %v3932, %v4028
        %v4061 = vadd.f32 %v3933, %v4029
        %v4062 = vadd.f32 %v3934, %v4030
        %v4063 = vadd.f32 %v3935, %v4031
        %v4064 = vadd.f32 %v3936, %v4032
        %v4065 = vadd.f32 %v3937, %v4033
        %v4066 = vadd.f32 %v3938, %v4034
        %v4067 = vadd.f32 %v3939, %v4035
        %v4068 = vadd.f32 %v3940, %v4036
        %v4069 = vadd.f32 %v3941, %v4037
        %v4070 = vadd.f32 %v3942, %v4038
        %v4071 = vadd.f32 %v3943, %v4039
        %v4072 = vadd.f32 %v3944, %v4040
        %v4073 = vlaneseq
        %v4074 = vshrl.u32 %v4073, 7
        %v4075 = vsub.s32 3, %v4074
        %v4076 = vrot.slane %v426, %v4075
        %v4077 = vlaneseq
        %v4078 = vshrl.u32 %v4077, 7
        %v4079 = vsub.s32 3, %v4078
        %v4080 = vrot.slane %v428, %v4079
        %v4081 = vlaneseq
        %v4082 = vshrl.u32 %v4081, 7
        %v4083 = vsub.s32 3, %v4082
        %v4084 = vrot.slane %v430, %v4083
        %v4085 = vlaneseq
        %v4086 = vshrl.u32 %v4085, 7
        %v4087 = vsub.s32 3, %v4086
        %v4088 = vrot.slane %v432, %v4087
        %v4089 = vlaneseq
        %v4090 = vshrl.u32 %v4089, 7
        %v4091 = vsub.s32 3, %v4090
        %v4092 = vrot.slane %v434, %v4091
        %v4093 = vlaneseq
        %v4094 = vshrl.u32 %v4093, 7
        %v4095 = vsub.s32 3, %v4094
        %v4096 = vrot.slane %v436, %v4095
        %v4097 = vlaneseq
        %v4098 = vshrl.u32 %v4097, 7
        %v4099 = vsub.s32 3, %v4098
        %v4100 = vrot.slane %v438, %v4099
        %v4101 = vlaneseq
        %v4102 = vshrl.u32 %v4101, 7
        %v4103 = vsub.s32 3, %v4102
        %v4104 = vrot.slane %v440, %v4103
        %v4105 = vlaneseq
        %v4106 = vshrl.u32 %v4105, 7
        %v4107 = vsub.s32 3, %v4106
        %v4108 = vrot.slane %v442, %v4107
        %v4109 = vlaneseq
        %v4110 = vshrl.u32 %v4109, 7
        %v4111 = vsub.s32 3, %v4110
        %v4112 = vrot.slane %v444, %v4111
        %v4113 = vlaneseq
        %v4114 = vshrl.u32 %v4113, 7
        %v4115 = vsub.s32 3, %v4114
        %v4116 = vrot.slane %v446, %v4115
        %v4117 = vlaneseq
        %v4118 = vshrl.u32 %v4117, 7
        %v4119 = vsub.s32 3, %v4118
        %v4120 = vrot.slane %v448, %v4119
        %v4121 = vlaneseq
        %v4122 = vshrl.u32 %v4121, 7
        %v4123 = vsub.s32 3, %v4122
        %v4124 = vrot.slane %v450, %v4123
        %v4125 = vlaneseq
        %v4126 = vshrl.u32 %v4125, 7
        %v4127 = vsub.s32 3, %v4126
        %v4128 = vrot.slane %v452, %v4127
        %v4129 = vlaneseq
        %v4130 = vshrl.u32 %v4129, 7
        %v4131 = vsub.s32 3, %v4130
        %v4132 = vrot.slane %v454, %v4131
        %v4133 = vlaneseq
        %v4134 = vshrl.u32 %v4133, 7
        %v4135 = vsub.s32 3, %v4134
        %v4136 = vrot.slane %v456, %v4135
        %v4137 = vmul.f32 %v4076, %v2687
        %v4138 = vmul.f32 %v4076, %v2688
        %v4139 = vmul.f32 %v4080, %v2687
        %v4140 = vmul.f32 %v4080, %v2688
        %v4141 = vmul.f32 %v4084, %v2687
        %v4142 = vmul.f32 %v4084, %v2688
        %v4143 = vmul.f32 %v4088, %v2687
        %v4144 = vmul.f32 %v4088, %v2688
        %v4145 = vmul.f32 %v4092, %v2687
        %v4146 = vmul.f32 %v4092, %v2688
        %v4147 = vmul.f32 %v4096, %v2687
        %v4148 = vmul.f32 %v4096, %v2688
        %v4149 = vmul.f32 %v4100, %v2687
        %v4150 = vmul.f32 %v4100, %v2688
        %v4151 = vmul.f32 %v4104, %v2687
        %v4152 = vmul.f32 %v4104, %v2688
        %v4153 = vmul.f32 %v4108, %v2687
        %v4154 = vmul.f32 %v4108, %v2688
        %v4155 = vmul.f32 %v4112, %v2687
        %v4156 = vmul.f32 %v4112, %v2688
        %v4157 = vmul.f32 %v4116, %v2687
        %v4158 = vmul.f32 %v4116, %v2688
        %v4159 = vmul.f32 %v4120, %v2687
        %v4160 = vmul.f32 %v4120, %v2688
        %v4161 = vmul.f32 %v4124, %v2687
        %v4162 = vmul.f32 %v4124, %v2688
        %v4163 = vmul.f32 %v4128, %v2687
        %v4164 = vmul.f32 %v4128, %v2688
        %v4165 = vmul.f32 %v4132, %v2687
        %v4166 = vmul.f32 %v4132, %v2688
        %v4167 = vmul.f32 %v4136, %v2687
        %v4168 = vmul.f32 %v4136, %v2688
        %v4169 = vadd.f32 %v4041, %v4137
        %v4170 = vadd.f32 %v4042, %v4138
        %v4171 = vadd.f32 %v4043, %v4139
        %v4172 = vadd.f32 %v4044, %v4140
        %v4173 = vadd.f32 %v4045, %v4141
        %v4174 = vadd.f32 %v4046, %v4142
        %v4175 = vadd.f32 %v4047, %v4143
        %v4176 = vadd.f32 %v4048, %v4144
        %v4177 = vadd.f32 %v4049, %v4145
        %v4178 = vadd.f32 %v4050, %v4146
        %v4179 = vadd.f32 %v4051, %v4147
        %v4180 = vadd.f32 %v4052, %v4148
        %v4181 = vadd.f32 %v4053, %v4149
        %v4182 = vadd.f32 %v4054, %v4150
        %v4183 = vadd.f32 %v4055, %v4151
        %v4184 = vadd.f32 %v4056, %v4152
        %v4185 = vadd.f32 %v4057, %v4153
        %v4186 = vadd.f32 %v4058, %v4154
        %v4187 = vadd.f32 %v4059, %v4155
        %v4188 = vadd.f32 %v4060, %v4156
        %v4189 = vadd.f32 %v4061, %v4157
        %v4190 = vadd.f32 %v4062, %v4158
        %v4191 = vadd.f32 %v4063, %v4159
        %v4192 = vadd.f32 %v4064, %v4160
        %v4193 = vadd.f32 %v4065, %v4161
        %v4194 = vadd.f32 %v4066, %v4162
        %v4195 = vadd.f32 %v4067, %v4163
        %v4196 = vadd.f32 %v4068, %v4164
        %v4197 = vadd.f32 %v4069, %v4165
        %v4198 = vadd.f32 %v4070, %v4166
        %v4199 = vadd.f32 %v4071, %v4167
        %v4200 = vadd.f32 %v4072, %v4168
        %v4201 = vlaneseq
        %v4202 = vshrl.u32 %v4201, 7
        %v4203 = vsub.s32 4, %v4202
        %v4204 = vrot.slane %v426, %v4203
        %v4205 = vlaneseq
        %v4206 = vshrl.u32 %v4205, 7
        %v4207 = vsub.s32 4, %v4206
        %v4208 = vrot.slane %v428, %v4207
        %v4209 = vlaneseq
        %v4210 = vshrl.u32 %v4209, 7
        %v4211 = vsub.s32 4, %v4210
        %v4212 = vrot.slane %v430, %v4211
        %v4213 = vlaneseq
        %v4214 = vshrl.u32 %v4213, 7
        %v4215 = vsub.s32 4, %v4214
        %v4216 = vrot.slane %v432, %v4215
        %v4217 = vlaneseq
        %v4218 = vshrl.u32 %v4217, 7
        %v4219 = vsub.s32 4, %v4218
        %v4220 = vrot.slane %v434, %v4219
        %v4221 = vlaneseq
        %v4222 = vshrl.u32 %v4221, 7
        %v4223 = vsub.s32 4, %v4222
        %v4224 = vrot.slane %v436, %v4223
        %v4225 = vlaneseq
        %v4226 = vshrl.u32 %v4225, 7
        %v4227 = vsub.s32 4, %v4226
        %v4228 = vrot.slane %v438, %v4227
        %v4229 = vlaneseq
        %v4230 = vshrl.u32 %v4229, 7
        %v4231 = vsub.s32 4, %v4230
        %v4232 = vrot.slane %v440, %v4231
        %v4233 = vlaneseq
        %v4234 = vshrl.u32 %v4233, 7
        %v4235 = vsub.s32 4, %v4234
        %v4236 = vrot.slane %v442, %v4235
        %v4237 = vlaneseq
        %v4238 = vshrl.u32 %v4237, 7
        %v4239 = vsub.s32 4, %v4238
        %v4240 = vrot.slane %v444, %v4239
        %v4241 = vlaneseq
        %v4242 = vshrl.u32 %v4241, 7
        %v4243 = vsub.s32 4, %v4242
        %v4244 = vrot.slane %v446, %v4243
        %v4245 = vlaneseq
        %v4246 = vshrl.u32 %v4245, 7
        %v4247 = vsub.s32 4, %v4246
        %v4248 = vrot.slane %v448, %v4247
        %v4249 = vlaneseq
        %v4250 = vshrl.u32 %v4249, 7
        %v4251 = vsub.s32 4, %v4250
        %v4252 = vrot.slane %v450, %v4251
        %v4253 = vlaneseq
        %v4254 = vshrl.u32 %v4253, 7
        %v4255 = vsub.s32 4, %v4254
        %v4256 = vrot.slane %v452, %v4255
        %v4257 = vlaneseq
        %v4258 = vshrl.u32 %v4257, 7
        %v4259 = vsub.s32 4, %v4258
        %v4260 = vrot.slane %v454, %v4259
        %v4261 = vlaneseq
        %v4262 = vshrl.u32 %v4261, 7
        %v4263 = vsub.s32 4, %v4262
        %v4264 = vrot.slane %v456, %v4263
        %v4265 = vmul.f32 %v4204, %v2689
        %v4266 = vmul.f32 %v4204, %v2690
        %v4267 = vmul.f32 %v4208, %v2689
        %v4268 = vmul.f32 %v4208, %v2690
        %v4269 = vmul.f32 %v4212, %v2689
        %v4270 = vmul.f32 %v4212, %v2690
        %v4271 = vmul.f32 %v4216, %v2689
        %v4272 = vmul.f32 %v4216, %v2690
        %v4273 = vmul.f32 %v4220, %v2689
        %v4274 = vmul.f32 %v4220, %v2690
        %v4275 = vmul.f32 %v4224, %v2689
        %v4276 = vmul.f32 %v4224, %v2690
        %v4277 = vmul.f32 %v4228, %v2689
        %v4278 = vmul.f32 %v4228, %v2690
        %v4279 = vmul.f32 %v4232, %v2689
        %v4280 = vmul.f32 %v4232, %v2690
        %v4281 = vmul.f32 %v4236, %v2689
        %v4282 = vmul.f32 %v4236, %v2690
        %v4283 = vmul.f32 %v4240, %v2689
        %v4284 = vmul.f32 %v4240, %v2690
        %v4285 = vmul.f32 %v4244, %v2689
        %v4286 = vmul.f32 %v4244, %v2690
        %v4287 = vmul.f32 %v4248, %v2689
        %v4288 = vmul.f32 %v4248, %v2690
        %v4289 = vmul.f32 %v4252, %v2689
        %v4290 = vmul.f32 %v4252, %v2690
        %v4291 = vmul.f32 %v4256, %v2689
        %v4292 = vmul.f32 %v4256, %v2690
        %v4293 = vmul.f32 %v4260, %v2689
        %v4294 = vmul.f32 %v4260, %v2690
        %v4295 = vmul.f32 %v4264, %v2689
        %v4296 = vmul.f32 %v4264, %v2690
        %v4297 = vadd.f32 %v4169, %v4265
        %v4298 = vadd.f32 %v4170, %v4266
        %v4299 = vadd.f32 %v4171, %v4267
        %v4300 = vadd.f32 %v4172, %v4268
        %v4301 = vadd.f32 %v4173, %v4269
        %v4302 = vadd.f32 %v4174, %v4270
        %v4303 = vadd.f32 %v4175, %v4271
        %v4304 = vadd.f32 %v4176, %v4272
        %v4305 = vadd.f32 %v4177, %v4273
        %v4306 = vadd.f32 %v4178, %v4274
        %v4307 = vadd.f32 %v4179, %v4275
        %v4308 = vadd.f32 %v4180, %v4276
        %v4309 = vadd.f32 %v4181, %v4277
        %v4310 = vadd.f32 %v4182, %v4278
        %v4311 = vadd.f32 %v4183, %v4279
        %v4312 = vadd.f32 %v4184, %v4280
        %v4313 = vadd.f32 %v4185, %v4281
        %v4314 = vadd.f32 %v4186, %v4282
        %v4315 = vadd.f32 %v4187, %v4283
        %v4316 = vadd.f32 %v4188, %v4284
        %v4317 = vadd.f32 %v4189, %v4285
        %v4318 = vadd.f32 %v4190, %v4286
        %v4319 = vadd.f32 %v4191, %v4287
        %v4320 = vadd.f32 %v4192, %v4288
        %v4321 = vadd.f32 %v4193, %v4289
        %v4322 = vadd.f32 %v4194, %v4290
        %v4323 = vadd.f32 %v4195, %v4291
        %v4324 = vadd.f32 %v4196, %v4292
        %v4325 = vadd.f32 %v4197, %v4293
        %v4326 = vadd.f32 %v4198, %v4294
        %v4327 = vadd.f32 %v4199, %v4295
        %v4328 = vadd.f32 %v4200, %v4296
        %v4329 = vlaneseq
        %v4330 = vshrl.u32 %v4329, 7
        %v4331 = vsub.s32 5, %v4330
        %v4332 = vrot.slane %v426, %v4331
        %v4333 = vlaneseq
        %v4334 = vshrl.u32 %v4333, 7
        %v4335 = vsub.s32 5, %v4334
        %v4336 = vrot.slane %v428, %v4335
        %v4337 = vlaneseq
        %v4338 = vshrl.u32 %v4337, 7
        %v4339 = vsub.s32 5, %v4338
        %v4340 = vrot.slane %v430, %v4339
        %v4341 = vlaneseq
        %v4342 = vshrl.u32 %v4341, 7
        %v4343 = vsub.s32 5, %v4342
        %v4344 = vrot.slane %v432, %v4343
        %v4345 = vlaneseq
        %v4346 = vshrl.u32 %v4345, 7
        %v4347 = vsub.s32 5, %v4346
        %v4348 = vrot.slane %v434, %v4347
        %v4349 = vlaneseq
        %v4350 = vshrl.u32 %v4349, 7
        %v4351 = vsub.s32 5, %v4350
        %v4352 = vrot.slane %v436, %v4351
        %v4353 = vlaneseq
        %v4354 = vshrl.u32 %v4353, 7
        %v4355 = vsub.s32 5, %v4354
        %v4356 = vrot.slane %v438, %v4355
        %v4357 = vlaneseq
        %v4358 = vshrl.u32 %v4357, 7
        %v4359 = vsub.s32 5, %v4358
        %v4360 = vrot.slane %v440, %v4359
        %v4361 = vlaneseq
        %v4362 = vshrl.u32 %v4361, 7
        %v4363 = vsub.s32 5, %v4362
        %v4364 = vrot.slane %v442, %v4363
        %v4365 = vlaneseq
        %v4366 = vshrl.u32 %v4365, 7
        %v4367 = vsub.s32 5, %v4366
        %v4368 = vrot.slane %v444, %v4367
        %v4369 = vlaneseq
        %v4370 = vshrl.u32 %v4369, 7
        %v4371 = vsub.s32 5, %v4370
        %v4372 = vrot.slane %v446, %v4371
        %v4373 = vlaneseq
        %v4374 = vshrl.u32 %v4373, 7
        %v4375 = vsub.s32 5, %v4374
        %v4376 = vrot.slane %v448, %v4375
        %v4377 = vlaneseq
        %v4378 = vshrl.u32 %v4377, 7
        %v4379 = vsub.s32 5, %v4378
        %v4380 = vrot.slane %v450, %v4379
        %v4381 = vlaneseq
        %v4382 = vshrl.u32 %v4381, 7
        %v4383 = vsub.s32 5, %v4382
        %v4384 = vrot.slane %v452, %v4383
        %v4385 = vlaneseq
        %v4386 = vshrl.u32 %v4385, 7
        %v4387 = vsub.s32 5, %v4386
        %v4388 = vrot.slane %v454, %v4387
        %v4389 = vlaneseq
        %v4390 = vshrl.u32 %v4389, 7
        %v4391 = vsub.s32 5, %v4390
        %v4392 = vrot.slane %v456, %v4391
        %v4393 = vmul.f32 %v4332, %v2691
        %v4394 = vmul.f32 %v4332, %v2692
        %v4395 = vmul.f32 %v4336, %v2691
        %v4396 = vmul.f32 %v4336, %v2692
        %v4397 = vmul.f32 %v4340, %v2691
        %v4398 = vmul.f32 %v4340, %v2692
        %v4399 = vmul.f32 %v4344, %v2691
        %v4400 = vmul.f32 %v4344, %v2692
        %v4401 = vmul.f32 %v4348, %v2691
        %v4402 = vmul.f32 %v4348, %v2692
        %v4403 = vmul.f32 %v4352, %v2691
        %v4404 = vmul.f32 %v4352, %v2692
        %v4405 = vmul.f32 %v4356, %v2691
        %v4406 = vmul.f32 %v4356, %v2692
        %v4407 = vmul.f32 %v4360, %v2691
        %v4408 = vmul.f32 %v4360, %v2692
        %v4409 = vmul.f32 %v4364, %v2691
        %v4410 = vmul.f32 %v4364, %v2692
        %v4411 = vmul.f32 %v4368, %v2691
        %v4412 = vmul.f32 %v4368, %v2692
        %v4413 = vmul.f32 %v4372, %v2691
        %v4414 = vmul.f32 %v4372, %v2692
        %v4415 = vmul.f32 %v4376, %v2691
        %v4416 = vmul.f32 %v4376, %v2692
        %v4417 = vmul.f32 %v4380, %v2691
        %v4418 = vmul.f32 %v4380, %v2692
        %v4419 = vmul.f32 %v4384, %v2691
        %v4420 = vmul.f32 %v4384, %v2692
        %v4421 = vmul.f32 %v4388, %v2691
        %v4422 = vmul.f32 %v4388, %v2692
        %v4423 = vmul.f32 %v4392, %v2691
        %v4424 = vmul.f32 %v4392, %v2692
        %v4425 = vadd.f32 %v4297, %v4393
        %v4426 = vadd.f32 %v4298, %v4394
        %v4427 = vadd.f32 %v4299, %v4395
        %v4428 = vadd.f32 %v4300, %v4396
        %v4429 = vadd.f32 %v4301, %v4397
        %v4430 = vadd.f32 %v4302, %v4398
        %v4431 = vadd.f32 %v4303, %v4399
        %v4432 = vadd.f32 %v4304, %v4400
        %v4433 = vadd.f32 %v4305, %v4401
        %v4434 = vadd.f32 %v4306, %v4402
        %v4435 = vadd.f32 %v4307, %v4403
        %v4436 = vadd.f32 %v4308, %v4404
        %v4437 = vadd.f32 %v4309, %v4405
        %v4438 = vadd.f32 %v4310, %v4406
        %v4439 = vadd.f32 %v4311, %v4407
        %v4440 = vadd.f32 %v4312, %v4408
        %v4441 = vadd.f32 %v4313, %v4409
        %v4442 = vadd.f32 %v4314, %v4410
        %v4443 = vadd.f32 %v4315, %v4411
        %v4444 = vadd.f32 %v4316, %v4412
        %v4445 = vadd.f32 %v4317, %v4413
        %v4446 = vadd.f32 %v4318, %v4414
        %v4447 = vadd.f32 %v4319, %v4415
        %v4448 = vadd.f32 %v4320, %v4416
        %v4449 = vadd.f32 %v4321, %v4417
        %v4450 = vadd.f32 %v4322, %v4418
        %v4451 = vadd.f32 %v4323, %v4419
        %v4452 = vadd.f32 %v4324, %v4420
        %v4453 = vadd.f32 %v4325, %v4421
        %v4454 = vadd.f32 %v4326, %v4422
        %v4455 = vadd.f32 %v4327, %v4423
        %v4456 = vadd.f32 %v4328, %v4424
        %v4457 = vlaneseq
        %v4458 = vshrl.u32 %v4457, 7
        %v4459 = vsub.s32 6, %v4458
        %v4460 = vrot.slane %v426, %v4459
        %v4461 = vlaneseq
        %v4462 = vshrl.u32 %v4461, 7
        %v4463 = vsub.s32 6, %v4462
        %v4464 = vrot.slane %v428, %v4463
        %v4465 = vlaneseq
        %v4466 = vshrl.u32 %v4465, 7
        %v4467 = vsub.s32 6, %v4466
        %v4468 = vrot.slane %v430, %v4467
        %v4469 = vlaneseq
        %v4470 = vshrl.u32 %v4469, 7
        %v4471 = vsub.s32 6, %v4470
        %v4472 = vrot.slane %v432, %v4471
        %v4473 = vlaneseq
        %v4474 = vshrl.u32 %v4473, 7
        %v4475 = vsub.s32 6, %v4474
        %v4476 = vrot.slane %v434, %v4475
        %v4477 = vlaneseq
        %v4478 = vshrl.u32 %v4477, 7
        %v4479 = vsub.s32 6, %v4478
        %v4480 = vrot.slane %v436, %v4479
        %v4481 = vlaneseq
        %v4482 = vshrl.u32 %v4481, 7
        %v4483 = vsub.s32 6, %v4482
        %v4484 = vrot.slane %v438, %v4483
        %v4485 = vlaneseq
        %v4486 = vshrl.u32 %v4485, 7
        %v4487 = vsub.s32 6, %v4486
        %v4488 = vrot.slane %v440, %v4487
        %v4489 = vlaneseq
        %v4490 = vshrl.u32 %v4489, 7
        %v4491 = vsub.s32 6, %v4490
        %v4492 = vrot.slane %v442, %v4491
        %v4493 = vlaneseq
        %v4494 = vshrl.u32 %v4493, 7
        %v4495 = vsub.s32 6, %v4494
        %v4496 = vrot.slane %v444, %v4495
        %v4497 = vlaneseq
        %v4498 = vshrl.u32 %v4497, 7
        %v4499 = vsub.s32 6, %v4498
        %v4500 = vrot.slane %v446, %v4499
        %v4501 = vlaneseq
        %v4502 = vshrl.u32 %v4501, 7
        %v4503 = vsub.s32 6, %v4502
        %v4504 = vrot.slane %v448, %v4503
        %v4505 = vlaneseq
        %v4506 = vshrl.u32 %v4505, 7
        %v4507 = vsub.s32 6, %v4506
        %v4508 = vrot.slane %v450, %v4507
        %v4509 = vlaneseq
        %v4510 = vshrl.u32 %v4509, 7
        %v4511 = vsub.s32 6, %v4510
        %v4512 = vrot.slane %v452, %v4511
        %v4513 = vlaneseq
        %v4514 = vshrl.u32 %v4513, 7
        %v4515 = vsub.s32 6, %v4514
        %v4516 = vrot.slane %v454, %v4515
        %v4517 = vlaneseq
        %v4518 = vshrl.u32 %v4517, 7
        %v4519 = vsub.s32 6, %v4518
        %v4520 = vrot.slane %v456, %v4519
        %v4521 = vmul.f32 %v4460, %v2693
        %v4522 = vmul.f32 %v4460, %v2694
        %v4523 = vmul.f32 %v4464, %v2693
        %v4524 = vmul.f32 %v4464, %v2694
        %v4525 = vmul.f32 %v4468, %v2693
        %v4526 = vmul.f32 %v4468, %v2694
        %v4527 = vmul.f32 %v4472, %v2693
        %v4528 = vmul.f32 %v4472, %v2694
        %v4529 = vmul.f32 %v4476, %v2693
        %v4530 = vmul.f32 %v4476, %v2694
        %v4531 = vmul.f32 %v4480, %v2693
        %v4532 = vmul.f32 %v4480, %v2694
        %v4533 = vmul.f32 %v4484, %v2693
        %v4534 = vmul.f32 %v4484, %v2694
        %v4535 = vmul.f32 %v4488, %v2693
        %v4536 = vmul.f32 %v4488, %v2694
        %v4537 = vmul.f32 %v4492, %v2693
        %v4538 = vmul.f32 %v4492, %v2694
        %v4539 = vmul.f32 %v4496, %v2693
        %v4540 = vmul.f32 %v4496, %v2694
        %v4541 = vmul.f32 %v4500, %v2693
        %v4542 = vmul.f32 %v4500, %v2694
        %v4543 = vmul.f32 %v4504, %v2693
        %v4544 = vmul.f32 %v4504, %v2694
        %v4545 = vmul.f32 %v4508, %v2693
        %v4546 = vmul.f32 %v4508, %v2694
        %v4547 = vmul.f32 %v4512, %v2693
        %v4548 = vmul.f32 %v4512, %v2694
        %v4549 = vmul.f32 %v4516, %v2693
        %v4550 = vmul.f32 %v4516, %v2694
        %v4551 = vmul.f32 %v4520, %v2693
        %v4552 = vmul.f32 %v4520, %v2694
        %v4553 = vadd.f32 %v4425, %v4521
        %v4554 = vadd.f32 %v4426, %v4522
        %v4555 = vadd.f32 %v4427, %v4523
        %v4556 = vadd.f32 %v4428, %v4524
        %v4557 = vadd.f32 %v4429, %v4525
        %v4558 = vadd.f32 %v4430, %v4526
        %v4559 = vadd.f32 %v4431, %v4527
        %v4560 = vadd.f32 %v4432, %v4528
        %v4561 = vadd.f32 %v4433, %v4529
        %v4562 = vadd.f32 %v4434, %v4530
        %v4563 = vadd.f32 %v4435, %v4531
        %v4564 = vadd.f32 %v4436, %v4532
        %v4565 = vadd.f32 %v4437, %v4533
        %v4566 = vadd.f32 %v4438, %v4534
        %v4567 = vadd.f32 %v4439, %v4535
        %v4568 = vadd.f32 %v4440, %v4536
        %v4569 = vadd.f32 %v4441, %v4537
        %v4570 = vadd.f32 %v4442, %v4538
        %v4571 = vadd.f32 %v4443, %v4539
        %v4572 = vadd.f32 %v4444, %v4540
        %v4573 = vadd.f32 %v4445, %v4541
        %v4574 = vadd.f32 %v4446, %v4542
        %v4575 = vadd.f32 %v4447, %v4543
        %v4576 = vadd.f32 %v4448, %v4544
        %v4577 = vadd.f32 %v4449, %v4545
        %v4578 = vadd.f32 %v4450, %v4546
        %v4579 = vadd.f32 %v4451, %v4547
        %v4580 = vadd.f32 %v4452, %v4548
        %v4581 = vadd.f32 %v4453, %v4549
        %v4582 = vadd.f32 %v4454, %v4550
        %v4583 = vadd.f32 %v4455, %v4551
        %v4584 = vadd.f32 %v4456, %v4552
        %v4585 = vlaneseq
        %v4586 = vshrl.u32 %v4585, 7
        %v4587 = vsub.s32 7, %v4586
        %v4588 = vrot.slane %v426, %v4587
        %v4589 = vlaneseq
        %v4590 = vshrl.u32 %v4589, 7
        %v4591 = vsub.s32 7, %v4590
        %v4592 = vrot.slane %v428, %v4591
        %v4593 = vlaneseq
        %v4594 = vshrl.u32 %v4593, 7
        %v4595 = vsub.s32 7, %v4594
        %v4596 = vrot.slane %v430, %v4595
        %v4597 = vlaneseq
        %v4598 = vshrl.u32 %v4597, 7
        %v4599 = vsub.s32 7, %v4598
        %v4600 = vrot.slane %v432, %v4599
        %v4601 = vlaneseq
        %v4602 = vshrl.u32 %v4601, 7
        %v4603 = vsub.s32 7, %v4602
        %v4604 = vrot.slane %v434, %v4603
        %v4605 = vlaneseq
        %v4606 = vshrl.u32 %v4605, 7
        %v4607 = vsub.s32 7, %v4606
        %v4608 = vrot.slane %v436, %v4607
        %v4609 = vlaneseq
        %v4610 = vshrl.u32 %v4609, 7
        %v4611 = vsub.s32 7, %v4610
        %v4612 = vrot.slane %v438, %v4611
        %v4613 = vlaneseq
        %v4614 = vshrl.u32 %v4613, 7
        %v4615 = vsub.s32 7, %v4614
        %v4616 = vrot.slane %v440, %v4615
        %v4617 = vlaneseq
        %v4618 = vshrl.u32 %v4617, 7
        %v4619 = vsub.s32 7, %v4618
        %v4620 = vrot.slane %v442, %v4619
        %v4621 = vlaneseq
        %v4622 = vshrl.u32 %v4621, 7
        %v4623 = vsub.s32 7, %v4622
        %v4624 = vrot.slane %v444, %v4623
        %v4625 = vlaneseq
        %v4626 = vshrl.u32 %v4625, 7
        %v4627 = vsub.s32 7, %v4626
        %v4628 = vrot.slane %v446, %v4627
        %v4629 = vlaneseq
        %v4630 = vshrl.u32 %v4629, 7
        %v4631 = vsub.s32 7, %v4630
        %v4632 = vrot.slane %v448, %v4631
        %v4633 = vlaneseq
        %v4634 = vshrl.u32 %v4633, 7
        %v4635 = vsub.s32 7, %v4634
        %v4636 = vrot.slane %v450, %v4635
        %v4637 = vlaneseq
        %v4638 = vshrl.u32 %v4637, 7
        %v4639 = vsub.s32 7, %v4638
        %v4640 = vrot.slane %v452, %v4639
        %v4641 = vlaneseq
        %v4642 = vshrl.u32 %v4641, 7
        %v4643 = vsub.s32 7, %v4642
        %v4644 = vrot.slane %v454, %v4643
        %v4645 = vlaneseq
        %v4646 = vshrl.u32 %v4645, 7
        %v4647 = vsub.s32 7, %v4646
        %v4648 = vrot.slane %v456, %v4647
        %v4649 = vmul.f32 %v4588, %v2695
        %v4650 = vmul.f32 %v4588, %v2696
        %v4651 = vmul.f32 %v4592, %v2695
        %v4652 = vmul.f32 %v4592, %v2696
        %v4653 = vmul.f32 %v4596, %v2695
        %v4654 = vmul.f32 %v4596, %v2696
        %v4655 = vmul.f32 %v4600, %v2695
        %v4656 = vmul.f32 %v4600, %v2696
        %v4657 = vmul.f32 %v4604, %v2695
        %v4658 = vmul.f32 %v4604, %v2696
        %v4659 = vmul.f32 %v4608, %v2695
        %v4660 = vmul.f32 %v4608, %v2696
        %v4661 = vmul.f32 %v4612, %v2695
        %v4662 = vmul.f32 %v4612, %v2696
        %v4663 = vmul.f32 %v4616, %v2695
        %v4664 = vmul.f32 %v4616, %v2696
        %v4665 = vmul.f32 %v4620, %v2695
        %v4666 = vmul.f32 %v4620, %v2696
        %v4667 = vmul.f32 %v4624, %v2695
        %v4668 = vmul.f32 %v4624, %v2696
        %v4669 = vmul.f32 %v4628, %v2695
        %v4670 = vmul.f32 %v4628, %v2696
        %v4671 = vmul.f32 %v4632, %v2695
        %v4672 = vmul.f32 %v4632, %v2696
        %v4673 = vmul.f32 %v4636, %v2695
        %v4674 = vmul.f32 %v4636, %v2696
        %v4675 = vmul.f32 %v4640, %v2695
        %v4676 = vmul.f32 %v4640, %v2696
        %v4677 = vmul.f32 %v4644, %v2695
        %v4678 = vmul.f32 %v4644, %v2696
        %v4679 = vmul.f32 %v4648, %v2695
        %v4680 = vmul.f32 %v4648, %v2696
        %v4681 = vadd.f32 %v4553, %v4649
        %v4682 = vadd.f32 %v4554, %v4650
        %v4683 = vadd.f32 %v4555, %v4651
        %v4684 = vadd.f32 %v4556, %v4652
        %v4685 = vadd.f32 %v4557, %v4653
        %v4686 = vadd.f32 %v4558, %v4654
        %v4687 = vadd.f32 %v4559, %v4655
        %v4688 = vadd.f32 %v4560, %v4656
        %v4689 = vadd.f32 %v4561, %v4657
        %v4690 = vadd.f32 %v4562, %v4658
        %v4691 = vadd.f32 %v4563, %v4659
        %v4692 = vadd.f32 %v4564, %v4660
        %v4693 = vadd.f32 %v4565, %v4661
        %v4694 = vadd.f32 %v4566, %v4662
        %v4695 = vadd.f32 %v4567, %v4663
        %v4696 = vadd.f32 %v4568, %v4664
        %v4697 = vadd.f32 %v4569, %v4665
        %v4698 = vadd.f32 %v4570, %v4666
        %v4699 = vadd.f32 %v4571, %v4667
        %v4700 = vadd.f32 %v4572, %v4668
        %v4701 = vadd.f32 %v4573, %v4669
        %v4702 = vadd.f32 %v4574, %v4670
        %v4703 = vadd.f32 %v4575, %v4671
        %v4704 = vadd.f32 %v4576, %v4672
        %v4705 = vadd.f32 %v4577, %v4673
        %v4706 = vadd.f32 %v4578, %v4674
        %v4707 = vadd.f32 %v4579, %v4675
        %v4708 = vadd.f32 %v4580, %v4676
        %v4709 = vadd.f32 %v4581, %v4677
        %v4710 = vadd.f32 %v4582, %v4678
        %v4711 = vadd.f32 %v4583, %v4679
        %v4712 = vadd.f32 %v4584, %v4680
        %v4713 = vld [vmem:[%s3] sm:$0xff]
        %v4714 = vld [vmem:[%s3 + $0x8] sm:$0xff]
        %v4715 = vld [vmem:[%s3 + $0x10] sm:$0xff]
        %v4716 = vld [vmem:[%s3 + $0x18] sm:$0xff]
        %v4717 = vld [vmem:[%s3 + $0x20] sm:$0xff]
        %v4718 = vld [vmem:[%s3 + $0x28] sm:$0xff]
        %v4719 = vld [vmem:[%s3 + $0x30] sm:$0xff]
        %v4720 = vld [vmem:[%s3 + $0x38] sm:$0xff]
        %v4721 = vld [vmem:[%s3 + $0x40] sm:$0xff]
        %v4722 = vld [vmem:[%s3 + $0x48] sm:$0xff]
        %v4723 = vld [vmem:[%s3 + $0x50] sm:$0xff]
        %v4724 = vld [vmem:[%s3 + $0x58] sm:$0xff]
        %v4725 = vld [vmem:[%s3 + $0x60] sm:$0xff]
        %v4726 = vld [vmem:[%s3 + $0x68] sm:$0xff]
        %v4727 = vld [vmem:[%s3 + $0x70] sm:$0xff]
        %v4728 = vld [vmem:[%s3 + $0x78] sm:$0xff]
        %v4729 = vld [vmem:[%s3 + $0x80] sm:$0xff]
        %v4730 = vld [vmem:[%s3 + $0x88] sm:$0xff]
        %v4731 = vld [vmem:[%s3 + $0x90] sm:$0xff]
        %v4732 = vld [vmem:[%s3 + $0x98] sm:$0xff]
        %v4733 = vld [vmem:[%s3 + $0xa0] sm:$0xff]
        %v4734 = vld [vmem:[%s3 + $0xa8] sm:$0xff]
        %v4735 = vld [vmem:[%s3 + $0xb0] sm:$0xff]
        %v4736 = vld [vmem:[%s3 + $0xb8] sm:$0xff]
        %v4737 = vld [vmem:[%s3 + $0xc0] sm:$0xff]
        %v4738 = vld [vmem:[%s3 + $0xc8] sm:$0xff]
        %v4739 = vld [vmem:[%s3 + $0xd0] sm:$0xff]
        %v4740 = vld [vmem:[%s3 + $0xd8] sm:$0xff]
        %v4741 = vld [vmem:[%s3 + $0xe0] sm:$0xff]
        %v4742 = vld [vmem:[%s3 + $0xe8] sm:$0xff]
        %v4743 = vld [vmem:[%s3 + $0xf0] sm:$0xff]
        %v4744 = vld [vmem:[%s3 + $0xf8] sm:$0xff]
        %4746 = vset.pattern.permute.xlu0 0
        %4747 = vperm.xlu0 %4746, %v4713
        %v4748 = vpop.permute.xlu0 %4747
        %4751 = vset.pattern.permute.xlu0 0
        %4752 = vperm.xlu0 %4751, %v4714
        %v4753 = vpop.permute.xlu0 %4752
        %4756 = vset.pattern.permute.xlu0 0
        %4757 = vperm.xlu0 %4756, %v4715
        %v4758 = vpop.permute.xlu0 %4757
        %4761 = vset.pattern.permute.xlu0 0
        %4762 = vperm.xlu0 %4761, %v4716
        %v4763 = vpop.permute.xlu0 %4762
        %4766 = vset.pattern.permute.xlu0 0
        %4767 = vperm.xlu0 %4766, %v4717
        %v4768 = vpop.permute.xlu0 %4767
        %4771 = vset.pattern.permute.xlu0 0
        %4772 = vperm.xlu0 %4771, %v4718
        %v4773 = vpop.permute.xlu0 %4772
        %4776 = vset.pattern.permute.xlu0 0
        %4777 = vperm.xlu0 %4776, %v4719
        %v4778 = vpop.permute.xlu0 %4777
        %4781 = vset.pattern.permute.xlu0 0
        %4782 = vperm.xlu0 %4781, %v4720
        %v4783 = vpop.permute.xlu0 %4782
        %4786 = vset.pattern.permute.xlu0 0
        %4787 = vperm.xlu0 %4786, %v4721
        %v4788 = vpop.permute.xlu0 %4787
        %4791 = vset.pattern.permute.xlu0 0
        %4792 = vperm.xlu0 %4791, %v4722
        %v4793 = vpop.permute.xlu0 %4792
        %4796 = vset.pattern.permute.xlu0 0
        %4797 = vperm.xlu0 %4796, %v4723
        %v4798 = vpop.permute.xlu0 %4797
        %4801 = vset.pattern.permute.xlu0 0
        %4802 = vperm.xlu0 %4801, %v4724
        %v4803 = vpop.permute.xlu0 %4802
        %4806 = vset.pattern.permute.xlu0 0
        %4807 = vperm.xlu0 %4806, %v4725
        %v4808 = vpop.permute.xlu0 %4807
        %4811 = vset.pattern.permute.xlu0 0
        %4812 = vperm.xlu0 %4811, %v4726
        %v4813 = vpop.permute.xlu0 %4812
        %4816 = vset.pattern.permute.xlu0 0
        %4817 = vperm.xlu0 %4816, %v4727
        %v4818 = vpop.permute.xlu0 %4817
        %4821 = vset.pattern.permute.xlu0 0
        %4822 = vperm.xlu0 %4821, %v4728
        %v4823 = vpop.permute.xlu0 %4822
        %4826 = vset.pattern.permute.xlu0 0
        %4827 = vperm.xlu0 %4826, %v4729
        %v4828 = vpop.permute.xlu0 %4827
        %4831 = vset.pattern.permute.xlu0 0
        %4832 = vperm.xlu0 %4831, %v4730
        %v4833 = vpop.permute.xlu0 %4832
        %4836 = vset.pattern.permute.xlu0 0
        %4837 = vperm.xlu0 %4836, %v4731
        %v4838 = vpop.permute.xlu0 %4837
        %4841 = vset.pattern.permute.xlu0 0
        %4842 = vperm.xlu0 %4841, %v4732
        %v4843 = vpop.permute.xlu0 %4842
        %4846 = vset.pattern.permute.xlu0 0
        %4847 = vperm.xlu0 %4846, %v4733
        %v4848 = vpop.permute.xlu0 %4847
        %4851 = vset.pattern.permute.xlu0 0
        %4852 = vperm.xlu0 %4851, %v4734
        %v4853 = vpop.permute.xlu0 %4852
        %4856 = vset.pattern.permute.xlu0 0
        %4857 = vperm.xlu0 %4856, %v4735
        %v4858 = vpop.permute.xlu0 %4857
        %4861 = vset.pattern.permute.xlu0 0
        %4862 = vperm.xlu0 %4861, %v4736
        %v4863 = vpop.permute.xlu0 %4862
        %4866 = vset.pattern.permute.xlu0 0
        %4867 = vperm.xlu0 %4866, %v4737
        %v4868 = vpop.permute.xlu0 %4867
        %4871 = vset.pattern.permute.xlu0 0
        %4872 = vperm.xlu0 %4871, %v4738
        %v4873 = vpop.permute.xlu0 %4872
        %4876 = vset.pattern.permute.xlu0 0
        %4877 = vperm.xlu0 %4876, %v4739
        %v4878 = vpop.permute.xlu0 %4877
        %4881 = vset.pattern.permute.xlu0 0
        %4882 = vperm.xlu0 %4881, %v4740
        %v4883 = vpop.permute.xlu0 %4882
        %4886 = vset.pattern.permute.xlu0 0
        %4887 = vperm.xlu0 %4886, %v4741
        %v4888 = vpop.permute.xlu0 %4887
        %4891 = vset.pattern.permute.xlu0 0
        %4892 = vperm.xlu0 %4891, %v4742
        %v4893 = vpop.permute.xlu0 %4892
        %4896 = vset.pattern.permute.xlu0 0
        %4897 = vperm.xlu0 %4896, %v4743
        %v4898 = vpop.permute.xlu0 %4897
        %4901 = vset.pattern.permute.xlu0 0
        %4902 = vperm.xlu0 %4901, %v4744
        %v4903 = vpop.permute.xlu0 %4902
        %v4905 = vadd.f32 %v4748, %v4681
        %v4906 = vadd.f32 %v4753, %v4682
        %v4907 = vadd.f32 %v4758, %v4683
        %v4908 = vadd.f32 %v4763, %v4684
        %v4909 = vadd.f32 %v4768, %v4685
        %v4910 = vadd.f32 %v4773, %v4686
        %v4911 = vadd.f32 %v4778, %v4687
        %v4912 = vadd.f32 %v4783, %v4688
        %v4913 = vadd.f32 %v4788, %v4689
        %v4914 = vadd.f32 %v4793, %v4690
        %v4915 = vadd.f32 %v4798, %v4691
        %v4916 = vadd.f32 %v4803, %v4692
        %v4917 = vadd.f32 %v4808, %v4693
        %v4918 = vadd.f32 %v4813, %v4694
        %v4919 = vadd.f32 %v4818, %v4695
        %v4920 = vadd.f32 %v4823, %v4696
        %v4921 = vadd.f32 %v4828, %v4697
        %v4922 = vadd.f32 %v4833, %v4698
        %v4923 = vadd.f32 %v4838, %v4699
        %v4924 = vadd.f32 %v4843, %v4700
        %v4925 = vadd.f32 %v4848, %v4701
        %v4926 = vadd.f32 %v4853, %v4702
        %v4927 = vadd.f32 %v4858, %v4703
        %v4928 = vadd.f32 %v4863, %v4704
        %v4929 = vadd.f32 %v4868, %v4705
        %v4930 = vadd.f32 %v4873, %v4706
        %v4931 = vadd.f32 %v4878, %v4707
        %v4932 = vadd.f32 %v4883, %v4708
        %v4933 = vadd.f32 %v4888, %v4709
        %v4934 = vadd.f32 %v4893, %v4710
        %v4935 = vadd.f32 %v4898, %v4711
        %v4936 = vadd.f32 %v4903, %v4712
        %v4937 = vmax.f32 %v4905, 0.0
        %v4938 = vmax.f32 %v4906, 0.0
        %v4939 = vmax.f32 %v4907, 0.0
        %v4940 = vmax.f32 %v4908, 0.0
        %v4941 = vmax.f32 %v4909, 0.0
        %v4942 = vmax.f32 %v4910, 0.0
        %v4943 = vmax.f32 %v4911, 0.0
        %v4944 = vmax.f32 %v4912, 0.0
        %v4945 = vmax.f32 %v4913, 0.0
        %v4946 = vmax.f32 %v4914, 0.0
        %v4947 = vmax.f32 %v4915, 0.0
        %v4948 = vmax.f32 %v4916, 0.0
        %v4949 = vmax.f32 %v4917, 0.0
        %v4950 = vmax.f32 %v4918, 0.0
        %v4951 = vmax.f32 %v4919, 0.0
        %v4952 = vmax.f32 %v4920, 0.0
        %v4953 = vmax.f32 %v4921, 0.0
        %v4954 = vmax.f32 %v4922, 0.0
        %v4955 = vmax.f32 %v4923, 0.0
        %v4956 = vmax.f32 %v4924, 0.0
        %v4957 = vmax.f32 %v4925, 0.0
        %v4958 = vmax.f32 %v4926, 0.0
        %v4959 = vmax.f32 %v4927, 0.0
        %v4960 = vmax.f32 %v4928, 0.0
        %v4961 = vmax.f32 %v4929, 0.0
        %v4962 = vmax.f32 %v4930, 0.0
        %v4963 = vmax.f32 %v4931, 0.0
        %v4964 = vmax.f32 %v4932, 0.0
        %v4965 = vmax.f32 %v4933, 0.0
        %v4966 = vmax.f32 %v4934, 0.0
        %v4967 = vmax.f32 %v4935, 0.0
        %v4968 = vmax.f32 %v4936, 0.0
        %v4969 = vadd.f32 %v4937, %v4939
        %v4970 = vadd.f32 %v4969, %v4941
        %v4971 = vadd.f32 %v4970, %v4943
        %v4972 = vadd.f32 %v4971, %v4945
        %v4973 = vadd.f32 %v4972, %v4947
        %v4974 = vadd.f32 %v4973, %v4949
        %v4975 = vadd.f32 %v4974, %v4951
        %v4976 = vadd.f32 %v4975, %v4953
        %v4977 = vadd.f32 %v4976, %v4955
        %v4978 = vadd.f32 %v4977, %v4957
        %v4979 = vadd.f32 %v4978, %v4959
        %v4980 = vadd.f32 %v4979, %v4961
        %v4981 = vadd.f32 %v4980, %v4963
        %v4982 = vadd.f32 %v4981, %v4965
        %v4983 = vadd.f32 %v4982, %v4967
        %v4984 = vadd.f32 %v4938, %v4940
        %v4985 = vadd.f32 %v4984, %v4942
        %v4986 = vadd.f32 %v4985, %v4944
        %v4987 = vadd.f32 %v4986, %v4946
        %v4988 = vadd.f32 %v4987, %v4948
        %v4989 = vadd.f32 %v4988, %v4950
        %v4990 = vadd.f32 %v4989, %v4952
        %v4991 = vadd.f32 %v4990, %v4954
        %v4992 = vadd.f32 %v4991, %v4956
        %v4993 = vadd.f32 %v4992, %v4958
        %v4994 = vadd.f32 %v4993, %v4960
        %v4995 = vadd.f32 %v4994, %v4962
        %v4996 = vadd.f32 %v4995, %v4964
        %v4997 = vadd.f32 %v4996, %v4966
        %v4998 = vadd.f32 %v4997, %v4968
        %v4999 = vrcp.pop 16.0
        %v5000 = vmul.f32 %v4983, %v4999
        %v5001 = vmul.f32 %v4998, %v4999
        %v5002 = vadd.f32 %v5000, 1e-06
        %v5003 = vadd.f32 %v5001, 1e-06
        %v5004 = vrcp.pop %v5002
        %v5005 = vrcp.pop %v5003
        %v5006 = vmul.f32 %v4937, %v5004
        %v5007 = vmul.f32 %v4938, %v5005
        %v5008 = vmul.f32 %v4939, %v5004
        %v5009 = vmul.f32 %v4940, %v5005
        %v5010 = vmul.f32 %v4941, %v5004
        %v5011 = vmul.f32 %v4942, %v5005
        %v5012 = vmul.f32 %v4943, %v5004
        %v5013 = vmul.f32 %v4944, %v5005
        %v5014 = vmul.f32 %v4945, %v5004
        %v5015 = vmul.f32 %v4946, %v5005
        %v5016 = vmul.f32 %v4947, %v5004
        %v5017 = vmul.f32 %v4948, %v5005
        %v5018 = vmul.f32 %v4949, %v5004
        %v5019 = vmul.f32 %v4950, %v5005
        %v5020 = vmul.f32 %v4951, %v5004
        %v5021 = vmul.f32 %v4952, %v5005
        %v5022 = vmul.f32 %v4953, %v5004
        %v5023 = vmul.f32 %v4954, %v5005
        %v5024 = vmul.f32 %v4955, %v5004
        %v5025 = vmul.f32 %v4956, %v5005
        %v5026 = vmul.f32 %v4957, %v5004
        %v5027 = vmul.f32 %v4958, %v5005
        %v5028 = vmul.f32 %v4959, %v5004
        %v5029 = vmul.f32 %v4960, %v5005
        %v5030 = vmul.f32 %v4961, %v5004
        %v5031 = vmul.f32 %v4962, %v5005
        %v5032 = vmul.f32 %v4963, %v5004
        %v5033 = vmul.f32 %v4964, %v5005
        %v5034 = vmul.f32 %v4965, %v5004
        %v5035 = vmul.f32 %v4966, %v5005
        %v5036 = vmul.f32 %v4967, %v5004
        %v5037 = vmul.f32 %v4968, %v5005
        %v5038 = vmax.f32 %v5006, 0.0
        %v5039 = vmax.f32 %v5007, 0.0
        %v5040 = vmax.f32 %v5008, 0.0
        %v5041 = vmax.f32 %v5009, 0.0
        %v5042 = vmax.f32 %v5010, 0.0
        %v5043 = vmax.f32 %v5011, 0.0
        %v5044 = vmax.f32 %v5012, 0.0
        %v5045 = vmax.f32 %v5013, 0.0
        %v5046 = vmax.f32 %v5014, 0.0
        %v5047 = vmax.f32 %v5015, 0.0
        %v5048 = vmax.f32 %v5016, 0.0
        %v5049 = vmax.f32 %v5017, 0.0
        %v5050 = vmax.f32 %v5018, 0.0
        %v5051 = vmax.f32 %v5019, 0.0
        %v5052 = vmax.f32 %v5020, 0.0
        %v5053 = vmax.f32 %v5021, 0.0
        %v5054 = vmax.f32 %v5022, 0.0
        %v5055 = vmax.f32 %v5023, 0.0
        %v5056 = vmax.f32 %v5024, 0.0
        %v5057 = vmax.f32 %v5025, 0.0
        %v5058 = vmax.f32 %v5026, 0.0
        %v5059 = vmax.f32 %v5027, 0.0
        %v5060 = vmax.f32 %v5028, 0.0
        %v5061 = vmax.f32 %v5029, 0.0
        %v5062 = vmax.f32 %v5030, 0.0
        %v5063 = vmax.f32 %v5031, 0.0
        %v5064 = vmax.f32 %v5032, 0.0
        %v5065 = vmax.f32 %v5033, 0.0
        %v5066 = vmax.f32 %v5034, 0.0
        %v5067 = vmax.f32 %v5035, 0.0
        %v5068 = vmax.f32 %v5036, 0.0
        %v5069 = vmax.f32 %v5037, 0.0
        %vm5070 = vcmp.ne.f32.partialorder %v5006, %v5006
        %vm5071 = vcmp.ne.f32.partialorder %v5007, %v5007
        %vm5072 = vcmp.ne.f32.partialorder %v5008, %v5008
        %vm5073 = vcmp.ne.f32.partialorder %v5009, %v5009
        %vm5074 = vcmp.ne.f32.partialorder %v5010, %v5010
        %vm5075 = vcmp.ne.f32.partialorder %v5011, %v5011
        %vm5076 = vcmp.ne.f32.partialorder %v5012, %v5012
        %vm5077 = vcmp.ne.f32.partialorder %v5013, %v5013
        %vm5078 = vcmp.ne.f32.partialorder %v5014, %v5014
        %vm5079 = vcmp.ne.f32.partialorder %v5015, %v5015
        %vm5080 = vcmp.ne.f32.partialorder %v5016, %v5016
        %vm5081 = vcmp.ne.f32.partialorder %v5017, %v5017
        %vm5082 = vcmp.ne.f32.partialorder %v5018, %v5018
        %vm5083 = vcmp.ne.f32.partialorder %v5019, %v5019
        %vm5084 = vcmp.ne.f32.partialorder %v5020, %v5020
        %vm5085 = vcmp.ne.f32.partialorder %v5021, %v5021
        %vm5086 = vcmp.ne.f32.partialorder %v5022, %v5022
        %vm5087 = vcmp.ne.f32.partialorder %v5023, %v5023
        %vm5088 = vcmp.ne.f32.partialorder %v5024, %v5024
        %vm5089 = vcmp.ne.f32.partialorder %v5025, %v5025
        %vm5090 = vcmp.ne.f32.partialorder %v5026, %v5026
        %vm5091 = vcmp.ne.f32.partialorder %v5027, %v5027
        %vm5092 = vcmp.ne.f32.partialorder %v5028, %v5028
        %vm5093 = vcmp.ne.f32.partialorder %v5029, %v5029
        %vm5094 = vcmp.ne.f32.partialorder %v5030, %v5030
        %vm5095 = vcmp.ne.f32.partialorder %v5031, %v5031
        %vm5096 = vcmp.ne.f32.partialorder %v5032, %v5032
        %vm5097 = vcmp.ne.f32.partialorder %v5033, %v5033
        %vm5098 = vcmp.ne.f32.partialorder %v5034, %v5034
        %vm5099 = vcmp.ne.f32.partialorder %v5035, %v5035
        %vm5100 = vcmp.ne.f32.partialorder %v5036, %v5036
        %vm5101 = vcmp.ne.f32.partialorder %v5037, %v5037
        %v5102 = vadd.f32 %v5006, 0.0
        %v5103 = vadd.f32 %v5007, 0.0
        %v5104 = vadd.f32 %v5008, 0.0
        %v5105 = vadd.f32 %v5009, 0.0
        %v5106 = vadd.f32 %v5010, 0.0
        %v5107 = vadd.f32 %v5011, 0.0
        %v5108 = vadd.f32 %v5012, 0.0
        %v5109 = vadd.f32 %v5013, 0.0
        %v5110 = vadd.f32 %v5014, 0.0
        %v5111 = vadd.f32 %v5015, 0.0
        %v5112 = vadd.f32 %v5016, 0.0
        %v5113 = vadd.f32 %v5017, 0.0
        %v5114 = vadd.f32 %v5018, 0.0
        %v5115 = vadd.f32 %v5019, 0.0
        %v5116 = vadd.f32 %v5020, 0.0
        %v5117 = vadd.f32 %v5021, 0.0
        %v5118 = vadd.f32 %v5022, 0.0
        %v5119 = vadd.f32 %v5023, 0.0
        %v5120 = vadd.f32 %v5024, 0.0
        %v5121 = vadd.f32 %v5025, 0.0
        %v5122 = vadd.f32 %v5026, 0.0
        %v5123 = vadd.f32 %v5027, 0.0
        %v5124 = vadd.f32 %v5028, 0.0
        %v5125 = vadd.f32 %v5029, 0.0
        %v5126 = vadd.f32 %v5030, 0.0
        %v5127 = vadd.f32 %v5031, 0.0
        %v5128 = vadd.f32 %v5032, 0.0
        %v5129 = vadd.f32 %v5033, 0.0
        %v5130 = vadd.f32 %v5034, 0.0
        %v5131 = vadd.f32 %v5035, 0.0
        %v5132 = vadd.f32 %v5036, 0.0
        %v5133 = vadd.f32 %v5037, 0.0
        %v5134 = vand.u32 2147483647, %v5006
        %v5135 = vand.u32 2147483647, %v5007
        %v5136 = vand.u32 2147483647, %v5008
        %v5137 = vand.u32 2147483647, %v5009
        %v5138 = vand.u32 2147483647, %v5010
        %v5139 = vand.u32 2147483647, %v5011
        %v5140 = vand.u32 2147483647, %v5012
        %v5141 = vand.u32 2147483647, %v5013
        %v5142 = vand.u32 2147483647, %v5014
        %v5143 = vand.u32 2147483647, %v5015
        %v5144 = vand.u32 2147483647, %v5016
        %v5145 = vand.u32 2147483647, %v5017
        %v5146 = vand.u32 2147483647, %v5018
        %v5147 = vand.u32 2147483647, %v5019
        %v5148 = vand.u32 2147483647, %v5020
        %v5149 = vand.u32 2147483647, %v5021
        %v5150 = vand.u32 2147483647, %v5022
        %v5151 = vand.u32 2147483647, %v5023
        %v5152 = vand.u32 2147483647, %v5024
        %v5153 = vand.u32 2147483647, %v5025
        %v5154 = vand.u32 2147483647, %v5026
        %v5155 = vand.u32 2147483647, %v5027
        %v5156 = vand.u32 2147483647, %v5028
        %v5157 = vand.u32 2147483647, %v5029
        %v5158 = vand.u32 2147483647, %v5030
        %v5159 = vand.u32 2147483647, %v5031
        %v5160 = vand.u32 2147483647, %v5032
        %v5161 = vand.u32 2147483647, %v5033
        %v5162 = vand.u32 2147483647, %v5034
        %v5163 = vand.u32 2147483647, %v5035
        %v5164 = vand.u32 2147483647, %v5036
        %v5165 = vand.u32 2147483647, %v5037
        %v5166 = vsub.f32 0.0, %v5134
        %v5167 = vsub.f32 0.0, %v5135
        %v5168 = vsub.f32 0.0, %v5136
        %v5169 = vsub.f32 0.0, %v5137
        %v5170 = vsub.f32 0.0, %v5138
        %v5171 = vsub.f32 0.0, %v5139
        %v5172 = vsub.f32 0.0, %v5140
        %v5173 = vsub.f32 0.0, %v5141
        %v5174 = vsub.f32 0.0, %v5142
        %v5175 = vsub.f32 0.0, %v5143
        %v5176 = vsub.f32 0.0, %v5144
        %v5177 = vsub.f32 0.0, %v5145
        %v5178 = vsub.f32 0.0, %v5146
        %v5179 = vsub.f32 0.0, %v5147
        %v5180 = vsub.f32 0.0, %v5148
        %v5181 = vsub.f32 0.0, %v5149
        %v5182 = vsub.f32 0.0, %v5150
        %v5183 = vsub.f32 0.0, %v5151
        %v5184 = vsub.f32 0.0, %v5152
        %v5185 = vsub.f32 0.0, %v5153
        %v5186 = vsub.f32 0.0, %v5154
        %v5187 = vsub.f32 0.0, %v5155
        %v5188 = vsub.f32 0.0, %v5156
        %v5189 = vsub.f32 0.0, %v5157
        %v5190 = vsub.f32 0.0, %v5158
        %v5191 = vsub.f32 0.0, %v5159
        %v5192 = vsub.f32 0.0, %v5160
        %v5193 = vsub.f32 0.0, %v5161
        %v5194 = vsub.f32 0.0, %v5162
        %v5195 = vsub.f32 0.0, %v5163
        %v5196 = vsub.f32 0.0, %v5164
        %v5197 = vsub.f32 0.0, %v5165
        %v5198 = vmul.f32 %v5166, 1.442695
        %v5199 = vpow.pop %v5198
        %v5200 = vmul.f32 %v5167, 1.442695
        %v5201 = vpow.pop %v5200
        %v5202 = vmul.f32 %v5168, 1.442695
        %v5203 = vpow.pop %v5202
        %v5204 = vmul.f32 %v5169, 1.442695
        %v5205 = vpow.pop %v5204
        %v5206 = vmul.f32 %v5170, 1.442695
        %v5207 = vpow.pop %v5206
        %v5208 = vmul.f32 %v5171, 1.442695
        %v5209 = vpow.pop %v5208
        %v5210 = vmul.f32 %v5172, 1.442695
        %v5211 = vpow.pop %v5210
        %v5212 = vmul.f32 %v5173, 1.442695
        %v5213 = vpow.pop %v5212
        %v5214 = vmul.f32 %v5174, 1.442695
        %v5215 = vpow.pop %v5214
        %v5216 = vmul.f32 %v5175, 1.442695
        %v5217 = vpow.pop %v5216
        %v5218 = vmul.f32 %v5176, 1.442695
        %v5219 = vpow.pop %v5218
        %v5220 = vmul.f32 %v5177, 1.442695
        %v5221 = vpow.pop %v5220
        %v5222 = vmul.f32 %v5178, 1.442695
        %v5223 = vpow.pop %v5222
        %v5224 = vmul.f32 %v5179, 1.442695
        %v5225 = vpow.pop %v5224
        %v5226 = vmul.f32 %v5180, 1.442695
        %v5227 = vpow.pop %v5226
        %v5228 = vmul.f32 %v5181, 1.442695
        %v5229 = vpow.pop %v5228
        %v5230 = vmul.f32 %v5182, 1.442695
        %v5231 = vpow.pop %v5230
        %v5232 = vmul.f32 %v5183, 1.442695
        %v5233 = vpow.pop %v5232
        %v5234 = vmul.f32 %v5184, 1.442695
        %v5235 = vpow.pop %v5234
        %v5236 = vmul.f32 %v5185, 1.442695
        %v5237 = vpow.pop %v5236
        %v5238 = vmul.f32 %v5186, 1.442695
        %v5239 = vpow.pop %v5238
        %v5240 = vmul.f32 %v5187, 1.442695
        %v5241 = vpow.pop %v5240
        %v5242 = vmul.f32 %v5188, 1.442695
        %v5243 = vpow.pop %v5242
        %v5244 = vmul.f32 %v5189, 1.442695
        %v5245 = vpow.pop %v5244
        %v5246 = vmul.f32 %v5190, 1.442695
        %v5247 = vpow.pop %v5246
        %v5248 = vmul.f32 %v5191, 1.442695
        %v5249 = vpow.pop %v5248
        %v5250 = vmul.f32 %v5192, 1.442695
        %v5251 = vpow.pop %v5250
        %v5252 = vmul.f32 %v5193, 1.442695
        %v5253 = vpow.pop %v5252
        %v5254 = vmul.f32 %v5194, 1.442695
        %v5255 = vpow.pop %v5254
        %v5256 = vmul.f32 %v5195, 1.442695
        %v5257 = vpow.pop %v5256
        %v5258 = vmul.f32 %v5196, 1.442695
        %v5259 = vpow.pop %v5258
        %v5260 = vmul.f32 %v5197, 1.442695
        %v5261 = vpow.pop %v5260
        %v5262 = vadd.f32 %v5199, 1.0
        %v5263 = vlog2.pop %v5262
        %v5264 = vmul.f32 %v5263, 0.6931472
        %v5265 = vmul.f32 -0.5, %v5199
        %v5266 = vadd.f32 %v5265, 1.0
        %v5267 = vmul.f32 %v5266, %v5199
        %v5268 = vand.u32 2147483647, %v5199
        %vm5269 = vcmp.lt.f32.partialorder %v5268, 0.0004427343
        %v5270 = vsel %vm5269, %v5267, %v5264
        %v5271 = vadd.f32 %v5201, 1.0
        %v5272 = vlog2.pop %v5271
        %v5273 = vmul.f32 %v5272, 0.6931472
        %v5274 = vmul.f32 -0.5, %v5201
        %v5275 = vadd.f32 %v5274, 1.0
        %v5276 = vmul.f32 %v5275, %v5201
        %v5277 = vand.u32 2147483647, %v5201
        %vm5278 = vcmp.lt.f32.partialorder %v5277, 0.0004427343
        %v5279 = vsel %vm5278, %v5276, %v5273
        %v5280 = vadd.f32 %v5203, 1.0
        %v5281 = vlog2.pop %v5280
        %v5282 = vmul.f32 %v5281, 0.6931472
        %v5283 = vmul.f32 -0.5, %v5203
        %v5284 = vadd.f32 %v5283, 1.0
        %v5285 = vmul.f32 %v5284, %v5203
        %v5286 = vand.u32 2147483647, %v5203
        %vm5287 = vcmp.lt.f32.partialorder %v5286, 0.0004427343
        %v5288 = vsel %vm5287, %v5285, %v5282
        %v5289 = vadd.f32 %v5205, 1.0
        %v5290 = vlog2.pop %v5289
        %v5291 = vmul.f32 %v5290, 0.6931472
        %v5292 = vmul.f32 -0.5, %v5205
        %v5293 = vadd.f32 %v5292, 1.0
        %v5294 = vmul.f32 %v5293, %v5205
        %v5295 = vand.u32 2147483647, %v5205
        %vm5296 = vcmp.lt.f32.partialorder %v5295, 0.0004427343
        %v5297 = vsel %vm5296, %v5294, %v5291
        %v5298 = vadd.f32 %v5207, 1.0
        %v5299 = vlog2.pop %v5298
        %v5300 = vmul.f32 %v5299, 0.6931472
        %v5301 = vmul.f32 -0.5, %v5207
        %v5302 = vadd.f32 %v5301, 1.0
        %v5303 = vmul.f32 %v5302, %v5207
        %v5304 = vand.u32 2147483647, %v5207
        %vm5305 = vcmp.lt.f32.partialorder %v5304, 0.0004427343
        %v5306 = vsel %vm5305, %v5303, %v5300
        %v5307 = vadd.f32 %v5209, 1.0
        %v5308 = vlog2.pop %v5307
        %v5309 = vmul.f32 %v5308, 0.6931472
        %v5310 = vmul.f32 -0.5, %v5209
        %v5311 = vadd.f32 %v5310, 1.0
        %v5312 = vmul.f32 %v5311, %v5209
        %v5313 = vand.u32 2147483647, %v5209
        %vm5314 = vcmp.lt.f32.partialorder %v5313, 0.0004427343
        %v5315 = vsel %vm5314, %v5312, %v5309
        %v5316 = vadd.f32 %v5211, 1.0
        %v5317 = vlog2.pop %v5316
        %v5318 = vmul.f32 %v5317, 0.6931472
        %v5319 = vmul.f32 -0.5, %v5211
        %v5320 = vadd.f32 %v5319, 1.0
        %v5321 = vmul.f32 %v5320, %v5211
        %v5322 = vand.u32 2147483647, %v5211
        %vm5323 = vcmp.lt.f32.partialorder %v5322, 0.0004427343
        %v5324 = vsel %vm5323, %v5321, %v5318
        %v5325 = vadd.f32 %v5213, 1.0
        %v5326 = vlog2.pop %v5325
        %v5327 = vmul.f32 %v5326, 0.6931472
        %v5328 = vmul.f32 -0.5, %v5213
        %v5329 = vadd.f32 %v5328, 1.0
        %v5330 = vmul.f32 %v5329, %v5213
        %v5331 = vand.u32 2147483647, %v5213
        %vm5332 = vcmp.lt.f32.partialorder %v5331, 0.0004427343
        %v5333 = vsel %vm5332, %v5330, %v5327
        %v5334 = vadd.f32 %v5215, 1.0
        %v5335 = vlog2.pop %v5334
        %v5336 = vmul.f32 %v5335, 0.6931472
        %v5337 = vmul.f32 -0.5, %v5215
        %v5338 = vadd.f32 %v5337, 1.0
        %v5339 = vmul.f32 %v5338, %v5215
        %v5340 = vand.u32 2147483647, %v5215
        %vm5341 = vcmp.lt.f32.partialorder %v5340, 0.0004427343
        %v5342 = vsel %vm5341, %v5339, %v5336
        %v5343 = vadd.f32 %v5217, 1.0
        %v5344 = vlog2.pop %v5343
        %v5345 = vmul.f32 %v5344, 0.6931472
        %v5346 = vmul.f32 -0.5, %v5217
        %v5347 = vadd.f32 %v5346, 1.0
        %v5348 = vmul.f32 %v5347, %v5217
        %v5349 = vand.u32 2147483647, %v5217
        %vm5350 = vcmp.lt.f32.partialorder %v5349, 0.0004427343
        %v5351 = vsel %vm5350, %v5348, %v5345
        %v5352 = vadd.f32 %v5219, 1.0
        %v5353 = vlog2.pop %v5352
        %v5354 = vmul.f32 %v5353, 0.6931472
        %v5355 = vmul.f32 -0.5, %v5219
        %v5356 = vadd.f32 %v5355, 1.0
        %v5357 = vmul.f32 %v5356, %v5219
        %v5358 = vand.u32 2147483647, %v5219
        %vm5359 = vcmp.lt.f32.partialorder %v5358, 0.0004427343
        %v5360 = vsel %vm5359, %v5357, %v5354
        %v5361 = vadd.f32 %v5221, 1.0
        %v5362 = vlog2.pop %v5361
        %v5363 = vmul.f32 %v5362, 0.6931472
        %v5364 = vmul.f32 -0.5, %v5221
        %v5365 = vadd.f32 %v5364, 1.0
        %v5366 = vmul.f32 %v5365, %v5221
        %v5367 = vand.u32 2147483647, %v5221
        %vm5368 = vcmp.lt.f32.partialorder %v5367, 0.0004427343
        %v5369 = vsel %vm5368, %v5366, %v5363
        %v5370 = vadd.f32 %v5223, 1.0
        %v5371 = vlog2.pop %v5370
        %v5372 = vmul.f32 %v5371, 0.6931472
        %v5373 = vmul.f32 -0.5, %v5223
        %v5374 = vadd.f32 %v5373, 1.0
        %v5375 = vmul.f32 %v5374, %v5223
        %v5376 = vand.u32 2147483647, %v5223
        %vm5377 = vcmp.lt.f32.partialorder %v5376, 0.0004427343
        %v5378 = vsel %vm5377, %v5375, %v5372
        %v5379 = vadd.f32 %v5225, 1.0
        %v5380 = vlog2.pop %v5379
        %v5381 = vmul.f32 %v5380, 0.6931472
        %v5382 = vmul.f32 -0.5, %v5225
        %v5383 = vadd.f32 %v5382, 1.0
        %v5384 = vmul.f32 %v5383, %v5225
        %v5385 = vand.u32 2147483647, %v5225
        %vm5386 = vcmp.lt.f32.partialorder %v5385, 0.0004427343
        %v5387 = vsel %vm5386, %v5384, %v5381
        %v5388 = vadd.f32 %v5227, 1.0
        %v5389 = vlog2.pop %v5388
        %v5390 = vmul.f32 %v5389, 0.6931472
        %v5391 = vmul.f32 -0.5, %v5227
        %v5392 = vadd.f32 %v5391, 1.0
        %v5393 = vmul.f32 %v5392, %v5227
        %v5394 = vand.u32 2147483647, %v5227
        %vm5395 = vcmp.lt.f32.partialorder %v5394, 0.0004427343
        %v5396 = vsel %vm5395, %v5393, %v5390
        %v5397 = vadd.f32 %v5229, 1.0
        %v5398 = vlog2.pop %v5397
        %v5399 = vmul.f32 %v5398, 0.6931472
        %v5400 = vmul.f32 -0.5, %v5229
        %v5401 = vadd.f32 %v5400, 1.0
        %v5402 = vmul.f32 %v5401, %v5229
        %v5403 = vand.u32 2147483647, %v5229
        %vm5404 = vcmp.lt.f32.partialorder %v5403, 0.0004427343
        %v5405 = vsel %vm5404, %v5402, %v5399
        %v5406 = vadd.f32 %v5231, 1.0
        %v5407 = vlog2.pop %v5406
        %v5408 = vmul.f32 %v5407, 0.6931472
        %v5409 = vmul.f32 -0.5, %v5231
        %v5410 = vadd.f32 %v5409, 1.0
        %v5411 = vmul.f32 %v5410, %v5231
        %v5412 = vand.u32 2147483647, %v5231
        %vm5413 = vcmp.lt.f32.partialorder %v5412, 0.0004427343
        %v5414 = vsel %vm5413, %v5411, %v5408
        %v5415 = vadd.f32 %v5233, 1.0
        %v5416 = vlog2.pop %v5415
        %v5417 = vmul.f32 %v5416, 0.6931472
        %v5418 = vmul.f32 -0.5, %v5233
        %v5419 = vadd.f32 %v5418, 1.0
        %v5420 = vmul.f32 %v5419, %v5233
        %v5421 = vand.u32 2147483647, %v5233
        %vm5422 = vcmp.lt.f32.partialorder %v5421, 0.0004427343
        %v5423 = vsel %vm5422, %v5420, %v5417
        %v5424 = vadd.f32 %v5235, 1.0
        %v5425 = vlog2.pop %v5424
        %v5426 = vmul.f32 %v5425, 0.6931472
        %v5427 = vmul.f32 -0.5, %v5235
        %v5428 = vadd.f32 %v5427, 1.0
        %v5429 = vmul.f32 %v5428, %v5235
        %v5430 = vand.u32 2147483647, %v5235
        %vm5431 = vcmp.lt.f32.partialorder %v5430, 0.0004427343
        %v5432 = vsel %vm5431, %v5429, %v5426
        %v5433 = vadd.f32 %v5237, 1.0
        %v5434 = vlog2.pop %v5433
        %v5435 = vmul.f32 %v5434, 0.6931472
        %v5436 = vmul.f32 -0.5, %v5237
        %v5437 = vadd.f32 %v5436, 1.0
        %v5438 = vmul.f32 %v5437, %v5237
        %v5439 = vand.u32 2147483647, %v5237
        %vm5440 = vcmp.lt.f32.partialorder %v5439, 0.0004427343
        %v5441 = vsel %vm5440, %v5438, %v5435
        %v5442 = vadd.f32 %v5239, 1.0
        %v5443 = vlog2.pop %v5442
        %v5444 = vmul.f32 %v5443, 0.6931472
        %v5445 = vmul.f32 -0.5, %v5239
        %v5446 = vadd.f32 %v5445, 1.0
        %v5447 = vmul.f32 %v5446, %v5239
        %v5448 = vand.u32 2147483647, %v5239
        %vm5449 = vcmp.lt.f32.partialorder %v5448, 0.0004427343
        %v5450 = vsel %vm5449, %v5447, %v5444
        %v5451 = vadd.f32 %v5241, 1.0
        %v5452 = vlog2.pop %v5451
        %v5453 = vmul.f32 %v5452, 0.6931472
        %v5454 = vmul.f32 -0.5, %v5241
        %v5455 = vadd.f32 %v5454, 1.0
        %v5456 = vmul.f32 %v5455, %v5241
        %v5457 = vand.u32 2147483647, %v5241
        %vm5458 = vcmp.lt.f32.partialorder %v5457, 0.0004427343
        %v5459 = vsel %vm5458, %v5456, %v5453
        %v5460 = vadd.f32 %v5243, 1.0
        %v5461 = vlog2.pop %v5460
        %v5462 = vmul.f32 %v5461, 0.6931472
        %v5463 = vmul.f32 -0.5, %v5243
        %v5464 = vadd.f32 %v5463, 1.0
        %v5465 = vmul.f32 %v5464, %v5243
        %v5466 = vand.u32 2147483647, %v5243
        %vm5467 = vcmp.lt.f32.partialorder %v5466, 0.0004427343
        %v5468 = vsel %vm5467, %v5465, %v5462
        %v5469 = vadd.f32 %v5245, 1.0
        %v5470 = vlog2.pop %v5469
        %v5471 = vmul.f32 %v5470, 0.6931472
        %v5472 = vmul.f32 -0.5, %v5245
        %v5473 = vadd.f32 %v5472, 1.0
        %v5474 = vmul.f32 %v5473, %v5245
        %v5475 = vand.u32 2147483647, %v5245
        %vm5476 = vcmp.lt.f32.partialorder %v5475, 0.0004427343
        %v5477 = vsel %vm5476, %v5474, %v5471
        %v5478 = vadd.f32 %v5247, 1.0
        %v5479 = vlog2.pop %v5478
        %v5480 = vmul.f32 %v5479, 0.6931472
        %v5481 = vmul.f32 -0.5, %v5247
        %v5482 = vadd.f32 %v5481, 1.0
        %v5483 = vmul.f32 %v5482, %v5247
        %v5484 = vand.u32 2147483647, %v5247
        %vm5485 = vcmp.lt.f32.partialorder %v5484, 0.0004427343
        %v5486 = vsel %vm5485, %v5483, %v5480
        %v5487 = vadd.f32 %v5249, 1.0
        %v5488 = vlog2.pop %v5487
        %v5489 = vmul.f32 %v5488, 0.6931472
        %v5490 = vmul.f32 -0.5, %v5249
        %v5491 = vadd.f32 %v5490, 1.0
        %v5492 = vmul.f32 %v5491, %v5249
        %v5493 = vand.u32 2147483647, %v5249
        %vm5494 = vcmp.lt.f32.partialorder %v5493, 0.0004427343
        %v5495 = vsel %vm5494, %v5492, %v5489
        %v5496 = vadd.f32 %v5251, 1.0
        %v5497 = vlog2.pop %v5496
        %v5498 = vmul.f32 %v5497, 0.6931472
        %v5499 = vmul.f32 -0.5, %v5251
        %v5500 = vadd.f32 %v5499, 1.0
        %v5501 = vmul.f32 %v5500, %v5251
        %v5502 = vand.u32 2147483647, %v5251
        %vm5503 = vcmp.lt.f32.partialorder %v5502, 0.0004427343
        %v5504 = vsel %vm5503, %v5501, %v5498
        %v5505 = vadd.f32 %v5253, 1.0
        %v5506 = vlog2.pop %v5505
        %v5507 = vmul.f32 %v5506, 0.6931472
        %v5508 = vmul.f32 -0.5, %v5253
        %v5509 = vadd.f32 %v5508, 1.0
        %v5510 = vmul.f32 %v5509, %v5253
        %v5511 = vand.u32 2147483647, %v5253
        %vm5512 = vcmp.lt.f32.partialorder %v5511, 0.0004427343
        %v5513 = vsel %vm5512, %v5510, %v5507
        %v5514 = vadd.f32 %v5255, 1.0
        %v5515 = vlog2.pop %v5514
        %v5516 = vmul.f32 %v5515, 0.6931472
        %v5517 = vmul.f32 -0.5, %v5255
        %v5518 = vadd.f32 %v5517, 1.0
        %v5519 = vmul.f32 %v5518, %v5255
        %v5520 = vand.u32 2147483647, %v5255
        %vm5521 = vcmp.lt.f32.partialorder %v5520, 0.0004427343
        %v5522 = vsel %vm5521, %v5519, %v5516
        %v5523 = vadd.f32 %v5257, 1.0
        %v5524 = vlog2.pop %v5523
        %v5525 = vmul.f32 %v5524, 0.6931472
        %v5526 = vmul.f32 -0.5, %v5257
        %v5527 = vadd.f32 %v5526, 1.0
        %v5528 = vmul.f32 %v5527, %v5257
        %v5529 = vand.u32 2147483647, %v5257
        %vm5530 = vcmp.lt.f32.partialorder %v5529, 0.0004427343
        %v5531 = vsel %vm5530, %v5528, %v5525
        %v5532 = vadd.f32 %v5259, 1.0
        %v5533 = vlog2.pop %v5532
        %v5534 = vmul.f32 %v5533, 0.6931472
        %v5535 = vmul.f32 -0.5, %v5259
        %v5536 = vadd.f32 %v5535, 1.0
        %v5537 = vmul.f32 %v5536, %v5259
        %v5538 = vand.u32 2147483647, %v5259
        %vm5539 = vcmp.lt.f32.partialorder %v5538, 0.0004427343
        %v5540 = vsel %vm5539, %v5537, %v5534
        %v5541 = vadd.f32 %v5261, 1.0
        %v5542 = vlog2.pop %v5541
        %v5543 = vmul.f32 %v5542, 0.6931472
        %v5544 = vmul.f32 -0.5, %v5261
        %v5545 = vadd.f32 %v5544, 1.0
        %v5546 = vmul.f32 %v5545, %v5261
        %v5547 = vand.u32 2147483647, %v5261
        %vm5548 = vcmp.lt.f32.partialorder %v5547, 0.0004427343
        %v5549 = vsel %vm5548, %v5546, %v5543
        %v5550 = vadd.f32 %v5038, %v5270
        %v5551 = vadd.f32 %v5039, %v5279
        %v5552 = vadd.f32 %v5040, %v5288
        %v5553 = vadd.f32 %v5041, %v5297
        %v5554 = vadd.f32 %v5042, %v5306
        %v5555 = vadd.f32 %v5043, %v5315
        %v5556 = vadd.f32 %v5044, %v5324
        %v5557 = vadd.f32 %v5045, %v5333
        %v5558 = vadd.f32 %v5046, %v5342
        %v5559 = vadd.f32 %v5047, %v5351
        %v5560 = vadd.f32 %v5048, %v5360
        %v5561 = vadd.f32 %v5049, %v5369
        %v5562 = vadd.f32 %v5050, %v5378
        %v5563 = vadd.f32 %v5051, %v5387
        %v5564 = vadd.f32 %v5052, %v5396
        %v5565 = vadd.f32 %v5053, %v5405
        %v5566 = vadd.f32 %v5054, %v5414
        %v5567 = vadd.f32 %v5055, %v5423
        %v5568 = vadd.f32 %v5056, %v5432
        %v5569 = vadd.f32 %v5057, %v5441
        %v5570 = vadd.f32 %v5058, %v5450
        %v5571 = vadd.f32 %v5059, %v5459
        %v5572 = vadd.f32 %v5060, %v5468
        %v5573 = vadd.f32 %v5061, %v5477
        %v5574 = vadd.f32 %v5062, %v5486
        %v5575 = vadd.f32 %v5063, %v5495
        %v5576 = vadd.f32 %v5064, %v5504
        %v5577 = vadd.f32 %v5065, %v5513
        %v5578 = vadd.f32 %v5066, %v5522
        %v5579 = vadd.f32 %v5067, %v5531
        %v5580 = vadd.f32 %v5068, %v5540
        %v5581 = vadd.f32 %v5069, %v5549
        %v5582 = vsel %vm5070, %v5102, %v5550
        %v5583 = vsel %vm5071, %v5103, %v5551
        %v5584 = vsel %vm5072, %v5104, %v5552
        %v5585 = vsel %vm5073, %v5105, %v5553
        %v5586 = vsel %vm5074, %v5106, %v5554
        %v5587 = vsel %vm5075, %v5107, %v5555
        %v5588 = vsel %vm5076, %v5108, %v5556
        %v5589 = vsel %vm5077, %v5109, %v5557
        %v5590 = vsel %vm5078, %v5110, %v5558
        %v5591 = vsel %vm5079, %v5111, %v5559
        %v5592 = vsel %vm5080, %v5112, %v5560
        %v5593 = vsel %vm5081, %v5113, %v5561
        %v5594 = vsel %vm5082, %v5114, %v5562
        %v5595 = vsel %vm5083, %v5115, %v5563
        %v5596 = vsel %vm5084, %v5116, %v5564
        %v5597 = vsel %vm5085, %v5117, %v5565
        %v5598 = vsel %vm5086, %v5118, %v5566
        %v5599 = vsel %vm5087, %v5119, %v5567
        %v5600 = vsel %vm5088, %v5120, %v5568
        %v5601 = vsel %vm5089, %v5121, %v5569
        %v5602 = vsel %vm5090, %v5122, %v5570
        %v5603 = vsel %vm5091, %v5123, %v5571
        %v5604 = vsel %vm5092, %v5124, %v5572
        %v5605 = vsel %vm5093, %v5125, %v5573
        %v5606 = vsel %vm5094, %v5126, %v5574
        %v5607 = vsel %vm5095, %v5127, %v5575
        %v5608 = vsel %vm5096, %v5128, %v5576
        %v5609 = vsel %vm5097, %v5129, %v5577
        %v5610 = vsel %vm5098, %v5130, %v5578
        %v5611 = vsel %vm5099, %v5131, %v5579
        %v5612 = vsel %vm5100, %v5132, %v5580
        %v5613 = vsel %vm5101, %v5133, %v5581
        %5614 = vst [vmem:[%s392] sm:$0xff] %v5582
        %5615 = vst [vmem:[%s392 + $0x8] sm:$0xff] %v5583
        %5616 = vst [vmem:[%s392 + $0x10] sm:$0xff] %v5584
        %5617 = vst [vmem:[%s392 + $0x18] sm:$0xff] %v5585
        %5618 = vst [vmem:[%s392 + $0x20] sm:$0xff] %v5586
        %5619 = vst [vmem:[%s392 + $0x28] sm:$0xff] %v5587
        %5620 = vst [vmem:[%s392 + $0x30] sm:$0xff] %v5588
        %5621 = vst [vmem:[%s392 + $0x38] sm:$0xff] %v5589
        %5622 = vst [vmem:[%s392 + $0x40] sm:$0xff] %v5590
        %5623 = vst [vmem:[%s392 + $0x48] sm:$0xff] %v5591
        %5624 = vst [vmem:[%s392 + $0x50] sm:$0xff] %v5592
        %5625 = vst [vmem:[%s392 + $0x58] sm:$0xff] %v5593
        %5626 = vst [vmem:[%s392 + $0x60] sm:$0xff] %v5594
        %5627 = vst [vmem:[%s392 + $0x68] sm:$0xff] %v5595
        %5628 = vst [vmem:[%s392 + $0x70] sm:$0xff] %v5596
        %5629 = vst [vmem:[%s392 + $0x78] sm:$0xff] %v5597
        %5630 = vst [vmem:[%s392 + $0x80] sm:$0xff] %v5598
        %5631 = vst [vmem:[%s392 + $0x88] sm:$0xff] %v5599
        %5632 = vst [vmem:[%s392 + $0x90] sm:$0xff] %v5600
        %5633 = vst [vmem:[%s392 + $0x98] sm:$0xff] %v5601
        %5634 = vst [vmem:[%s392 + $0xa0] sm:$0xff] %v5602
        %5635 = vst [vmem:[%s392 + $0xa8] sm:$0xff] %v5603
        %5636 = vst [vmem:[%s392 + $0xb0] sm:$0xff] %v5604
        %5637 = vst [vmem:[%s392 + $0xb8] sm:$0xff] %v5605
        %5638 = vst [vmem:[%s392 + $0xc0] sm:$0xff] %v5606
        %5639 = vst [vmem:[%s392 + $0xc8] sm:$0xff] %v5607
        %5640 = vst [vmem:[%s392 + $0xd0] sm:$0xff] %v5608
        %5641 = vst [vmem:[%s392 + $0xd8] sm:$0xff] %v5609
        %5642 = vst [vmem:[%s392 + $0xe0] sm:$0xff] %v5610
        %5643 = vst [vmem:[%s392 + $0xe8] sm:$0xff] %v5611
        %5644 = vst [vmem:[%s392 + $0xf0] sm:$0xff] %v5612
        %5645 = vst [vmem:[%s392 + $0xf8] sm:$0xff] %v5613
        %s5646 = sand.u32 %s123, 1
        %s5647 = scalar_lea.sflag [#allocation5], %s5646
        %s5648 = sand.u32 %s123, 1
        %s5649 = smul.addr %s5648, 256
        %s5650 = scalar_lea.vmem [#allocation6], %s5649
        // Predicated region
        $region79: #{tpu_custom_call.1} parent=69 // pred_check
          %p5651 = pneg %p133
        $region80: #{tpu_custom_call.1} parent=69 // pred_check_branch
          %5653 = sbr.rel (%p5651) target = $region82
        $region81: #{tpu_custom_call.1} parent=69 // pred_region
          %s5655 = ssub.s32 4096, 4096
          %5656 = vsyncadd %s5647, %s5655
          %s5657 = smul.addr %s21, 128
          %s5658 = scalar_lea.hbm %s4, %s5657
          %s5659 = sshll.u32 %s5650, 4
          %s5660 = int_to_ptr.vmem [resolvable:$true] %s5659
          %5665 = dma.vmem_to_hbm [thread:$0]  %s5660, 4096, %s5658, %s5647, 128, 256, 8
        $region82: #{tpu_custom_call.1} parent=69 // pred_fallthru
          _
      $region70: #{tpu_custom_call.1} parent=5 // pred_fallthru
        _
      %p5666 = scmp.le.s32.totalorder 2, %s16
      // Predicated region
      $region83: #{tpu_custom_call.1} parent=5 // pred_check
        %p5667 = pneg %p5666
      $region84: #{tpu_custom_call.1} parent=5 // pred_check_branch
        %5669 = sbr.rel (%p5667) target = $region86
      $region85: #{tpu_custom_call.1} parent=5 // pred_region
        %s5670 = ssub.s32 %s16, 2
        // Predicated region
        $region87: #{tpu_custom_call.1} parent=85 // pred_check
          %p5671 = pneg %p139
        $region88: #{tpu_custom_call.1} parent=85 // pred_check_branch
          %5673 = sbr.rel (%p5671) target = $region90
        $region89: #{tpu_custom_call.1} parent=85 // pred_region
          %s5674 = sand.u32 %s124, 1
          %s5675 = scalar_lea.sflag [#allocation5], %s5674
          %s5676 = sand.u32 %s124, 1
          %s5677 = smul.addr %s5676, 256
          %s5678 = scalar_lea.vmem [#allocation6], %s5677
          %5679 = dma.done %s5675, 4096
        $region90: #{tpu_custom_call.1} parent=85 // pred_fallthru
          _
      $region86: #{tpu_custom_call.1} parent=5 // pred_fallthru
        _
    $region6: #{tpu_custom_call.1} parent=1 // loop_footer
      %s20 = sadd.s32 1, %s16
    $region7: #{tpu_custom_call.1} parent=1 // loop_footer_branch
      %15 = sbr.rel target = $region3
    $region8: #{tpu_custom_call.1} parent=1 // loop_exit
      _
    %5680 = vsyncpa [#allocation4], 1
    %s5681 = scalar_lea.sflag [#allocation4], 1
    %5682 = vsyncpa %s5681, 1
    %5683 = vsyncpa [#allocation5], 1
    %s5684 = scalar_lea.sflag [#allocation5], 1
    %5685 = vsyncpa %s5684, 1

</llo_original>
